<compile_context>
chip_gen: v7x
topology: tpu7x:2x2x1
jax: 0.10.0
libtpu: 0.0.40
codegen_flags: <defaults>
</compile_context>

<pallas_src>
import jax
import jax.numpy as jnp
from jax.experimental import pallas as pl
from jax.experimental.pallas import tpu as pltpu


def _softplus(z):
    # Matches torch.nn.Softplus(beta=1, threshold=20).
    return jnp.where(z > 20.0, z, jnp.log1p(jnp.exp(jnp.minimum(z, 20.0))))


def _make_kernel(tg, sub_rows, n_chunks):
    """Kernel over one (tg, 128*C) slab block -> (tg, 128) lane-dense output."""

    def kernel(x_ref, w1_ref, b1_ref, w2p_ref, b2_ref, o_ref):
        w1 = w1_ref[...]      # (128, P*H)   block-diagonal first-layer weight
        b1 = b1_ref[...]      # (1, P*H)
        b2 = b2_ref[...]      # (1, 128)
        for r0 in range(0, tg, sub_rows):            # row sub-tiles: <64 live vregs
            rows = min(sub_rows, tg - r0)
            acc = jnp.zeros((rows, 128), jnp.float32)
            for s in range(n_chunks):
                # 128-lane-aligned slice: channels of points s*P .. s*P+P-1.
                xs = x_ref[r0:r0 + rows, s * 128:(s + 1) * 128]
                h = jnp.dot(xs, w1, preferred_element_type=jnp.float32) + b1
                h = jnp.maximum(h, 0.0)                       # MinkowskiReLU
                # Placement matmul: drops every point's scalar into its output
                # lane (columns s*P .. s*P+P-1); all other lanes contribute 0.
                acc = acc + jnp.dot(h, w2p_ref[s],
                                    preferred_element_type=jnp.float32)
            z = acc + b2
            o_ref[r0:r0 + rows, :] = _softplus(z).astype(o_ref.dtype)  # Softplus

    return kernel


def _pack_params(w1, b1, w2, b2, c_pad):
    """Expand the two linear layers into packed / block-diagonal form.

    P = 128 // c_pad points are packed per 128-lane chunk; n_chunks = c_pad
    chunks make up one 128-point slab.
    """
    w1 = jnp.asarray(w1, jnp.float32)
    b1 = jnp.asarray(b1, jnp.float32).reshape(-1)
    w2 = jnp.asarray(w2, jnp.float32).reshape(-1)
    b2 = jnp.asarray(b2, jnp.float32).reshape(-1)
    hidden, c_in = w1.shape
    if c_pad != c_in:                               # zero-pad unused channels
        w1 = jnp.pad(w1, ((0, 0), (0, c_pad - c_in)))
    p = 128 // c_pad
    eye_p = jnp.eye(p, dtype=jnp.float32)
    # w1blk[q*c_pad + k, q*hidden + j] = w1[j, k]
    w1blk = jnp.einsum("pq,jk->pkqj", eye_p, w1).reshape(p * c_pad, p * hidden)
    b1t = jnp.tile(b1.reshape(1, hidden), (1, p))                  # (1, p*hidden)
    # loc[q*hidden + j, q] = w2[j]
    loc = jnp.einsum("pq,j->pjq", eye_p, w2).reshape(p * hidden, p)
    # w2place[s, m, s*p + q] = loc[m, q]  (chunk s -> output lanes s*p..s*p+p-1)
    n_chunks = 128 // p                             # == c_pad
    sel = jnp.eye(128, dtype=jnp.float32).reshape(n_chunks, p, 128)
    w2place = jnp.einsum("mq,sql->sml", loc, sel)   # (n_chunks, p*hidden, 128)
    b2row = jnp.tile(b2.reshape(1, 1), (1, 128))    # (1, 128)
    return w1blk, b1t, w2place, b2row, p


def make_sigma_regressor(w1, b1, w2, b2, *, tile_slabs=256, sub_rows=64):
    """Build a jitted SigmaRegressor forward from its two linear layers.

    w1: (hidden, in_channels)  b1: (hidden,)  w2: (1, hidden)  b2: (1,)
    Returns apply(feats: (N, in_channels)) -> (N, 1).
    """
    hidden, c_in = w1.shape
    if c_in > 128:
        # TODO(synk): in_channels > 128 would need K-chunked first-layer
        # matmuls; the localizer head uses small in_channels so it is omitted.
        raise NotImplementedError("in_channels > 128 not supported")
    # Pad channels to a power-of-two divisor of 128 if necessary so that an
    # integral number of points fits per 128-lane chunk (no-op for C | 128).
    c_pad = c_in if 128 % c_in == 0 else 1 << (c_in - 1).bit_length()
    w1blk, b1t, w2place, b2row, p = _pack_params(w1, b1, w2, b2, c_pad)
    n_chunks = c_pad
    ph = p * hidden
    slab_w = 128 * c_pad                  # lanes per 128-point slab row

    # Plain copies of the layers for the tiny ragged tail (pure JAX).
    w1f = jnp.asarray(w1, jnp.float32)
    b1f = jnp.asarray(b1, jnp.float32).reshape(-1)
    w2f = jnp.asarray(w2, jnp.float32).reshape(1, -1)
    b2f = jnp.asarray(b2, jnp.float32).reshape(-1)

    def _main(xb):                        # xb: (g, slab_w) slab view
        g = xb.shape[0]
        if g <= tile_slabs:
            tg = g                        # single step: never split small inputs
        else:
            steps = max(4, pl.cdiv(g, tile_slabs))   # >= 4 steps for megacore
            tg = min(tile_slabs, ((pl.cdiv(g, steps) + 7) // 8) * 8)
        grid = (pl.cdiv(g, tg),)          # ragged last block is masked by Pallas
        return pl.pallas_call(
            _make_kernel(tg, sub_rows, n_chunks),
            out_shape=jax.ShapeDtypeStruct((g, 128), jnp.float32),
            grid_spec=pltpu.PrefetchScalarGridSpec(
                num_scalar_prefetch=0,
                grid=grid,
                in_specs=[
                    pl.BlockSpec((tg, slab_w), lambda i: (i, 0)),           # features
                    pl.BlockSpec((128, ph), lambda i: (0, 0)),              # W1 (blk-diag)
                    pl.BlockSpec((1, ph), lambda i: (0, 0)),                # b1
                    pl.BlockSpec((n_chunks, ph, 128), lambda i: (0, 0, 0)),  # W2 placement
                    pl.BlockSpec((1, 128), lambda i: (0, 0)),               # b2
                ],
                out_specs=pl.BlockSpec((tg, 128), lambda i: (i, 0)),
            ),
            compiler_params=pltpu.CompilerParams(
                dimension_semantics=("parallel",),
                vmem_limit_bytes=32 * 1024 * 1024,
            ),
        )(xb, w1blk, b1t, w2place, b2row)

    def apply(feats):
        feats = jnp.asarray(feats, jnp.float32)
        n, c = feats.shape
        n_main = (n // 128) * 128
        pieces = []
        if n_main > 0:
            fm = feats if n_main == n else feats[:n_main]
            if c != c_pad:
                # TODO(synk): channel padding copies the features; only taken
                # when in_channels does not divide 128.
                fm = jnp.pad(fm, ((0, 0), (0, c_pad - c)))
            xb = fm.reshape(n_main // 128, slab_w)   # free bitcast slab view
            pieces.append(_main(xb).reshape(n_main, 1))
        if n_main < n:
            # < 128 leftover points: tiny pure-JAX tail instead of padding and
            # re-copying the whole feature matrix through HBM.
            t = feats[n_main:]
            th = jnp.maximum(t @ w1f.T + b1f, 0.0)
            pieces.append(_softplus(th @ w2f.T + b2f))
        return pieces[0] if len(pieces) == 1 else jnp.concatenate(pieces, axis=0)

    return jax.jit(apply)


if __name__ == "__main__":
    # Module hyperparameters (synthetic, deterministic init).
    in_channels = 32
    reduction = 2
    hidden = in_channels // reduction     # 16

    key = jax.random.PRNGKey(0)
    k_x, k_w1, k_b1, k_w2, k_b2 = jax.random.split(key, 5)

    # nn.Linear-style deterministic init (uniform in +/- 1/sqrt(fan_in)).
    lim1 = 1.0 / (in_channels ** 0.5)
    lim2 = 1.0 / (hidden ** 0.5)
    w1 = jax.random.uniform(k_w1, (hidden, in_channels), jnp.float32, -lim1, lim1)
    b1 = jax.random.uniform(k_b1, (hidden,), jnp.float32, -lim1, lim1)
    w2 = jax.random.uniform(k_w2, (1, hidden), jnp.float32, -lim2, lim2)
    b2 = jax.random.uniform(k_b2, (1,), jnp.float32, -lim2, lim2)

    sigma = make_sigma_regressor(w1, b1, w2, b2)

    def reference(f):
        h = jnp.maximum(f @ w1.T + b1, 0.0)
        z = h @ w2.T + b2
        return _softplus(z)

    # Main test: N multiple of 128 -> zero-copy packed fast path.
    n_points = 256
    feats = jax.random.normal(k_x, (n_points, in_channels), dtype=jnp.float32)
    out = sigma(feats)
    jax.block_until_ready(out)
    assert out.shape == (n_points, 1)
    assert jnp.allclose(out, reference(feats), atol=1e-5, rtol=1e-5)

    # Ragged test: N not a multiple of 128 (kernel prefix + tiny JAX tail).
    n_ragged = 300
    feats_r = jax.random.normal(k_x, (n_ragged, in_channels), dtype=jnp.float32)
    out_r = sigma(feats_r)
    jax.block_until_ready(out_r)
    assert out_r.shape == (n_ragged, 1)
    assert jnp.allclose(out_r, reference(feats_r), atol=1e-5, rtol=1e-5)

    # NOTE: self.sigma_lower_bound is stored in __init__ but never used in
    # forward(), so it is intentionally not applied here.
    print("KERNEL_OK")
</pallas_src>

<mosaic_0001>
module attributes {stable_mosaic.version = 11 : i64} {
  func.func @kernel(%arg0: i32, %arg1: memref<2x4096xf32, #tpu.memory_space<vmem>>, %arg2: memref<128x64xf32, #tpu.memory_space<vmem>>, %arg3: memref<1x64xf32, #tpu.memory_space<vmem>>, %arg4: memref<32x64x128xf32, #tpu.memory_space<vmem>>, %arg5: memref<1x128xf32, #tpu.memory_space<vmem>>, %arg6: memref<2x128xf32, #tpu.memory_space<vmem>>) attributes {dimension_semantics = [#tpu.dimension_semantics<parallel>], iteration_bounds = array<i64: 1>, scalar_prefetch = 0 : i64, scratch_operands = 0 : i64, tpu.core_type = #tpu.core_type<tc>, window_params = [{transform_indices = @transform_0, window_bounds = array<i64: 2, 4096>}, {pipeline_mode = #tpu.pipeline_mode<synchronous>, transform_indices = @transform_1, window_bounds = array<i64: 128, 64>}, {pipeline_mode = #tpu.pipeline_mode<synchronous>, transform_indices = @transform_2, window_bounds = array<i64: 1, 64>}, {pipeline_mode = #tpu.pipeline_mode<synchronous>, transform_indices = @transform_3, window_bounds = array<i64: 32, 64, 128>}, {pipeline_mode = #tpu.pipeline_mode<synchronous>, transform_indices = @transform_4, window_bounds = array<i64: 1, 128>}, {transform_indices = @transform_5, window_bounds = array<i64: 2, 128>}]} {
    %c0 = arith.constant 0 : index
    %c0_0 = arith.constant 0 : index
    %0 = vector.load %arg2[%c0, %c0_0] : memref<128x64xf32, #tpu.memory_space<vmem>>, vector<128x64xf32>
    %c0_1 = arith.constant 0 : index
    %c0_2 = arith.constant 0 : index
    %1 = vector.load %arg3[%c0_1, %c0_2] : memref<1x64xf32, #tpu.memory_space<vmem>>, vector<1x64xf32>
    %c0_3 = arith.constant 0 : index
    %c0_4 = arith.constant 0 : index
    %2 = vector.load %arg5[%c0_3, %c0_4] : memref<1x128xf32, #tpu.memory_space<vmem>>, vector<1x128xf32>
    %cst = arith.constant 0.000000e+00 : f32
    %3 = vector.broadcast %cst : f32 to vector<2x128xf32>
    %c0_5 = arith.constant 0 : index
    %c0_6 = arith.constant 0 : index
    %4 = vector.load %arg1[%c0_5, %c0_6] : memref<2x4096xf32, #tpu.memory_space<vmem>>, vector<2x128xf32>
    %cst_7 = arith.constant dense<0.000000e+00> : vector<2x64xf32>
    %5 = tpu.matmul %4, %0, %cst_7 {dimension_numbers = #tpu.dot_dimension_numbers<[1], [0], [0], [1], [0, 0, 1, 1], [], []>} : vector<2x128xf32>, vector<128x64xf32>, vector<2x64xf32> -> vector<2x64xf32>
    %6 = vector.broadcast %1 : vector<1x64xf32> to vector<2x64xf32>
    %7 = arith.addf %5, %6 : vector<2x64xf32>
    %cst_8 = arith.constant 0.000000e+00 : f32
    %8 = vector.broadcast %cst_8 : f32 to vector<2x64xf32>
    %9 = arith.maximumf %7, %8 : vector<2x64xf32>
    %c0_9 = arith.constant 0 : index
    %c0_10 = arith.constant 0 : index
    %c0_11 = arith.constant 0 : index
    %10 = vector.load %arg4[%c0_9, %c0_10, %c0_11] : memref<32x64x128xf32, #tpu.memory_space<vmem>>, vector<1x64x128xf32>
    %11 = vector.shape_cast %10 : vector<1x64x128xf32> to vector<64x128xf32>
    %cst_12 = arith.constant dense<0.000000e+00> : vector<2x128xf32>
    %12 = tpu.matmul %9, %11, %cst_12 {dimension_numbers = #tpu.dot_dimension_numbers<[1], [0], [0], [1], [0, 0, 1, 1], [], []>} : vector<2x64xf32>, vector<64x128xf32>, vector<2x128xf32> -> vector<2x128xf32>
    %13 = arith.addf %3, %12 : vector<2x128xf32>
    %c0_13 = arith.constant 0 : index
    %c128 = arith.constant 128 : index
    %14 = vector.load %arg1[%c0_13, %c128] : memref<2x4096xf32, #tpu.memory_space<vmem>>, vector<2x128xf32>
    %cst_14 = arith.constant dense<0.000000e+00> : vector<2x64xf32>
    %15 = tpu.matmul %14, %0, %cst_14 {dimension_numbers = #tpu.dot_dimension_numbers<[1], [0], [0], [1], [0, 0, 1, 1], [], []>} : vector<2x128xf32>, vector<128x64xf32>, vector<2x64xf32> -> vector<2x64xf32>
    %16 = vector.broadcast %1 : vector<1x64xf32> to vector<2x64xf32>
    %17 = arith.addf %15, %16 : vector<2x64xf32>
    %cst_15 = arith.constant 0.000000e+00 : f32
    %18 = vector.broadcast %cst_15 : f32 to vector<2x64xf32>
    %19 = arith.maximumf %17, %18 : vector<2x64xf32>
    %c1 = arith.constant 1 : index
    %c0_16 = arith.constant 0 : index
    %c0_17 = arith.constant 0 : index
    %20 = vector.load %arg4[%c1, %c0_16, %c0_17] : memref<32x64x128xf32, #tpu.memory_space<vmem>>, vector<1x64x128xf32>
    %21 = vector.shape_cast %20 : vector<1x64x128xf32> to vector<64x128xf32>
    %cst_18 = arith.constant dense<0.000000e+00> : vector<2x128xf32>
    %22 = tpu.matmul %19, %21, %cst_18 {dimension_numbers = #tpu.dot_dimension_numbers<[1], [0], [0], [1], [0, 0, 1, 1], [], []>} : vector<2x64xf32>, vector<64x128xf32>, vector<2x128xf32> -> vector<2x128xf32>
    %23 = arith.addf %13, %22 : vector<2x128xf32>
    %c0_19 = arith.constant 0 : index
    %c256 = arith.constant 256 : index
    %24 = vector.load %arg1[%c0_19, %c256] : memref<2x4096xf32, #tpu.memory_space<vmem>>, vector<2x128xf32>
    %cst_20 = arith.constant dense<0.000000e+00> : vector<2x64xf32>
    %25 = tpu.matmul %24, %0, %cst_20 {dimension_numbers = #tpu.dot_dimension_numbers<[1], [0], [0], [1], [0, 0, 1, 1], [], []>} : vector<2x128xf32>, vector<128x64xf32>, vector<2x64xf32> -> vector<2x64xf32>
    %26 = vector.broadcast %1 : vector<1x64xf32> to vector<2x64xf32>
    %27 = arith.addf %25, %26 : vector<2x64xf32>
    %cst_21 = arith.constant 0.000000e+00 : f32
    %28 = vector.broadcast %cst_21 : f32 to vector<2x64xf32>
    %29 = arith.maximumf %27, %28 : vector<2x64xf32>
    %c2 = arith.constant 2 : index
    %c0_22 = arith.constant 0 : index
    %c0_23 = arith.constant 0 : index
    %30 = vector.load %arg4[%c2, %c0_22, %c0_23] : memref<32x64x128xf32, #tpu.memory_space<vmem>>, vector<1x64x128xf32>
    %31 = vector.shape_cast %30 : vector<1x64x128xf32> to vector<64x128xf32>
    %cst_24 = arith.constant dense<0.000000e+00> : vector<2x128xf32>
    %32 = tpu.matmul %29, %31, %cst_24 {dimension_numbers = #tpu.dot_dimension_numbers<[1], [0], [0], [1], [0, 0, 1, 1], [], []>} : vector<2x64xf32>, vector<64x128xf32>, vector<2x128xf32> -> vector<2x128xf32>
    %33 = arith.addf %23, %32 : vector<2x128xf32>
    %c0_25 = arith.constant 0 : index
    %c384 = arith.constant 384 : index
    %34 = vector.load %arg1[%c0_25, %c384] : memref<2x4096xf32, #tpu.memory_space<vmem>>, vector<2x128xf32>
    %cst_26 = arith.constant dense<0.000000e+00> : vector<2x64xf32>
    %35 = tpu.matmul %34, %0, %cst_26 {dimension_numbers = #tpu.dot_dimension_numbers<[1], [0], [0], [1], [0, 0, 1, 1], [], []>} : vector<2x128xf32>, vector<128x64xf32>, vector<2x64xf32> -> vector<2x64xf32>
    %36 = vector.broadcast %1 : vector<1x64xf32> to vector<2x64xf32>
    %37 = arith.addf %35, %36 : vector<2x64xf32>
    %cst_27 = arith.constant 0.000000e+00 : f32
    %38 = vector.broadcast %cst_27 : f32 to vector<2x64xf32>
    %39 = arith.maximumf %37, %38 : vector<2x64xf32>
    %c3 = arith.constant 3 : index
    %c0_28 = arith.constant 0 : index
    %c0_29 = arith.constant 0 : index
    %40 = vector.load %arg4[%c3, %c0_28, %c0_29] : memref<32x64x128xf32, #tpu.memory_space<vmem>>, vector<1x64x128xf32>
    %41 = vector.shape_cast %40 : vector<1x64x128xf32> to vector<64x128xf32>
    %cst_30 = arith.constant dense<0.000000e+00> : vector<2x128xf32>
    %42 = tpu.matmul %39, %41, %cst_30 {dimension_numbers = #tpu.dot_dimension_numbers<[1], [0], [0], [1], [0, 0, 1, 1], [], []>} : vector<2x64xf32>, vector<64x128xf32>, vector<2x128xf32> -> vector<2x128xf32>
    %43 = arith.addf %33, %42 : vector<2x128xf32>
    %c0_31 = arith.constant 0 : index
    %c512 = arith.constant 512 : index
    %44 = vector.load %arg1[%c0_31, %c512] : memref<2x4096xf32, #tpu.memory_space<vmem>>, vector<2x128xf32>
    %cst_32 = arith.constant dense<0.000000e+00> : vector<2x64xf32>
    %45 = tpu.matmul %44, %0, %cst_32 {dimension_numbers = #tpu.dot_dimension_numbers<[1], [0], [0], [1], [0, 0, 1, 1], [], []>} : vector<2x128xf32>, vector<128x64xf32>, vector<2x64xf32> -> vector<2x64xf32>
    %46 = vector.broadcast %1 : vector<1x64xf32> to vector<2x64xf32>
    %47 = arith.addf %45, %46 : vector<2x64xf32>
    %cst_33 = arith.constant 0.000000e+00 : f32
    %48 = vector.broadcast %cst_33 : f32 to vector<2x64xf32>
    %49 = arith.maximumf %47, %48 : vector<2x64xf32>
    %c4 = arith.constant 4 : index
    %c0_34 = arith.constant 0 : index
    %c0_35 = arith.constant 0 : index
    %50 = vector.load %arg4[%c4, %c0_34, %c0_35] : memref<32x64x128xf32, #tpu.memory_space<vmem>>, vector<1x64x128xf32>
    %51 = vector.shape_cast %50 : vector<1x64x128xf32> to vector<64x128xf32>
    %cst_36 = arith.constant dense<0.000000e+00> : vector<2x128xf32>
    %52 = tpu.matmul %49, %51, %cst_36 {dimension_numbers = #tpu.dot_dimension_numbers<[1], [0], [0], [1], [0, 0, 1, 1], [], []>} : vector<2x64xf32>, vector<64x128xf32>, vector<2x128xf32> -> vector<2x128xf32>
    %53 = arith.addf %43, %52 : vector<2x128xf32>
    %c0_37 = arith.constant 0 : index
    %c640 = arith.constant 640 : index
    %54 = vector.load %arg1[%c0_37, %c640] : memref<2x4096xf32, #tpu.memory_space<vmem>>, vector<2x128xf32>
    %cst_38 = arith.constant dense<0.000000e+00> : vector<2x64xf32>
    %55 = tpu.matmul %54, %0, %cst_38 {dimension_numbers = #tpu.dot_dimension_numbers<[1], [0], [0], [1], [0, 0, 1, 1], [], []>} : vector<2x128xf32>, vector<128x64xf32>, vector<2x64xf32> -> vector<2x64xf32>
    %56 = vector.broadcast %1 : vector<1x64xf32> to vector<2x64xf32>
    %57 = arith.addf %55, %56 : vector<2x64xf32>
    %cst_39 = arith.constant 0.000000e+00 : f32
    %58 = vector.broadcast %cst_39 : f32 to vector<2x64xf32>
    %59 = arith.maximumf %57, %58 : vector<2x64xf32>
    %c5 = arith.constant 5 : index
    %c0_40 = arith.constant 0 : index
    %c0_41 = arith.constant 0 : index
    %60 = vector.load %arg4[%c5, %c0_40, %c0_41] : memref<32x64x128xf32, #tpu.memory_space<vmem>>, vector<1x64x128xf32>
    %61 = vector.shape_cast %60 : vector<1x64x128xf32> to vector<64x128xf32>
    %cst_42 = arith.constant dense<0.000000e+00> : vector<2x128xf32>
    %62 = tpu.matmul %59, %61, %cst_42 {dimension_numbers = #tpu.dot_dimension_numbers<[1], [0], [0], [1], [0, 0, 1, 1], [], []>} : vector<2x64xf32>, vector<64x128xf32>, vector<2x128xf32> -> vector<2x128xf32>
    %63 = arith.addf %53, %62 : vector<2x128xf32>
    %c0_43 = arith.constant 0 : index
    %c768 = arith.constant 768 : index
    %64 = vector.load %arg1[%c0_43, %c768] : memref<2x4096xf32, #tpu.memory_space<vmem>>, vector<2x128xf32>
    %cst_44 = arith.constant dense<0.000000e+00> : vector<2x64xf32>
    %65 = tpu.matmul %64, %0, %cst_44 {dimension_numbers = #tpu.dot_dimension_numbers<[1], [0], [0], [1], [0, 0, 1, 1], [], []>} : vector<2x128xf32>, vector<128x64xf32>, vector<2x64xf32> -> vector<2x64xf32>
    %66 = vector.broadcast %1 : vector<1x64xf32> to vector<2x64xf32>
    %67 = arith.addf %65, %66 : vector<2x64xf32>
    %cst_45 = arith.constant 0.000000e+00 : f32
    %68 = vector.broadcast %cst_45 : f32 to vector<2x64xf32>
    %69 = arith.maximumf %67, %68 : vector<2x64xf32>
    %c6 = arith.constant 6 : index
    %c0_46 = arith.constant 0 : index
    %c0_47 = arith.constant 0 : index
    %70 = vector.load %arg4[%c6, %c0_46, %c0_47] : memref<32x64x128xf32, #tpu.memory_space<vmem>>, vector<1x64x128xf32>
    %71 = vector.shape_cast %70 : vector<1x64x128xf32> to vector<64x128xf32>
    %cst_48 = arith.constant dense<0.000000e+00> : vector<2x128xf32>
    %72 = tpu.matmul %69, %71, %cst_48 {dimension_numbers = #tpu.dot_dimension_numbers<[1], [0], [0], [1], [0, 0, 1, 1], [], []>} : vector<2x64xf32>, vector<64x128xf32>, vector<2x128xf32> -> vector<2x128xf32>
    %73 = arith.addf %63, %72 : vector<2x128xf32>
    %c0_49 = arith.constant 0 : index
    %c896 = arith.constant 896 : index
    %74 = vector.load %arg1[%c0_49, %c896] : memref<2x4096xf32, #tpu.memory_space<vmem>>, vector<2x128xf32>
    %cst_50 = arith.constant dense<0.000000e+00> : vector<2x64xf32>
    %75 = tpu.matmul %74, %0, %cst_50 {dimension_numbers = #tpu.dot_dimension_numbers<[1], [0], [0], [1], [0, 0, 1, 1], [], []>} : vector<2x128xf32>, vector<128x64xf32>, vector<2x64xf32> -> vector<2x64xf32>
    %76 = vector.broadcast %1 : vector<1x64xf32> to vector<2x64xf32>
    %77 = arith.addf %75, %76 : vector<2x64xf32>
    %cst_51 = arith.constant 0.000000e+00 : f32
    %78 = vector.broadcast %cst_51 : f32 to vector<2x64xf32>
    %79 = arith.maximumf %77, %78 : vector<2x64xf32>
    %c7 = arith.constant 7 : index
    %c0_52 = arith.constant 0 : index
    %c0_53 = arith.constant 0 : index
    %80 = vector.load %arg4[%c7, %c0_52, %c0_53] : memref<32x64x128xf32, #tpu.memory_space<vmem>>, vector<1x64x128xf32>
    %81 = vector.shape_cast %80 : vector<1x64x128xf32> to vector<64x128xf32>
    %cst_54 = arith.constant dense<0.000000e+00> : vector<2x128xf32>
    %82 = tpu.matmul %79, %81, %cst_54 {dimension_numbers = #tpu.dot_dimension_numbers<[1], [0], [0], [1], [0, 0, 1, 1], [], []>} : vector<2x64xf32>, vector<64x128xf32>, vector<2x128xf32> -> vector<2x128xf32>
    %83 = arith.addf %73, %82 : vector<2x128xf32>
    %c0_55 = arith.constant 0 : index
    %c1024 = arith.constant 1024 : index
    %84 = vector.load %arg1[%c0_55, %c1024] : memref<2x4096xf32, #tpu.memory_space<vmem>>, vector<2x128xf32>
    %cst_56 = arith.constant dense<0.000000e+00> : vector<2x64xf32>
    %85 = tpu.matmul %84, %0, %cst_56 {dimension_numbers = #tpu.dot_dimension_numbers<[1], [0], [0], [1], [0, 0, 1, 1], [], []>} : vector<2x128xf32>, vector<128x64xf32>, vector<2x64xf32> -> vector<2x64xf32>
    %86 = vector.broadcast %1 : vector<1x64xf32> to vector<2x64xf32>
    %87 = arith.addf %85, %86 : vector<2x64xf32>
    %cst_57 = arith.constant 0.000000e+00 : f32
    %88 = vector.broadcast %cst_57 : f32 to vector<2x64xf32>
    %89 = arith.maximumf %87, %88 : vector<2x64xf32>
    %c8 = arith.constant 8 : index
    %c0_58 = arith.constant 0 : index
    %c0_59 = arith.constant 0 : index
    %90 = vector.load %arg4[%c8, %c0_58, %c0_59] : memref<32x64x128xf32, #tpu.memory_space<vmem>>, vector<1x64x128xf32>
    %91 = vector.shape_cast %90 : vector<1x64x128xf32> to vector<64x128xf32>
    %cst_60 = arith.constant dense<0.000000e+00> : vector<2x128xf32>
    %92 = tpu.matmul %89, %91, %cst_60 {dimension_numbers = #tpu.dot_dimension_numbers<[1], [0], [0], [1], [0, 0, 1, 1], [], []>} : vector<2x64xf32>, vector<64x128xf32>, vector<2x128xf32> -> vector<2x128xf32>
    %93 = arith.addf %83, %92 : vector<2x128xf32>
    %c0_61 = arith.constant 0 : index
    %c1152 = arith.constant 1152 : index
    %94 = vector.load %arg1[%c0_61, %c1152] : memref<2x4096xf32, #tpu.memory_space<vmem>>, vector<2x128xf32>
    %cst_62 = arith.constant dense<0.000000e+00> : vector<2x64xf32>
    %95 = tpu.matmul %94, %0, %cst_62 {dimension_numbers = #tpu.dot_dimension_numbers<[1], [0], [0], [1], [0, 0, 1, 1], [], []>} : vector<2x128xf32>, vector<128x64xf32>, vector<2x64xf32> -> vector<2x64xf32>
    %96 = vector.broadcast %1 : vector<1x64xf32> to vector<2x64xf32>
    %97 = arith.addf %95, %96 : vector<2x64xf32>
    %cst_63 = arith.constant 0.000000e+00 : f32
    %98 = vector.broadcast %cst_63 : f32 to vector<2x64xf32>
    %99 = arith.maximumf %97, %98 : vector<2x64xf32>
    %c9 = arith.constant 9 : index
    %c0_64 = arith.constant 0 : index
    %c0_65 = arith.constant 0 : index
    %100 = vector.load %arg4[%c9, %c0_64, %c0_65] : memref<32x64x128xf32, #tpu.memory_space<vmem>>, vector<1x64x128xf32>
    %101 = vector.shape_cast %100 : vector<1x64x128xf32> to vector<64x128xf32>
    %cst_66 = arith.constant dense<0.000000e+00> : vector<2x128xf32>
    %102 = tpu.matmul %99, %101, %cst_66 {dimension_numbers = #tpu.dot_dimension_numbers<[1], [0], [0], [1], [0, 0, 1, 1], [], []>} : vector<2x64xf32>, vector<64x128xf32>, vector<2x128xf32> -> vector<2x128xf32>
    %103 = arith.addf %93, %102 : vector<2x128xf32>
    %c0_67 = arith.constant 0 : index
    %c1280 = arith.constant 1280 : index
    %104 = vector.load %arg1[%c0_67, %c1280] : memref<2x4096xf32, #tpu.memory_space<vmem>>, vector<2x128xf32>
    %cst_68 = arith.constant dense<0.000000e+00> : vector<2x64xf32>
    %105 = tpu.matmul %104, %0, %cst_68 {dimension_numbers = #tpu.dot_dimension_numbers<[1], [0], [0], [1], [0, 0, 1, 1], [], []>} : vector<2x128xf32>, vector<128x64xf32>, vector<2x64xf32> -> vector<2x64xf32>
    %106 = vector.broadcast %1 : vector<1x64xf32> to vector<2x64xf32>
    %107 = arith.addf %105, %106 : vector<2x64xf32>
    %cst_69 = arith.constant 0.000000e+00 : f32
    %108 = vector.broadcast %cst_69 : f32 to vector<2x64xf32>
    %109 = arith.maximumf %107, %108 : vector<2x64xf32>
    %c10 = arith.constant 10 : index
    %c0_70 = arith.constant 0 : index
    %c0_71 = arith.constant 0 : index
    %110 = vector.load %arg4[%c10, %c0_70, %c0_71] : memref<32x64x128xf32, #tpu.memory_space<vmem>>, vector<1x64x128xf32>
    %111 = vector.shape_cast %110 : vector<1x64x128xf32> to vector<64x128xf32>
    %cst_72 = arith.constant dense<0.000000e+00> : vector<2x128xf32>
    %112 = tpu.matmul %109, %111, %cst_72 {dimension_numbers = #tpu.dot_dimension_numbers<[1], [0], [0], [1], [0, 0, 1, 1], [], []>} : vector<2x64xf32>, vector<64x128xf32>, vector<2x128xf32> -> vector<2x128xf32>
    %113 = arith.addf %103, %112 : vector<2x128xf32>
    %c0_73 = arith.constant 0 : index
    %c1408 = arith.constant 1408 : index
    %114 = vector.load %arg1[%c0_73, %c1408] : memref<2x4096xf32, #tpu.memory_space<vmem>>, vector<2x128xf32>
    %cst_74 = arith.constant dense<0.000000e+00> : vector<2x64xf32>
    %115 = tpu.matmul %114, %0, %cst_74 {dimension_numbers = #tpu.dot_dimension_numbers<[1], [0], [0], [1], [0, 0, 1, 1], [], []>} : vector<2x128xf32>, vector<128x64xf32>, vector<2x64xf32> -> vector<2x64xf32>
    %116 = vector.broadcast %1 : vector<1x64xf32> to vector<2x64xf32>
    %117 = arith.addf %115, %116 : vector<2x64xf32>
    %cst_75 = arith.constant 0.000000e+00 : f32
    %118 = vector.broadcast %cst_75 : f32 to vector<2x64xf32>
    %119 = arith.maximumf %117, %118 : vector<2x64xf32>
    %c11 = arith.constant 11 : index
    %c0_76 = arith.constant 0 : index
    %c0_77 = arith.constant 0 : index
    %120 = vector.load %arg4[%c11, %c0_76, %c0_77] : memref<32x64x128xf32, #tpu.memory_space<vmem>>, vector<1x64x128xf32>
    %121 = vector.shape_cast %120 : vector<1x64x128xf32> to vector<64x128xf32>
    %cst_78 = arith.constant dense<0.000000e+00> : vector<2x128xf32>
    %122 = tpu.matmul %119, %121, %cst_78 {dimension_numbers = #tpu.dot_dimension_numbers<[1], [0], [0], [1], [0, 0, 1, 1], [], []>} : vector<2x64xf32>, vector<64x128xf32>, vector<2x128xf32> -> vector<2x128xf32>
    %123 = arith.addf %113, %122 : vector<2x128xf32>
    %c0_79 = arith.constant 0 : index
    %c1536 = arith.constant 1536 : index
    %124 = vector.load %arg1[%c0_79, %c1536] : memref<2x4096xf32, #tpu.memory_space<vmem>>, vector<2x128xf32>
    %cst_80 = arith.constant dense<0.000000e+00> : vector<2x64xf32>
    %125 = tpu.matmul %124, %0, %cst_80 {dimension_numbers = #tpu.dot_dimension_numbers<[1], [0], [0], [1], [0, 0, 1, 1], [], []>} : vector<2x128xf32>, vector<128x64xf32>, vector<2x64xf32> -> vector<2x64xf32>
    %126 = vector.broadcast %1 : vector<1x64xf32> to vector<2x64xf32>
    %127 = arith.addf %125, %126 : vector<2x64xf32>
    %cst_81 = arith.constant 0.000000e+00 : f32
    %128 = vector.broadcast %cst_81 : f32 to vector<2x64xf32>
    %129 = arith.maximumf %127, %128 : vector<2x64xf32>
    %c12 = arith.constant 12 : index
    %c0_82 = arith.constant 0 : index
    %c0_83 = arith.constant 0 : index
    %130 = vector.load %arg4[%c12, %c0_82, %c0_83] : memref<32x64x128xf32, #tpu.memory_space<vmem>>, vector<1x64x128xf32>
    %131 = vector.shape_cast %130 : vector<1x64x128xf32> to vector<64x128xf32>
    %cst_84 = arith.constant dense<0.000000e+00> : vector<2x128xf32>
    %132 = tpu.matmul %129, %131, %cst_84 {dimension_numbers = #tpu.dot_dimension_numbers<[1], [0], [0], [1], [0, 0, 1, 1], [], []>} : vector<2x64xf32>, vector<64x128xf32>, vector<2x128xf32> -> vector<2x128xf32>
    %133 = arith.addf %123, %132 : vector<2x128xf32>
    %c0_85 = arith.constant 0 : index
    %c1664 = arith.constant 1664 : index
    %134 = vector.load %arg1[%c0_85, %c1664] : memref<2x4096xf32, #tpu.memory_space<vmem>>, vector<2x128xf32>
    %cst_86 = arith.constant dense<0.000000e+00> : vector<2x64xf32>
    %135 = tpu.matmul %134, %0, %cst_86 {dimension_numbers = #tpu.dot_dimension_numbers<[1], [0], [0], [1], [0, 0, 1, 1], [], []>} : vector<2x128xf32>, vector<128x64xf32>, vector<2x64xf32> -> vector<2x64xf32>
    %136 = vector.broadcast %1 : vector<1x64xf32> to vector<2x64xf32>
    %137 = arith.addf %135, %136 : vector<2x64xf32>
    %cst_87 = arith.constant 0.000000e+00 : f32
    %138 = vector.broadcast %cst_87 : f32 to vector<2x64xf32>
    %139 = arith.maximumf %137, %138 : vector<2x64xf32>
    %c13 = arith.constant 13 : index
    %c0_88 = arith.constant 0 : index
    %c0_89 = arith.constant 0 : index
    %140 = vector.load %arg4[%c13, %c0_88, %c0_89] : memref<32x64x128xf32, #tpu.memory_space<vmem>>, vector<1x64x128xf32>
    %141 = vector.shape_cast %140 : vector<1x64x128xf32> to vector<64x128xf32>
    %cst_90 = arith.constant dense<0.000000e+00> : vector<2x128xf32>
    %142 = tpu.matmul %139, %141, %cst_90 {dimension_numbers = #tpu.dot_dimension_numbers<[1], [0], [0], [1], [0, 0, 1, 1], [], []>} : vector<2x64xf32>, vector<64x128xf32>, vector<2x128xf32> -> vector<2x128xf32>
    %143 = arith.addf %133, %142 : vector<2x128xf32>
    %c0_91 = arith.constant 0 : index
    %c1792 = arith.constant 1792 : index
    %144 = vector.load %arg1[%c0_91, %c1792] : memref<2x4096xf32, #tpu.memory_space<vmem>>, vector<2x128xf32>
    %cst_92 = arith.constant dense<0.000000e+00> : vector<2x64xf32>
    %145 = tpu.matmul %144, %0, %cst_92 {dimension_numbers = #tpu.dot_dimension_numbers<[1], [0], [0], [1], [0, 0, 1, 1], [], []>} : vector<2x128xf32>, vector<128x64xf32>, vector<2x64xf32> -> vector<2x64xf32>
    %146 = vector.broadcast %1 : vector<1x64xf32> to vector<2x64xf32>
    %147 = arith.addf %145, %146 : vector<2x64xf32>
    %cst_93 = arith.constant 0.000000e+00 : f32
    %148 = vector.broadcast %cst_93 : f32 to vector<2x64xf32>
    %149 = arith.maximumf %147, %148 : vector<2x64xf32>
    %c14 = arith.constant 14 : index
    %c0_94 = arith.constant 0 : index
    %c0_95 = arith.constant 0 : index
    %150 = vector.load %arg4[%c14, %c0_94, %c0_95] : memref<32x64x128xf32, #tpu.memory_space<vmem>>, vector<1x64x128xf32>
    %151 = vector.shape_cast %150 : vector<1x64x128xf32> to vector<64x128xf32>
    %cst_96 = arith.constant dense<0.000000e+00> : vector<2x128xf32>
    %152 = tpu.matmul %149, %151, %cst_96 {dimension_numbers = #tpu.dot_dimension_numbers<[1], [0], [0], [1], [0, 0, 1, 1], [], []>} : vector<2x64xf32>, vector<64x128xf32>, vector<2x128xf32> -> vector<2x128xf32>
    %153 = arith.addf %143, %152 : vector<2x128xf32>
    %c0_97 = arith.constant 0 : index
    %c1920 = arith.constant 1920 : index
    %154 = vector.load %arg1[%c0_97, %c1920] : memref<2x4096xf32, #tpu.memory_space<vmem>>, vector<2x128xf32>
    %cst_98 = arith.constant dense<0.000000e+00> : vector<2x64xf32>
    %155 = tpu.matmul %154, %0, %cst_98 {dimension_numbers = #tpu.dot_dimension_numbers<[1], [0], [0], [1], [0, 0, 1, 1], [], []>} : vector<2x128xf32>, vector<128x64xf32>, vector<2x64xf32> -> vector<2x64xf32>
    %156 = vector.broadcast %1 : vector<1x64xf32> to vector<2x64xf32>
    %157 = arith.addf %155, %156 : vector<2x64xf32>
    %cst_99 = arith.constant 0.000000e+00 : f32
    %158 = vector.broadcast %cst_99 : f32 to vector<2x64xf32>
    %159 = arith.maximumf %157, %158 : vector<2x64xf32>
    %c15 = arith.constant 15 : index
    %c0_100 = arith.constant 0 : index
    %c0_101 = arith.constant 0 : index
    %160 = vector.load %arg4[%c15, %c0_100, %c0_101] : memref<32x64x128xf32, #tpu.memory_space<vmem>>, vector<1x64x128xf32>
    %161 = vector.shape_cast %160 : vector<1x64x128xf32> to vector<64x128xf32>
    %cst_102 = arith.constant dense<0.000000e+00> : vector<2x128xf32>
    %162 = tpu.matmul %159, %161, %cst_102 {dimension_numbers = #tpu.dot_dimension_numbers<[1], [0], [0], [1], [0, 0, 1, 1], [], []>} : vector<2x64xf32>, vector<64x128xf32>, vector<2x128xf32> -> vector<2x128xf32>
    %163 = arith.addf %153, %162 : vector<2x128xf32>
    %c0_103 = arith.constant 0 : index
    %c2048 = arith.constant 2048 : index
    %164 = vector.load %arg1[%c0_103, %c2048] : memref<2x4096xf32, #tpu.memory_space<vmem>>, vector<2x128xf32>
    %cst_104 = arith.constant dense<0.000000e+00> : vector<2x64xf32>
    %165 = tpu.matmul %164, %0, %cst_104 {dimension_numbers = #tpu.dot_dimension_numbers<[1], [0], [0], [1], [0, 0, 1, 1], [], []>} : vector<2x128xf32>, vector<128x64xf32>, vector<2x64xf32> -> vector<2x64xf32>
    %166 = vector.broadcast %1 : vector<1x64xf32> to vector<2x64xf32>
    %167 = arith.addf %165, %166 : vector<2x64xf32>
    %cst_105 = arith.constant 0.000000e+00 : f32
    %168 = vector.broadcast %cst_105 : f32 to vector<2x64xf32>
    %169 = arith.maximumf %167, %168 : vector<2x64xf32>
    %c16 = arith.constant 16 : index
    %c0_106 = arith.constant 0 : index
    %c0_107 = arith.constant 0 : index
    %170 = vector.load %arg4[%c16, %c0_106, %c0_107] : memref<32x64x128xf32, #tpu.memory_space<vmem>>, vector<1x64x128xf32>
    %171 = vector.shape_cast %170 : vector<1x64x128xf32> to vector<64x128xf32>
    %cst_108 = arith.constant dense<0.000000e+00> : vector<2x128xf32>
    %172 = tpu.matmul %169, %171, %cst_108 {dimension_numbers = #tpu.dot_dimension_numbers<[1], [0], [0], [1], [0, 0, 1, 1], [], []>} : vector<2x64xf32>, vector<64x128xf32>, vector<2x128xf32> -> vector<2x128xf32>
    %173 = arith.addf %163, %172 : vector<2x128xf32>
    %c0_109 = arith.constant 0 : index
    %c2176 = arith.constant 2176 : index
    %174 = vector.load %arg1[%c0_109, %c2176] : memref<2x4096xf32, #tpu.memory_space<vmem>>, vector<2x128xf32>
    %cst_110 = arith.constant dense<0.000000e+00> : vector<2x64xf32>
    %175 = tpu.matmul %174, %0, %cst_110 {dimension_numbers = #tpu.dot_dimension_numbers<[1], [0], [0], [1], [0, 0, 1, 1], [], []>} : vector<2x128xf32>, vector<128x64xf32>, vector<2x64xf32> -> vector<2x64xf32>
    %176 = vector.broadcast %1 : vector<1x64xf32> to vector<2x64xf32>
    %177 = arith.addf %175, %176 : vector<2x64xf32>
    %cst_111 = arith.constant 0.000000e+00 : f32
    %178 = vector.broadcast %cst_111 : f32 to vector<2x64xf32>
    %179 = arith.maximumf %177, %178 : vector<2x64xf32>
    %c17 = arith.constant 17 : index
    %c0_112 = arith.constant 0 : index
    %c0_113 = arith.constant 0 : index
    %180 = vector.load %arg4[%c17, %c0_112, %c0_113] : memref<32x64x128xf32, #tpu.memory_space<vmem>>, vector<1x64x128xf32>
    %181 = vector.shape_cast %180 : vector<1x64x128xf32> to vector<64x128xf32>
    %cst_114 = arith.constant dense<0.000000e+00> : vector<2x128xf32>
    %182 = tpu.matmul %179, %181, %cst_114 {dimension_numbers = #tpu.dot_dimension_numbers<[1], [0], [0], [1], [0, 0, 1, 1], [], []>} : vector<2x64xf32>, vector<64x128xf32>, vector<2x128xf32> -> vector<2x128xf32>
    %183 = arith.addf %173, %182 : vector<2x128xf32>
    %c0_115 = arith.constant 0 : index
    %c2304 = arith.constant 2304 : index
    %184 = vector.load %arg1[%c0_115, %c2304] : memref<2x4096xf32, #tpu.memory_space<vmem>>, vector<2x128xf32>
    %cst_116 = arith.constant dense<0.000000e+00> : vector<2x64xf32>
    %185 = tpu.matmul %184, %0, %cst_116 {dimension_numbers = #tpu.dot_dimension_numbers<[1], [0], [0], [1], [0, 0, 1, 1], [], []>} : vector<2x128xf32>, vector<128x64xf32>, vector<2x64xf32> -> vector<2x64xf32>
    %186 = vector.broadcast %1 : vector<1x64xf32> to vector<2x64xf32>
    %187 = arith.addf %185, %186 : vector<2x64xf32>
    %cst_117 = arith.constant 0.000000e+00 : f32
    %188 = vector.broadcast %cst_117 : f32 to vector<2x64xf32>
    %189 = arith.maximumf %187, %188 : vector<2x64xf32>
    %c18 = arith.constant 18 : index
    %c0_118 = arith.constant 0 : index
    %c0_119 = arith.constant 0 : index
    %190 = vector.load %arg4[%c18, %c0_118, %c0_119] : memref<32x64x128xf32, #tpu.memory_space<vmem>>, vector<1x64x128xf32>
    %191 = vector.shape_cast %190 : vector<1x64x128xf32> to vector<64x128xf32>
    %cst_120 = arith.constant dense<0.000000e+00> : vector<2x128xf32>
    %192 = tpu.matmul %189, %191, %cst_120 {dimension_numbers = #tpu.dot_dimension_numbers<[1], [0], [0], [1], [0, 0, 1, 1], [], []>} : vector<2x64xf32>, vector<64x128xf32>, vector<2x128xf32> -> vector<2x128xf32>
    %193 = arith.addf %183, %192 : vector<2x128xf32>
    %c0_121 = arith.constant 0 : index
    %c2432 = arith.constant 2432 : index
    %194 = vector.load %arg1[%c0_121, %c2432] : memref<2x4096xf32, #tpu.memory_space<vmem>>, vector<2x128xf32>
    %cst_122 = arith.constant dense<0.000000e+00> : vector<2x64xf32>
    %195 = tpu.matmul %194, %0, %cst_122 {dimension_numbers = #tpu.dot_dimension_numbers<[1], [0], [0], [1], [0, 0, 1, 1], [], []>} : vector<2x128xf32>, vector<128x64xf32>, vector<2x64xf32> -> vector<2x64xf32>
    %196 = vector.broadcast %1 : vector<1x64xf32> to vector<2x64xf32>
    %197 = arith.addf %195, %196 : vector<2x64xf32>
    %cst_123 = arith.constant 0.000000e+00 : f32
    %198 = vector.broadcast %cst_123 : f32 to vector<2x64xf32>
    %199 = arith.maximumf %197, %198 : vector<2x64xf32>
    %c19 = arith.constant 19 : index
    %c0_124 = arith.constant 0 : index
    %c0_125 = arith.constant 0 : index
    %200 = vector.load %arg4[%c19, %c0_124, %c0_125] : memref<32x64x128xf32, #tpu.memory_space<vmem>>, vector<1x64x128xf32>
    %201 = vector.shape_cast %200 : vector<1x64x128xf32> to vector<64x128xf32>
    %cst_126 = arith.constant dense<0.000000e+00> : vector<2x128xf32>
    %202 = tpu.matmul %199, %201, %cst_126 {dimension_numbers = #tpu.dot_dimension_numbers<[1], [0], [0], [1], [0, 0, 1, 1], [], []>} : vector<2x64xf32>, vector<64x128xf32>, vector<2x128xf32> -> vector<2x128xf32>
    %203 = arith.addf %193, %202 : vector<2x128xf32>
    %c0_127 = arith.constant 0 : index
    %c2560 = arith.constant 2560 : index
    %204 = vector.load %arg1[%c0_127, %c2560] : memref<2x4096xf32, #tpu.memory_space<vmem>>, vector<2x128xf32>
    %cst_128 = arith.constant dense<0.000000e+00> : vector<2x64xf32>
    %205 = tpu.matmul %204, %0, %cst_128 {dimension_numbers = #tpu.dot_dimension_numbers<[1], [0], [0], [1], [0, 0, 1, 1], [], []>} : vector<2x128xf32>, vector<128x64xf32>, vector<2x64xf32> -> vector<2x64xf32>
    %206 = vector.broadcast %1 : vector<1x64xf32> to vector<2x64xf32>
    %207 = arith.addf %205, %206 : vector<2x64xf32>
    %cst_129 = arith.constant 0.000000e+00 : f32
    %208 = vector.broadcast %cst_129 : f32 to vector<2x64xf32>
    %209 = arith.maximumf %207, %208 : vector<2x64xf32>
    %c20 = arith.constant 20 : index
    %c0_130 = arith.constant 0 : index
    %c0_131 = arith.constant 0 : index
    %210 = vector.load %arg4[%c20, %c0_130, %c0_131] : memref<32x64x128xf32, #tpu.memory_space<vmem>>, vector<1x64x128xf32>
    %211 = vector.shape_cast %210 : vector<1x64x128xf32> to vector<64x128xf32>
    %cst_132 = arith.constant dense<0.000000e+00> : vector<2x128xf32>
    %212 = tpu.matmul %209, %211, %cst_132 {dimension_numbers = #tpu.dot_dimension_numbers<[1], [0], [0], [1], [0, 0, 1, 1], [], []>} : vector<2x64xf32>, vector<64x128xf32>, vector<2x128xf32> -> vector<2x128xf32>
    %213 = arith.addf %203, %212 : vector<2x128xf32>
    %c0_133 = arith.constant 0 : index
    %c2688 = arith.constant 2688 : index
    %214 = vector.load %arg1[%c0_133, %c2688] : memref<2x4096xf32, #tpu.memory_space<vmem>>, vector<2x128xf32>
    %cst_134 = arith.constant dense<0.000000e+00> : vector<2x64xf32>
    %215 = tpu.matmul %214, %0, %cst_134 {dimension_numbers = #tpu.dot_dimension_numbers<[1], [0], [0], [1], [0, 0, 1, 1], [], []>} : vector<2x128xf32>, vector<128x64xf32>, vector<2x64xf32> -> vector<2x64xf32>
    %216 = vector.broadcast %1 : vector<1x64xf32> to vector<2x64xf32>
    %217 = arith.addf %215, %216 : vector<2x64xf32>
    %cst_135 = arith.constant 0.000000e+00 : f32
    %218 = vector.broadcast %cst_135 : f32 to vector<2x64xf32>
    %219 = arith.maximumf %217, %218 : vector<2x64xf32>
    %c21 = arith.constant 21 : index
    %c0_136 = arith.constant 0 : index
    %c0_137 = arith.constant 0 : index
    %220 = vector.load %arg4[%c21, %c0_136, %c0_137] : memref<32x64x128xf32, #tpu.memory_space<vmem>>, vector<1x64x128xf32>
    %221 = vector.shape_cast %220 : vector<1x64x128xf32> to vector<64x128xf32>
    %cst_138 = arith.constant dense<0.000000e+00> : vector<2x128xf32>
    %222 = tpu.matmul %219, %221, %cst_138 {dimension_numbers = #tpu.dot_dimension_numbers<[1], [0], [0], [1], [0, 0, 1, 1], [], []>} : vector<2x64xf32>, vector<64x128xf32>, vector<2x128xf32> -> vector<2x128xf32>
    %223 = arith.addf %213, %222 : vector<2x128xf32>
    %c0_139 = arith.constant 0 : index
    %c2816 = arith.constant 2816 : index
    %224 = vector.load %arg1[%c0_139, %c2816] : memref<2x4096xf32, #tpu.memory_space<vmem>>, vector<2x128xf32>
    %cst_140 = arith.constant dense<0.000000e+00> : vector<2x64xf32>
    %225 = tpu.matmul %224, %0, %cst_140 {dimension_numbers = #tpu.dot_dimension_numbers<[1], [0], [0], [1], [0, 0, 1, 1], [], []>} : vector<2x128xf32>, vector<128x64xf32>, vector<2x64xf32> -> vector<2x64xf32>
    %226 = vector.broadcast %1 : vector<1x64xf32> to vector<2x64xf32>
    %227 = arith.addf %225, %226 : vector<2x64xf32>
    %cst_141 = arith.constant 0.000000e+00 : f32
    %228 = vector.broadcast %cst_141 : f32 to vector<2x64xf32>
    %229 = arith.maximumf %227, %228 : vector<2x64xf32>
    %c22 = arith.constant 22 : index
    %c0_142 = arith.constant 0 : index
    %c0_143 = arith.constant 0 : index
    %230 = vector.load %arg4[%c22, %c0_142, %c0_143] : memref<32x64x128xf32, #tpu.memory_space<vmem>>, vector<1x64x128xf32>
    %231 = vector.shape_cast %230 : vector<1x64x128xf32> to vector<64x128xf32>
    %cst_144 = arith.constant dense<0.000000e+00> : vector<2x128xf32>
    %232 = tpu.matmul %229, %231, %cst_144 {dimension_numbers = #tpu.dot_dimension_numbers<[1], [0], [0], [1], [0, 0, 1, 1], [], []>} : vector<2x64xf32>, vector<64x128xf32>, vector<2x128xf32> -> vector<2x128xf32>
    %233 = arith.addf %223, %232 : vector<2x128xf32>
    %c0_145 = arith.constant 0 : index
    %c2944 = arith.constant 2944 : index
    %234 = vector.load %arg1[%c0_145, %c2944] : memref<2x4096xf32, #tpu.memory_space<vmem>>, vector<2x128xf32>
    %cst_146 = arith.constant dense<0.000000e+00> : vector<2x64xf32>
    %235 = tpu.matmul %234, %0, %cst_146 {dimension_numbers = #tpu.dot_dimension_numbers<[1], [0], [0], [1], [0, 0, 1, 1], [], []>} : vector<2x128xf32>, vector<128x64xf32>, vector<2x64xf32> -> vector<2x64xf32>
    %236 = vector.broadcast %1 : vector<1x64xf32> to vector<2x64xf32>
    %237 = arith.addf %235, %236 : vector<2x64xf32>
    %cst_147 = arith.constant 0.000000e+00 : f32
    %238 = vector.broadcast %cst_147 : f32 to vector<2x64xf32>
    %239 = arith.maximumf %237, %238 : vector<2x64xf32>
    %c23 = arith.constant 23 : index
    %c0_148 = arith.constant 0 : index
    %c0_149 = arith.constant 0 : index
    %240 = vector.load %arg4[%c23, %c0_148, %c0_149] : memref<32x64x128xf32, #tpu.memory_space<vmem>>, vector<1x64x128xf32>
    %241 = vector.shape_cast %240 : vector<1x64x128xf32> to vector<64x128xf32>
    %cst_150 = arith.constant dense<0.000000e+00> : vector<2x128xf32>
    %242 = tpu.matmul %239, %241, %cst_150 {dimension_numbers = #tpu.dot_dimension_numbers<[1], [0], [0], [1], [0, 0, 1, 1], [], []>} : vector<2x64xf32>, vector<64x128xf32>, vector<2x128xf32> -> vector<2x128xf32>
    %243 = arith.addf %233, %242 : vector<2x128xf32>
    %c0_151 = arith.constant 0 : index
    %c3072 = arith.constant 3072 : index
    %244 = vector.load %arg1[%c0_151, %c3072] : memref<2x4096xf32, #tpu.memory_space<vmem>>, vector<2x128xf32>
    %cst_152 = arith.constant dense<0.000000e+00> : vector<2x64xf32>
    %245 = tpu.matmul %244, %0, %cst_152 {dimension_numbers = #tpu.dot_dimension_numbers<[1], [0], [0], [1], [0, 0, 1, 1], [], []>} : vector<2x128xf32>, vector<128x64xf32>, vector<2x64xf32> -> vector<2x64xf32>
    %246 = vector.broadcast %1 : vector<1x64xf32> to vector<2x64xf32>
    %247 = arith.addf %245, %246 : vector<2x64xf32>
    %cst_153 = arith.constant 0.000000e+00 : f32
    %248 = vector.broadcast %cst_153 : f32 to vector<2x64xf32>
    %249 = arith.maximumf %247, %248 : vector<2x64xf32>
    %c24 = arith.constant 24 : index
    %c0_154 = arith.constant 0 : index
    %c0_155 = arith.constant 0 : index
    %250 = vector.load %arg4[%c24, %c0_154, %c0_155] : memref<32x64x128xf32, #tpu.memory_space<vmem>>, vector<1x64x128xf32>
    %251 = vector.shape_cast %250 : vector<1x64x128xf32> to vector<64x128xf32>
    %cst_156 = arith.constant dense<0.000000e+00> : vector<2x128xf32>
    %252 = tpu.matmul %249, %251, %cst_156 {dimension_numbers = #tpu.dot_dimension_numbers<[1], [0], [0], [1], [0, 0, 1, 1], [], []>} : vector<2x64xf32>, vector<64x128xf32>, vector<2x128xf32> -> vector<2x128xf32>
    %253 = arith.addf %243, %252 : vector<2x128xf32>
    %c0_157 = arith.constant 0 : index
    %c3200 = arith.constant 3200 : index
    %254 = vector.load %arg1[%c0_157, %c3200] : memref<2x4096xf32, #tpu.memory_space<vmem>>, vector<2x128xf32>
    %cst_158 = arith.constant dense<0.000000e+00> : vector<2x64xf32>
    %255 = tpu.matmul %254, %0, %cst_158 {dimension_numbers = #tpu.dot_dimension_numbers<[1], [0], [0], [1], [0, 0, 1, 1], [], []>} : vector<2x128xf32>, vector<128x64xf32>, vector<2x64xf32> -> vector<2x64xf32>
    %256 = vector.broadcast %1 : vector<1x64xf32> to vector<2x64xf32>
    %257 = arith.addf %255, %256 : vector<2x64xf32>
    %cst_159 = arith.constant 0.000000e+00 : f32
    %258 = vector.broadcast %cst_159 : f32 to vector<2x64xf32>
    %259 = arith.maximumf %257, %258 : vector<2x64xf32>
    %c25 = arith.constant 25 : index
    %c0_160 = arith.constant 0 : index
    %c0_161 = arith.constant 0 : index
    %260 = vector.load %arg4[%c25, %c0_160, %c0_161] : memref<32x64x128xf32, #tpu.memory_space<vmem>>, vector<1x64x128xf32>
    %261 = vector.shape_cast %260 : vector<1x64x128xf32> to vector<64x128xf32>
    %cst_162 = arith.constant dense<0.000000e+00> : vector<2x128xf32>
    %262 = tpu.matmul %259, %261, %cst_162 {dimension_numbers = #tpu.dot_dimension_numbers<[1], [0], [0], [1], [0, 0, 1, 1], [], []>} : vector<2x64xf32>, vector<64x128xf32>, vector<2x128xf32> -> vector<2x128xf32>
    %263 = arith.addf %253, %262 : vector<2x128xf32>
    %c0_163 = arith.constant 0 : index
    %c3328 = arith.constant 3328 : index
    %264 = vector.load %arg1[%c0_163, %c3328] : memref<2x4096xf32, #tpu.memory_space<vmem>>, vector<2x128xf32>
    %cst_164 = arith.constant dense<0.000000e+00> : vector<2x64xf32>
    %265 = tpu.matmul %264, %0, %cst_164 {dimension_numbers = #tpu.dot_dimension_numbers<[1], [0], [0], [1], [0, 0, 1, 1], [], []>} : vector<2x128xf32>, vector<128x64xf32>, vector<2x64xf32> -> vector<2x64xf32>
    %266 = vector.broadcast %1 : vector<1x64xf32> to vector<2x64xf32>
    %267 = arith.addf %265, %266 : vector<2x64xf32>
    %cst_165 = arith.constant 0.000000e+00 : f32
    %268 = vector.broadcast %cst_165 : f32 to vector<2x64xf32>
    %269 = arith.maximumf %267, %268 : vector<2x64xf32>
    %c26 = arith.constant 26 : index
    %c0_166 = arith.constant 0 : index
    %c0_167 = arith.constant 0 : index
    %270 = vector.load %arg4[%c26, %c0_166, %c0_167] : memref<32x64x128xf32, #tpu.memory_space<vmem>>, vector<1x64x128xf32>
    %271 = vector.shape_cast %270 : vector<1x64x128xf32> to vector<64x128xf32>
    %cst_168 = arith.constant dense<0.000000e+00> : vector<2x128xf32>
    %272 = tpu.matmul %269, %271, %cst_168 {dimension_numbers = #tpu.dot_dimension_numbers<[1], [0], [0], [1], [0, 0, 1, 1], [], []>} : vector<2x64xf32>, vector<64x128xf32>, vector<2x128xf32> -> vector<2x128xf32>
    %273 = arith.addf %263, %272 : vector<2x128xf32>
    %c0_169 = arith.constant 0 : index
    %c3456 = arith.constant 3456 : index
    %274 = vector.load %arg1[%c0_169, %c3456] : memref<2x4096xf32, #tpu.memory_space<vmem>>, vector<2x128xf32>
    %cst_170 = arith.constant dense<0.000000e+00> : vector<2x64xf32>
    %275 = tpu.matmul %274, %0, %cst_170 {dimension_numbers = #tpu.dot_dimension_numbers<[1], [0], [0], [1], [0, 0, 1, 1], [], []>} : vector<2x128xf32>, vector<128x64xf32>, vector<2x64xf32> -> vector<2x64xf32>
    %276 = vector.broadcast %1 : vector<1x64xf32> to vector<2x64xf32>
    %277 = arith.addf %275, %276 : vector<2x64xf32>
    %cst_171 = arith.constant 0.000000e+00 : f32
    %278 = vector.broadcast %cst_171 : f32 to vector<2x64xf32>
    %279 = arith.maximumf %277, %278 : vector<2x64xf32>
    %c27 = arith.constant 27 : index
    %c0_172 = arith.constant 0 : index
    %c0_173 = arith.constant 0 : index
    %280 = vector.load %arg4[%c27, %c0_172, %c0_173] : memref<32x64x128xf32, #tpu.memory_space<vmem>>, vector<1x64x128xf32>
    %281 = vector.shape_cast %280 : vector<1x64x128xf32> to vector<64x128xf32>
    %cst_174 = arith.constant dense<0.000000e+00> : vector<2x128xf32>
    %282 = tpu.matmul %279, %281, %cst_174 {dimension_numbers = #tpu.dot_dimension_numbers<[1], [0], [0], [1], [0, 0, 1, 1], [], []>} : vector<2x64xf32>, vector<64x128xf32>, vector<2x128xf32> -> vector<2x128xf32>
    %283 = arith.addf %273, %282 : vector<2x128xf32>
    %c0_175 = arith.constant 0 : index
    %c3584 = arith.constant 3584 : index
    %284 = vector.load %arg1[%c0_175, %c3584] : memref<2x4096xf32, #tpu.memory_space<vmem>>, vector<2x128xf32>
    %cst_176 = arith.constant dense<0.000000e+00> : vector<2x64xf32>
    %285 = tpu.matmul %284, %0, %cst_176 {dimension_numbers = #tpu.dot_dimension_numbers<[1], [0], [0], [1], [0, 0, 1, 1], [], []>} : vector<2x128xf32>, vector<128x64xf32>, vector<2x64xf32> -> vector<2x64xf32>
    %286 = vector.broadcast %1 : vector<1x64xf32> to vector<2x64xf32>
    %287 = arith.addf %285, %286 : vector<2x64xf32>
    %cst_177 = arith.constant 0.000000e+00 : f32
    %288 = vector.broadcast %cst_177 : f32 to vector<2x64xf32>
    %289 = arith.maximumf %287, %288 : vector<2x64xf32>
    %c28 = arith.constant 28 : index
    %c0_178 = arith.constant 0 : index
    %c0_179 = arith.constant 0 : index
    %290 = vector.load %arg4[%c28, %c0_178, %c0_179] : memref<32x64x128xf32, #tpu.memory_space<vmem>>, vector<1x64x128xf32>
    %291 = vector.shape_cast %290 : vector<1x64x128xf32> to vector<64x128xf32>
    %cst_180 = arith.constant dense<0.000000e+00> : vector<2x128xf32>
    %292 = tpu.matmul %289, %291, %cst_180 {dimension_numbers = #tpu.dot_dimension_numbers<[1], [0], [0], [1], [0, 0, 1, 1], [], []>} : vector<2x64xf32>, vector<64x128xf32>, vector<2x128xf32> -> vector<2x128xf32>
    %293 = arith.addf %283, %292 : vector<2x128xf32>
    %c0_181 = arith.constant 0 : index
    %c3712 = arith.constant 3712 : index
    %294 = vector.load %arg1[%c0_181, %c3712] : memref<2x4096xf32, #tpu.memory_space<vmem>>, vector<2x128xf32>
    %cst_182 = arith.constant dense<0.000000e+00> : vector<2x64xf32>
    %295 = tpu.matmul %294, %0, %cst_182 {dimension_numbers = #tpu.dot_dimension_numbers<[1], [0], [0], [1], [0, 0, 1, 1], [], []>} : vector<2x128xf32>, vector<128x64xf32>, vector<2x64xf32> -> vector<2x64xf32>
    %296 = vector.broadcast %1 : vector<1x64xf32> to vector<2x64xf32>
    %297 = arith.addf %295, %296 : vector<2x64xf32>
    %cst_183 = arith.constant 0.000000e+00 : f32
    %298 = vector.broadcast %cst_183 : f32 to vector<2x64xf32>
    %299 = arith.maximumf %297, %298 : vector<2x64xf32>
    %c29 = arith.constant 29 : index
    %c0_184 = arith.constant 0 : index
    %c0_185 = arith.constant 0 : index
    %300 = vector.load %arg4[%c29, %c0_184, %c0_185] : memref<32x64x128xf32, #tpu.memory_space<vmem>>, vector<1x64x128xf32>
    %301 = vector.shape_cast %300 : vector<1x64x128xf32> to vector<64x128xf32>
    %cst_186 = arith.constant dense<0.000000e+00> : vector<2x128xf32>
    %302 = tpu.matmul %299, %301, %cst_186 {dimension_numbers = #tpu.dot_dimension_numbers<[1], [0], [0], [1], [0, 0, 1, 1], [], []>} : vector<2x64xf32>, vector<64x128xf32>, vector<2x128xf32> -> vector<2x128xf32>
    %303 = arith.addf %293, %302 : vector<2x128xf32>
    %c0_187 = arith.constant 0 : index
    %c3840 = arith.constant 3840 : index
    %304 = vector.load %arg1[%c0_187, %c3840] : memref<2x4096xf32, #tpu.memory_space<vmem>>, vector<2x128xf32>
    %cst_188 = arith.constant dense<0.000000e+00> : vector<2x64xf32>
    %305 = tpu.matmul %304, %0, %cst_188 {dimension_numbers = #tpu.dot_dimension_numbers<[1], [0], [0], [1], [0, 0, 1, 1], [], []>} : vector<2x128xf32>, vector<128x64xf32>, vector<2x64xf32> -> vector<2x64xf32>
    %306 = vector.broadcast %1 : vector<1x64xf32> to vector<2x64xf32>
    %307 = arith.addf %305, %306 : vector<2x64xf32>
    %cst_189 = arith.constant 0.000000e+00 : f32
    %308 = vector.broadcast %cst_189 : f32 to vector<2x64xf32>
    %309 = arith.maximumf %307, %308 : vector<2x64xf32>
    %c30 = arith.constant 30 : index
    %c0_190 = arith.constant 0 : index
    %c0_191 = arith.constant 0 : index
    %310 = vector.load %arg4[%c30, %c0_190, %c0_191] : memref<32x64x128xf32, #tpu.memory_space<vmem>>, vector<1x64x128xf32>
    %311 = vector.shape_cast %310 : vector<1x64x128xf32> to vector<64x128xf32>
    %cst_192 = arith.constant dense<0.000000e+00> : vector<2x128xf32>
    %312 = tpu.matmul %309, %311, %cst_192 {dimension_numbers = #tpu.dot_dimension_numbers<[1], [0], [0], [1], [0, 0, 1, 1], [], []>} : vector<2x64xf32>, vector<64x128xf32>, vector<2x128xf32> -> vector<2x128xf32>
    %313 = arith.addf %303, %312 : vector<2x128xf32>
    %c0_193 = arith.constant 0 : index
    %c3968 = arith.constant 3968 : index
    %314 = vector.load %arg1[%c0_193, %c3968] : memref<2x4096xf32, #tpu.memory_space<vmem>>, vector<2x128xf32>
    %cst_194 = arith.constant dense<0.000000e+00> : vector<2x64xf32>
    %315 = tpu.matmul %314, %0, %cst_194 {dimension_numbers = #tpu.dot_dimension_numbers<[1], [0], [0], [1], [0, 0, 1, 1], [], []>} : vector<2x128xf32>, vector<128x64xf32>, vector<2x64xf32> -> vector<2x64xf32>
    %316 = vector.broadcast %1 : vector<1x64xf32> to vector<2x64xf32>
    %317 = arith.addf %315, %316 : vector<2x64xf32>
    %cst_195 = arith.constant 0.000000e+00 : f32
    %318 = vector.broadcast %cst_195 : f32 to vector<2x64xf32>
    %319 = arith.maximumf %317, %318 : vector<2x64xf32>
    %c31 = arith.constant 31 : index
    %c0_196 = arith.constant 0 : index
    %c0_197 = arith.constant 0 : index
    %320 = vector.load %arg4[%c31, %c0_196, %c0_197] : memref<32x64x128xf32, #tpu.memory_space<vmem>>, vector<1x64x128xf32>
    %321 = vector.shape_cast %320 : vector<1x64x128xf32> to vector<64x128xf32>
    %cst_198 = arith.constant dense<0.000000e+00> : vector<2x128xf32>
    %322 = tpu.matmul %319, %321, %cst_198 {dimension_numbers = #tpu.dot_dimension_numbers<[1], [0], [0], [1], [0, 0, 1, 1], [], []>} : vector<2x64xf32>, vector<64x128xf32>, vector<2x128xf32> -> vector<2x128xf32>
    %323 = arith.addf %313, %322 : vector<2x128xf32>
    %324 = vector.broadcast %2 : vector<1x128xf32> to vector<2x128xf32>
    %325 = arith.addf %323, %324 : vector<2x128xf32>
    %cst_199 = arith.constant 2.000000e+01 : f32
    %326 = vector.broadcast %cst_199 : f32 to vector<2x128xf32>
    %327 = arith.cmpf ogt, %325, %326 : vector<2x128xf32>
    %cst_200 = arith.constant 2.000000e+01 : f32
    %328 = vector.broadcast %cst_200 : f32 to vector<2x128xf32>
    %329 = arith.minimumf %325, %328 : vector<2x128xf32>
    %330 = math.exp %329 : vector<2x128xf32>
    %331 = math.log1p %330 : vector<2x128xf32>
    %332 = arith.select %327, %325, %331 : vector<2x128xi1>, vector<2x128xf32>
    %c0_201 = arith.constant 0 : index
    %c0_202 = arith.constant 0 : index
    %333 = vector.load %arg6[%c0_201, %c0_202] : memref<2x128xf32, #tpu.memory_space<vmem>>, vector<2x128xf32>
    tpu.vector_store %arg6[%c0_201, %c0_202], %332 {strides = array<i32>} : memref<2x128xf32, #tpu.memory_space<vmem>>, vector<2x128xf32>,
    return
  }
  func.func @transform_0(%arg0: i32) -> (i32, i32) {
    %c0_i32 = arith.constant 0 : i32
    %c0_i32_0 = arith.constant 0 : i32
    return %arg0, %c0_i32 : i32, i32
  }
  func.func @transform_1(%arg0: i32) -> (i32, i32) {
    %c0_i32 = arith.constant 0 : i32
    %c0_i32_0 = arith.constant 0 : i32
    %c0_i32_1 = arith.constant 0 : i32
    return %c0_i32, %c0_i32_0 : i32, i32
  }
  func.func @transform_2(%arg0: i32) -> (i32, i32) {
    %c0_i32 = arith.constant 0 : i32
    %c0_i32_0 = arith.constant 0 : i32
    %c0_i32_1 = arith.constant 0 : i32
    return %c0_i32, %c0_i32_0 : i32, i32
  }
  func.func @transform_3(%arg0: i32) -> (i32, i32, i32) {
    %c0_i32 = arith.constant 0 : i32
    %c0_i32_0 = arith.constant 0 : i32
    %c0_i32_1 = arith.constant 0 : i32
    %c0_i32_2 = arith.constant 0 : i32
    return %c0_i32, %c0_i32_0, %c0_i32_1 : i32, i32, i32
  }
  func.func @transform_4(%arg0: i32) -> (i32, i32) {
    %c0_i32 = arith.constant 0 : i32
    %c0_i32_0 = arith.constant 0 : i32
    %c0_i32_1 = arith.constant 0 : i32
    return %c0_i32, %c0_i32_0 : i32, i32
  }
  func.func @transform_5(%arg0: i32) -> (i32, i32) {
    %c0_i32 = arith.constant 0 : i32
    %c0_i32_0 = arith.constant 0 : i32
    return %arg0, %c0_i32 : i32, i32
  }
}

</mosaic_0001>

<llo_original>
// kernel: apply.1
$region0: #{apply.1}
  #allocation0 [shape = 'u32[]', space=smem, size = 0x4, offset = 0x4, fixed_abs, tag = 'smem constant byte address 0x4 - core index']
  #allocation1 [shape = 'u32[144,128]{1,0:T(1,128)}', space=vmem, size = 0x12000, scoped, tag = 'internal scratch']
  %s0 = inlined_call_operand.vmem [shape: f32[2,4096], index: 0, kind: input, shape index: {}]
  %s1 = inlined_call_operand.vmem [shape: f32[128,64], index: 1, kind: input, shape index: {}]
  %s2 = inlined_call_operand.vmem [shape: f32[1,64], index: 2, kind: input, shape index: {}]
  %s3 = inlined_call_operand.hbm [shape: f32[32,64,128], index: 3, kind: input, shape index: {}]
  %s4 = inlined_call_operand.vmem [shape: f32[1,128], index: 4, kind: input, shape index: {}]
  %s5 = inlined_call_operand.hbm [shape: f32[2,128], index: 5, kind: output, shape index: {}]
  %s6 = sld [smem:[#allocation0]]
  $region34: #{apply.1} parent=0
    _
  %s8 = ssub.s32 1, %s6
  %s9 = scalar_select 0, %s8, %s6
  $region1: #{apply.1} parent=0
    #allocation2 [shape = 'u8[1048576]{0}', space=vmem, size = 0x100000, scoped, tag = 'input window, operand 3, single buffered']
    #allocation3 [shape = 's32[1]{0}', space=sflag, size = 0x4, scoped, tag = 'scoped memory for apply.1']
    #allocation4 [shape = 's32[1]{0}', space=sflag, size = 0x4, scoped, tag = 'scoped memory for apply.1']
    #allocation5 [shape = 'u8[1024]{0}', space=vmem, size = 0x400, scoped, tag = 'output window, operand 0, single buffered']
    %10 = vsyncpa [#allocation3], 0
    %11 = vsyncpa [#allocation4], 0
    // Predicated region
    $region2: #{apply.1} parent=1 // pred_check
      _
    $region3: #{apply.1} parent=1 // pred_check_branch
      %13 = sbr.rel (0) target = $region5
    $region4: #{apply.1} parent=1 // pred_region
      _
    $region5: #{apply.1} parent=1 // pred_fallthru
      _
    // Predicated region
    $region6: #{apply.1} parent=1 // pred_check
      _
    $region7: #{apply.1} parent=1 // pred_check_branch
      %15 = sbr.rel (0) target = $region9
    $region8: #{apply.1} parent=1 // pred_region
      _
    $region9: #{apply.1} parent=1 // pred_fallthru
      _
    // Predicated region
    $region10: #{apply.1} parent=1 // pred_check
      _
    $region11: #{apply.1} parent=1 // pred_check_branch
      %17 = sbr.rel (0) target = $region13
    $region12: #{apply.1} parent=1 // pred_region
      _
    $region13: #{apply.1} parent=1 // pred_fallthru
      _
    // Predicated region
    $region14: #{apply.1} parent=1 // pred_check
      _
    $region15: #{apply.1} parent=1 // pred_check_branch
      %19 = sbr.rel (0) target = $region17
    $region16: #{apply.1} parent=1 // pred_region
      %s21 = ssub.s32 32768, 32768
      %22 = vsyncadd [#allocation3], %s21
      %s23 = sshll.u32 [#allocation2], 4
      %s24 = int_to_ptr.vmem [resolvable:$true] %s23
      %29 = dma.hbm_to_vmem [thread:$0]  %s3, 32768, %s24, [#allocation3], 128, 128, 8
    $region17: #{apply.1} parent=1 // pred_fallthru
      _
    // Predicated region
    $region18: #{apply.1} parent=1 // pred_check
      _
    $region19: #{apply.1} parent=1 // pred_check_branch
      %31 = sbr.rel (0) target = $region21
    $region20: #{apply.1} parent=1 // pred_region
      _
    $region21: #{apply.1} parent=1 // pred_fallthru
      _
    // Predicated region
    $region22: #{apply.1} parent=1 // pred_check
      _
    $region23: #{apply.1} parent=1 // pred_check_branch
      %33 = sbr.rel (0) target = $region25
    $region24: #{apply.1} parent=1 // pred_region
      %34 = dma.done [#allocation3], 32768
    $region25: #{apply.1} parent=1 // pred_fallthru
      _
    %v35 = vld [vmem:[%s1] sm:$0xff]
    %v36 = vld [vmem:[%s1 + $0x8] sm:$0xff]
    %v37 = vld [vmem:[%s1 + $0x10] sm:$0xff]
    %v38 = vld [vmem:[%s1 + $0x18] sm:$0xff]
    %v39 = vld [vmem:[%s1 + $0x20] sm:$0xff]
    %v40 = vld [vmem:[%s1 + $0x28] sm:$0xff]
    %v41 = vld [vmem:[%s1 + $0x30] sm:$0xff]
    %v42 = vld [vmem:[%s1 + $0x38] sm:$0xff]
    %v43 = vld [vmem:[%s1 + $0x40] sm:$0xff]
    %v44 = vld [vmem:[%s1 + $0x48] sm:$0xff]
    %v45 = vld [vmem:[%s1 + $0x50] sm:$0xff]
    %v46 = vld [vmem:[%s1 + $0x58] sm:$0xff]
    %v47 = vld [vmem:[%s1 + $0x60] sm:$0xff]
    %v48 = vld [vmem:[%s1 + $0x68] sm:$0xff]
    %v49 = vld [vmem:[%s1 + $0x70] sm:$0xff]
    %v50 = vld [vmem:[%s1 + $0x78] sm:$0xff]
    %v51 = vld [vmem:[%s2] sm:$0x1]
    %v52 = vld [vmem:[%s4] sm:$0x1]
    %v53 = vld [vmem:[%s0] sm:$0x3]
    %v55 = vlaneseq
    %v56 = vshrl.u32 %v55, 7
    %v57 = vsub.s32 0, %v56
    %v58 = vrot.slane %v51, %v57
    %60 = vmatprep.subr.mxu0 0.0
    %61 = vmatpush1.msra.mxu0 %v35
    %62 = vmatprep.subr.mxu0 0.0
    %63 = vmatpush1.msra.mxu0 %v36
    %64 = vmatprep.subr.mxu0 0.0
    %65 = vmatpush1.msra.mxu0 %v37
    %66 = vmatprep.subr.mxu0 0.0
    %67 = vmatpush1.msra.mxu0 %v38
    %68 = vmatprep.subr.mxu0 0.0
    %69 = vmatpush1.msra.mxu0 %v39
    %70 = vmatprep.subr.mxu0 0.0
    %71 = vmatpush1.msra.mxu0 %v40
    %72 = vmatprep.subr.mxu0 0.0
    %73 = vmatpush1.msra.mxu0 %v41
    %74 = vmatprep.subr.mxu0 0.0
    %75 = vmatpush1.msra.mxu0 %v42
    %76 = vmatprep.subr.mxu0 0.0
    %77 = vmatpush1.msra.mxu0 %v43
    %78 = vmatprep.subr.mxu0 0.0
    %79 = vmatpush1.msra.mxu0 %v44
    %80 = vmatprep.subr.mxu0 0.0
    %81 = vmatpush1.msra.mxu0 %v45
    %82 = vmatprep.subr.mxu0 0.0
    %83 = vmatpush1.msra.mxu0 %v46
    %84 = vmatprep.subr.mxu0 0.0
    %85 = vmatpush1.msra.mxu0 %v47
    %86 = vmatprep.subr.mxu0 0.0
    %87 = vmatpush1.msra.mxu0 %v48
    %88 = vmatprep.subr.mxu0 0.0
    %89 = vmatpush1.msra.mxu0 %v49
    %90 = vmatprep.subr.mxu0 0.0
    %91 = vmatpush1.msra.mxu0 %v50
    %92 = vmatprep.subr.mxu0 0.0
    %93 = vmatpush1.msra.mxu0 0.0
    %94 = vmatprep.subr.mxu0 0.0
    %95 = vmatpush1.msra.mxu0 0.0
    %96 = vmatprep.subr.mxu0 0.0
    %97 = vmatpush1.msra.mxu0 0.0
    %98 = vmatprep.subr.mxu0 0.0
    %99 = vmatpush1.msra.mxu0 0.0
    %100 = vmatprep.subr.mxu0 0.0
    %101 = vmatpush1.msra.mxu0 0.0
    %102 = vmatprep.subr.mxu0 0.0
    %103 = vmatpush1.msra.mxu0 0.0
    %104 = vmatprep.subr.mxu0 0.0
    %105 = vmatpush1.msra.mxu0 0.0
    %106 = vmatprep.subr.mxu0 0.0
    %107 = vmatpush1.msra.mxu0 0.0
    %108 = vmatprep.subr.mxu0 0.0
    %109 = vmatpush1.msra.mxu0 0.0
    %110 = vmatprep.subr.mxu0 0.0
    %111 = vmatpush1.msra.mxu0 0.0
    %112 = vmatprep.subr.mxu0 0.0
    %113 = vmatpush1.msra.mxu0 0.0
    %114 = vmatprep.subr.mxu0 0.0
    %115 = vmatpush1.msra.mxu0 0.0
    %116 = vmatprep.subr.mxu0 0.0
    %117 = vmatpush1.msra.mxu0 0.0
    %118 = vmatprep.subr.mxu0 0.0
    %119 = vmatpush1.msra.mxu0 0.0
    %120 = vmatprep.subr.mxu0 0.0
    %121 = vmatpush1.msra.mxu0 0.0
    %122 = vmatprep.subr.mxu0 0.0
    %123 = vmatpush1.msra.mxu0 0.0
    %124 = vmatprep.mubr.f32.mxu0 0.0
    %125 = vmatmul.mubr.f32.gmra.mrb[0].mxu0 %v53
    %v126 = vpop.f32.mrb[0].mxu0
    %v127 = vadd.f32 %v58, %v126
    %v128 = vpop.f32.mrb[0].mxu0
    %129 = vdwg.mxu0
    %v130 = vmax.f32 %v127, 0.0
    %v131 = vld [vmem:[#allocation2] sm:$0xff]
    %v132 = vld [vmem:[#allocation2 + $0x8] sm:$0xff]
    %v133 = vld [vmem:[#allocation2 + $0x10] sm:$0xff]
    %v134 = vld [vmem:[#allocation2 + $0x18] sm:$0xff]
    %v135 = vld [vmem:[#allocation2 + $0x20] sm:$0xff]
    %v136 = vld [vmem:[#allocation2 + $0x28] sm:$0xff]
    %v137 = vld [vmem:[#allocation2 + $0x30] sm:$0xff]
    %v138 = vld [vmem:[#allocation2 + $0x38] sm:$0xff]
    %v139 = vld [vmem:[%s0 + $0x2] sm:$0x3]
    %140 = vmatprep.subr.mxu0 0.0
    %141 = vmatpush1.msra.mxu0 %v35
    %142 = vmatprep.subr.mxu0 0.0
    %143 = vmatpush1.msra.mxu0 %v36
    %144 = vmatprep.subr.mxu0 0.0
    %145 = vmatpush1.msra.mxu0 %v37
    %146 = vmatprep.subr.mxu0 0.0
    %147 = vmatpush1.msra.mxu0 %v38
    %148 = vmatprep.subr.mxu0 0.0
    %149 = vmatpush1.msra.mxu0 %v39
    %150 = vmatprep.subr.mxu0 0.0
    %151 = vmatpush1.msra.mxu0 %v40
    %152 = vmatprep.subr.mxu0 0.0
    %153 = vmatpush1.msra.mxu0 %v41
    %154 = vmatprep.subr.mxu0 0.0
    %155 = vmatpush1.msra.mxu0 %v42
    %156 = vmatprep.subr.mxu0 0.0
    %157 = vmatpush1.msra.mxu0 %v43
    %158 = vmatprep.subr.mxu0 0.0
    %159 = vmatpush1.msra.mxu0 %v44
    %160 = vmatprep.subr.mxu0 0.0
    %161 = vmatpush1.msra.mxu0 %v45
    %162 = vmatprep.subr.mxu0 0.0
    %163 = vmatpush1.msra.mxu0 %v46
    %164 = vmatprep.subr.mxu0 0.0
    %165 = vmatpush1.msra.mxu0 %v47
    %166 = vmatprep.subr.mxu0 0.0
    %167 = vmatpush1.msra.mxu0 %v48
    %168 = vmatprep.subr.mxu0 0.0
    %169 = vmatpush1.msra.mxu0 %v49
    %170 = vmatprep.subr.mxu0 0.0
    %171 = vmatpush1.msra.mxu0 %v50
    %172 = vmatprep.subr.mxu0 0.0
    %173 = vmatpush1.msra.mxu0 0.0
    %174 = vmatprep.subr.mxu0 0.0
    %175 = vmatpush1.msra.mxu0 0.0
    %176 = vmatprep.subr.mxu0 0.0
    %177 = vmatpush1.msra.mxu0 0.0
    %178 = vmatprep.subr.mxu0 0.0
    %179 = vmatpush1.msra.mxu0 0.0
    %180 = vmatprep.subr.mxu0 0.0
    %181 = vmatpush1.msra.mxu0 0.0
    %182 = vmatprep.subr.mxu0 0.0
    %183 = vmatpush1.msra.mxu0 0.0
    %184 = vmatprep.subr.mxu0 0.0
    %185 = vmatpush1.msra.mxu0 0.0
    %186 = vmatprep.subr.mxu0 0.0
    %187 = vmatpush1.msra.mxu0 0.0
    %188 = vmatprep.subr.mxu0 0.0
    %189 = vmatpush1.msra.mxu0 0.0
    %190 = vmatprep.subr.mxu0 0.0
    %191 = vmatpush1.msra.mxu0 0.0
    %192 = vmatprep.subr.mxu0 0.0
    %193 = vmatpush1.msra.mxu0 0.0
    %194 = vmatprep.subr.mxu0 0.0
    %195 = vmatpush1.msra.mxu0 0.0
    %196 = vmatprep.subr.mxu0 0.0
    %197 = vmatpush1.msra.mxu0 0.0
    %198 = vmatprep.subr.mxu0 0.0
    %199 = vmatpush1.msra.mxu0 0.0
    %200 = vmatprep.subr.mxu0 0.0
    %201 = vmatpush1.msra.mxu0 0.0
    %202 = vmatprep.subr.mxu0 0.0
    %203 = vmatpush1.msra.mxu0 0.0
    %204 = vmatprep.mubr.f32.mxu0 0.0
    %205 = vmatmul.mubr.f32.gmra.mrb[0].mxu0 %v139
    %v206 = vpop.f32.mrb[0].mxu0
    %v207 = vadd.f32 %v58, %v206
    %v208 = vpop.f32.mrb[0].mxu0
    %209 = vdwg.mxu0
    %v210 = vmax.f32 %v207, 0.0
    %s211 = scalar_lea.vmem [#allocation2], 64
    %v212 = vld [vmem:[%s211] sm:$0xff]
    %v213 = vld [vmem:[%s211 + $0x8] sm:$0xff]
    %v214 = vld [vmem:[%s211 + $0x10] sm:$0xff]
    %v215 = vld [vmem:[%s211 + $0x18] sm:$0xff]
    %v216 = vld [vmem:[%s211 + $0x20] sm:$0xff]
    %v217 = vld [vmem:[%s211 + $0x28] sm:$0xff]
    %v218 = vld [vmem:[%s211 + $0x30] sm:$0xff]
    %v219 = vld [vmem:[%s211 + $0x38] sm:$0xff]
    %vm220 = vcmask 523264
    %v222 = vsel %vm220, %v210, 0
    %224 = vmatprep.subr.mxu0 0.0
    %225 = vmatpush1.msra.mxu0 %v212
    %226 = vmatprep.subr.mxu0 0.0
    %227 = vmatpush1.msra.mxu0 %v213
    %228 = vmatprep.subr.mxu0 0.0
    %229 = vmatpush1.msra.mxu0 %v214
    %230 = vmatprep.subr.mxu0 0.0
    %231 = vmatpush1.msra.mxu0 %v215
    %232 = vmatprep.subr.mxu0 0.0
    %233 = vmatpush1.msra.mxu0 %v216
    %234 = vmatprep.subr.mxu0 0.0
    %235 = vmatpush1.msra.mxu0 %v217
    %236 = vmatprep.subr.mxu0 0.0
    %237 = vmatpush1.msra.mxu0 %v218
    %238 = vmatprep.subr.mxu0 0.0
    %239 = vmatpush1.msra.mxu0 %v219
    %240 = vmatprep.subr.mxu0 0.0
    %241 = vmatpush1.msra.mxu0 0.0
    %242 = vmatprep.subr.mxu0 0.0
    %243 = vmatpush1.msra.mxu0 0.0
    %244 = vmatprep.subr.mxu0 0.0
    %245 = vmatpush1.msra.mxu0 0.0
    %246 = vmatprep.subr.mxu0 0.0
    %247 = vmatpush1.msra.mxu0 0.0
    %248 = vmatprep.subr.mxu0 0.0
    %249 = vmatpush1.msra.mxu0 0.0
    %250 = vmatprep.subr.mxu0 0.0
    %251 = vmatpush1.msra.mxu0 0.0
    %252 = vmatprep.subr.mxu0 0.0
    %253 = vmatpush1.msra.mxu0 0.0
    %254 = vmatprep.subr.mxu0 0.0
    %255 = vmatpush1.msra.mxu0 0.0
    %256 = vmatprep.subr.mxu0 0.0
    %257 = vmatpush1.msra.mxu0 0.0
    %258 = vmatprep.subr.mxu0 0.0
    %259 = vmatpush1.msra.mxu0 0.0
    %260 = vmatprep.subr.mxu0 0.0
    %261 = vmatpush1.msra.mxu0 0.0
    %262 = vmatprep.subr.mxu0 0.0
    %263 = vmatpush1.msra.mxu0 0.0
    %264 = vmatprep.subr.mxu0 0.0
    %265 = vmatpush1.msra.mxu0 0.0
    %266 = vmatprep.subr.mxu0 0.0
    %267 = vmatpush1.msra.mxu0 0.0
    %268 = vmatprep.subr.mxu0 0.0
    %269 = vmatpush1.msra.mxu0 0.0
    %270 = vmatprep.subr.mxu0 0.0
    %271 = vmatpush1.msra.mxu0 0.0
    %272 = vmatprep.subr.mxu0 0.0
    %273 = vmatpush1.msra.mxu0 0.0
    %274 = vmatprep.subr.mxu0 0.0
    %275 = vmatpush1.msra.mxu0 0.0
    %276 = vmatprep.subr.mxu0 0.0
    %277 = vmatpush1.msra.mxu0 0.0
    %278 = vmatprep.subr.mxu0 0.0
    %279 = vmatpush1.msra.mxu0 0.0
    %280 = vmatprep.subr.mxu0 0.0
    %281 = vmatpush1.msra.mxu0 0.0
    %282 = vmatprep.subr.mxu0 0.0
    %283 = vmatpush1.msra.mxu0 0.0
    %284 = vmatprep.subr.mxu0 0.0
    %285 = vmatpush1.msra.mxu0 0.0
    %286 = vmatprep.subr.mxu0 0.0
    %287 = vmatpush1.msra.mxu0 0.0
    %288 = vmatprep.mubr.f32.mxu0 0.0
    %289 = vmatmul.mubr.f32.gmra.mrb[0].mxu0 %v222
    %v290 = vpop.f32.mrb[0].mxu0
    %v291 = vadd.f32 0.0, %v290
    %v292 = vpop.f32.mrb[0].mxu0
    %293 = vdwg.mxu0
    %v295 = vsel %vm220, %v130, 0
    %297 = vmatprep.subr.mxu0 0.0
    %298 = vmatpush1.msra.mxu0 %v131
    %299 = vmatprep.subr.mxu0 0.0
    %300 = vmatpush1.msra.mxu0 %v132
    %301 = vmatprep.subr.mxu0 0.0
    %302 = vmatpush1.msra.mxu0 %v133
    %303 = vmatprep.subr.mxu0 0.0
    %304 = vmatpush1.msra.mxu0 %v134
    %305 = vmatprep.subr.mxu0 0.0
    %306 = vmatpush1.msra.mxu0 %v135
    %307 = vmatprep.subr.mxu0 0.0
    %308 = vmatpush1.msra.mxu0 %v136
    %309 = vmatprep.subr.mxu0 0.0
    %310 = vmatpush1.msra.mxu0 %v137
    %311 = vmatprep.subr.mxu0 0.0
    %312 = vmatpush1.msra.mxu0 %v138
    %313 = vmatprep.subr.mxu0 0.0
    %314 = vmatpush1.msra.mxu0 0.0
    %315 = vmatprep.subr.mxu0 0.0
    %316 = vmatpush1.msra.mxu0 0.0
    %317 = vmatprep.subr.mxu0 0.0
    %318 = vmatpush1.msra.mxu0 0.0
    %319 = vmatprep.subr.mxu0 0.0
    %320 = vmatpush1.msra.mxu0 0.0
    %321 = vmatprep.subr.mxu0 0.0
    %322 = vmatpush1.msra.mxu0 0.0
    %323 = vmatprep.subr.mxu0 0.0
    %324 = vmatpush1.msra.mxu0 0.0
    %325 = vmatprep.subr.mxu0 0.0
    %326 = vmatpush1.msra.mxu0 0.0
    %327 = vmatprep.subr.mxu0 0.0
    %328 = vmatpush1.msra.mxu0 0.0
    %329 = vmatprep.subr.mxu0 0.0
    %330 = vmatpush1.msra.mxu0 0.0
    %331 = vmatprep.subr.mxu0 0.0
    %332 = vmatpush1.msra.mxu0 0.0
    %333 = vmatprep.subr.mxu0 0.0
    %334 = vmatpush1.msra.mxu0 0.0
    %335 = vmatprep.subr.mxu0 0.0
    %336 = vmatpush1.msra.mxu0 0.0
    %337 = vmatprep.subr.mxu0 0.0
    %338 = vmatpush1.msra.mxu0 0.0
    %339 = vmatprep.subr.mxu0 0.0
    %340 = vmatpush1.msra.mxu0 0.0
    %341 = vmatprep.subr.mxu0 0.0
    %342 = vmatpush1.msra.mxu0 0.0
    %343 = vmatprep.subr.mxu0 0.0
    %344 = vmatpush1.msra.mxu0 0.0
    %345 = vmatprep.subr.mxu0 0.0
    %346 = vmatpush1.msra.mxu0 0.0
    %347 = vmatprep.subr.mxu0 0.0
    %348 = vmatpush1.msra.mxu0 0.0
    %349 = vmatprep.subr.mxu0 0.0
    %350 = vmatpush1.msra.mxu0 0.0
    %351 = vmatprep.subr.mxu0 0.0
    %352 = vmatpush1.msra.mxu0 0.0
    %353 = vmatprep.subr.mxu0 0.0
    %354 = vmatpush1.msra.mxu0 0.0
    %355 = vmatprep.subr.mxu0 0.0
    %356 = vmatpush1.msra.mxu0 0.0
    %357 = vmatprep.subr.mxu0 0.0
    %358 = vmatpush1.msra.mxu0 0.0
    %359 = vmatprep.subr.mxu0 0.0
    %360 = vmatpush1.msra.mxu0 0.0
    %361 = vmatprep.mubr.f32.mxu0 0.0
    %362 = vmatmul.mubr.f32.gmra.mrb[0].mxu0 %v295
    %v363 = vpop.f32.mrb[0].mxu0
    %v364 = vadd.f32 %v291, %v363
    %v365 = vpop.f32.mrb[0].mxu0
    %366 = vdwg.mxu0
    %v367 = vld [vmem:[%s0 + $0x4] sm:$0x3]
    %368 = vmatprep.subr.mxu0 0.0
    %369 = vmatpush1.msra.mxu0 %v35
    %370 = vmatprep.subr.mxu0 0.0
    %371 = vmatpush1.msra.mxu0 %v36
    %372 = vmatprep.subr.mxu0 0.0
    %373 = vmatpush1.msra.mxu0 %v37
    %374 = vmatprep.subr.mxu0 0.0
    %375 = vmatpush1.msra.mxu0 %v38
    %376 = vmatprep.subr.mxu0 0.0
    %377 = vmatpush1.msra.mxu0 %v39
    %378 = vmatprep.subr.mxu0 0.0
    %379 = vmatpush1.msra.mxu0 %v40
    %380 = vmatprep.subr.mxu0 0.0
    %381 = vmatpush1.msra.mxu0 %v41
    %382 = vmatprep.subr.mxu0 0.0
    %383 = vmatpush1.msra.mxu0 %v42
    %384 = vmatprep.subr.mxu0 0.0
    %385 = vmatpush1.msra.mxu0 %v43
    %386 = vmatprep.subr.mxu0 0.0
    %387 = vmatpush1.msra.mxu0 %v44
    %388 = vmatprep.subr.mxu0 0.0
    %389 = vmatpush1.msra.mxu0 %v45
    %390 = vmatprep.subr.mxu0 0.0
    %391 = vmatpush1.msra.mxu0 %v46
    %392 = vmatprep.subr.mxu0 0.0
    %393 = vmatpush1.msra.mxu0 %v47
    %394 = vmatprep.subr.mxu0 0.0
    %395 = vmatpush1.msra.mxu0 %v48
    %396 = vmatprep.subr.mxu0 0.0
    %397 = vmatpush1.msra.mxu0 %v49
    %398 = vmatprep.subr.mxu0 0.0
    %399 = vmatpush1.msra.mxu0 %v50
    %400 = vmatprep.subr.mxu0 0.0
    %401 = vmatpush1.msra.mxu0 0.0
    %402 = vmatprep.subr.mxu0 0.0
    %403 = vmatpush1.msra.mxu0 0.0
    %404 = vmatprep.subr.mxu0 0.0
    %405 = vmatpush1.msra.mxu0 0.0
    %406 = vmatprep.subr.mxu0 0.0
    %407 = vmatpush1.msra.mxu0 0.0
    %408 = vmatprep.subr.mxu0 0.0
    %409 = vmatpush1.msra.mxu0 0.0
    %410 = vmatprep.subr.mxu0 0.0
    %411 = vmatpush1.msra.mxu0 0.0
    %412 = vmatprep.subr.mxu0 0.0
    %413 = vmatpush1.msra.mxu0 0.0
    %414 = vmatprep.subr.mxu0 0.0
    %415 = vmatpush1.msra.mxu0 0.0
    %416 = vmatprep.subr.mxu0 0.0
    %417 = vmatpush1.msra.mxu0 0.0
    %418 = vmatprep.subr.mxu0 0.0
    %419 = vmatpush1.msra.mxu0 0.0
    %420 = vmatprep.subr.mxu0 0.0
    %421 = vmatpush1.msra.mxu0 0.0
    %422 = vmatprep.subr.mxu0 0.0
    %423 = vmatpush1.msra.mxu0 0.0
    %424 = vmatprep.subr.mxu0 0.0
    %425 = vmatpush1.msra.mxu0 0.0
    %426 = vmatprep.subr.mxu0 0.0
    %427 = vmatpush1.msra.mxu0 0.0
    %428 = vmatprep.subr.mxu0 0.0
    %429 = vmatpush1.msra.mxu0 0.0
    %430 = vmatprep.subr.mxu0 0.0
    %431 = vmatpush1.msra.mxu0 0.0
    %432 = vmatprep.mubr.f32.mxu0 0.0
    %433 = vmatmul.mubr.f32.gmra.mrb[0].mxu0 %v367
    %v434 = vpop.f32.mrb[0].mxu0
    %v435 = vadd.f32 %v58, %v434
    %v436 = vpop.f32.mrb[0].mxu0
    %437 = vdwg.mxu0
    %v438 = vmax.f32 %v435, 0.0
    %s439 = scalar_lea.vmem [#allocation2], 128
    %v440 = vld [vmem:[%s439] sm:$0xff]
    %v441 = vld [vmem:[%s439 + $0x8] sm:$0xff]
    %v442 = vld [vmem:[%s439 + $0x10] sm:$0xff]
    %v443 = vld [vmem:[%s439 + $0x18] sm:$0xff]
    %v444 = vld [vmem:[%s439 + $0x20] sm:$0xff]
    %v445 = vld [vmem:[%s439 + $0x28] sm:$0xff]
    %v446 = vld [vmem:[%s439 + $0x30] sm:$0xff]
    %v447 = vld [vmem:[%s439 + $0x38] sm:$0xff]
    %v449 = vsel %vm220, %v438, 0
    %451 = vmatprep.subr.mxu0 0.0
    %452 = vmatpush1.msra.mxu0 %v440
    %453 = vmatprep.subr.mxu0 0.0
    %454 = vmatpush1.msra.mxu0 %v441
    %455 = vmatprep.subr.mxu0 0.0
    %456 = vmatpush1.msra.mxu0 %v442
    %457 = vmatprep.subr.mxu0 0.0
    %458 = vmatpush1.msra.mxu0 %v443
    %459 = vmatprep.subr.mxu0 0.0
    %460 = vmatpush1.msra.mxu0 %v444
    %461 = vmatprep.subr.mxu0 0.0
    %462 = vmatpush1.msra.mxu0 %v445
    %463 = vmatprep.subr.mxu0 0.0
    %464 = vmatpush1.msra.mxu0 %v446
    %465 = vmatprep.subr.mxu0 0.0
    %466 = vmatpush1.msra.mxu0 %v447
    %467 = vmatprep.subr.mxu0 0.0
    %468 = vmatpush1.msra.mxu0 0.0
    %469 = vmatprep.subr.mxu0 0.0
    %470 = vmatpush1.msra.mxu0 0.0
    %471 = vmatprep.subr.mxu0 0.0
    %472 = vmatpush1.msra.mxu0 0.0
    %473 = vmatprep.subr.mxu0 0.0
    %474 = vmatpush1.msra.mxu0 0.0
    %475 = vmatprep.subr.mxu0 0.0
    %476 = vmatpush1.msra.mxu0 0.0
    %477 = vmatprep.subr.mxu0 0.0
    %478 = vmatpush1.msra.mxu0 0.0
    %479 = vmatprep.subr.mxu0 0.0
    %480 = vmatpush1.msra.mxu0 0.0
    %481 = vmatprep.subr.mxu0 0.0
    %482 = vmatpush1.msra.mxu0 0.0
    %483 = vmatprep.subr.mxu0 0.0
    %484 = vmatpush1.msra.mxu0 0.0
    %485 = vmatprep.subr.mxu0 0.0
    %486 = vmatpush1.msra.mxu0 0.0
    %487 = vmatprep.subr.mxu0 0.0
    %488 = vmatpush1.msra.mxu0 0.0
    %489 = vmatprep.subr.mxu0 0.0
    %490 = vmatpush1.msra.mxu0 0.0
    %491 = vmatprep.subr.mxu0 0.0
    %492 = vmatpush1.msra.mxu0 0.0
    %493 = vmatprep.subr.mxu0 0.0
    %494 = vmatpush1.msra.mxu0 0.0
    %495 = vmatprep.subr.mxu0 0.0
    %496 = vmatpush1.msra.mxu0 0.0
    %497 = vmatprep.subr.mxu0 0.0
    %498 = vmatpush1.msra.mxu0 0.0
    %499 = vmatprep.subr.mxu0 0.0
    %500 = vmatpush1.msra.mxu0 0.0
    %501 = vmatprep.subr.mxu0 0.0
    %502 = vmatpush1.msra.mxu0 0.0
    %503 = vmatprep.subr.mxu0 0.0
    %504 = vmatpush1.msra.mxu0 0.0
    %505 = vmatprep.subr.mxu0 0.0
    %506 = vmatpush1.msra.mxu0 0.0
    %507 = vmatprep.subr.mxu0 0.0
    %508 = vmatpush1.msra.mxu0 0.0
    %509 = vmatprep.subr.mxu0 0.0
    %510 = vmatpush1.msra.mxu0 0.0
    %511 = vmatprep.subr.mxu0 0.0
    %512 = vmatpush1.msra.mxu0 0.0
    %513 = vmatprep.subr.mxu0 0.0
    %514 = vmatpush1.msra.mxu0 0.0
    %515 = vmatprep.mubr.f32.mxu0 0.0
    %516 = vmatmul.mubr.f32.gmra.mrb[0].mxu0 %v449
    %v517 = vpop.f32.mrb[0].mxu0
    %v518 = vadd.f32 0.0, %v517
    %v519 = vpop.f32.mrb[0].mxu0
    %520 = vdwg.mxu0
    %v521 = vadd.f32 %v364, %v518
    %v522 = vld [vmem:[%s0 + $0x6] sm:$0x3]
    %523 = vmatprep.subr.mxu0 0.0
    %524 = vmatpush1.msra.mxu0 %v35
    %525 = vmatprep.subr.mxu0 0.0
    %526 = vmatpush1.msra.mxu0 %v36
    %527 = vmatprep.subr.mxu0 0.0
    %528 = vmatpush1.msra.mxu0 %v37
    %529 = vmatprep.subr.mxu0 0.0
    %530 = vmatpush1.msra.mxu0 %v38
    %531 = vmatprep.subr.mxu0 0.0
    %532 = vmatpush1.msra.mxu0 %v39
    %533 = vmatprep.subr.mxu0 0.0
    %534 = vmatpush1.msra.mxu0 %v40
    %535 = vmatprep.subr.mxu0 0.0
    %536 = vmatpush1.msra.mxu0 %v41
    %537 = vmatprep.subr.mxu0 0.0
    %538 = vmatpush1.msra.mxu0 %v42
    %539 = vmatprep.subr.mxu0 0.0
    %540 = vmatpush1.msra.mxu0 %v43
    %541 = vmatprep.subr.mxu0 0.0
    %542 = vmatpush1.msra.mxu0 %v44
    %543 = vmatprep.subr.mxu0 0.0
    %544 = vmatpush1.msra.mxu0 %v45
    %545 = vmatprep.subr.mxu0 0.0
    %546 = vmatpush1.msra.mxu0 %v46
    %547 = vmatprep.subr.mxu0 0.0
    %548 = vmatpush1.msra.mxu0 %v47
    %549 = vmatprep.subr.mxu0 0.0
    %550 = vmatpush1.msra.mxu0 %v48
    %551 = vmatprep.subr.mxu0 0.0
    %552 = vmatpush1.msra.mxu0 %v49
    %553 = vmatprep.subr.mxu0 0.0
    %554 = vmatpush1.msra.mxu0 %v50
    %555 = vmatprep.subr.mxu0 0.0
    %556 = vmatpush1.msra.mxu0 0.0
    %557 = vmatprep.subr.mxu0 0.0
    %558 = vmatpush1.msra.mxu0 0.0
    %559 = vmatprep.subr.mxu0 0.0
    %560 = vmatpush1.msra.mxu0 0.0
    %561 = vmatprep.subr.mxu0 0.0
    %562 = vmatpush1.msra.mxu0 0.0
    %563 = vmatprep.subr.mxu0 0.0
    %564 = vmatpush1.msra.mxu0 0.0
    %565 = vmatprep.subr.mxu0 0.0
    %566 = vmatpush1.msra.mxu0 0.0
    %567 = vmatprep.subr.mxu0 0.0
    %568 = vmatpush1.msra.mxu0 0.0
    %569 = vmatprep.subr.mxu0 0.0
    %570 = vmatpush1.msra.mxu0 0.0
    %571 = vmatprep.subr.mxu0 0.0
    %572 = vmatpush1.msra.mxu0 0.0
    %573 = vmatprep.subr.mxu0 0.0
    %574 = vmatpush1.msra.mxu0 0.0
    %575 = vmatprep.subr.mxu0 0.0
    %576 = vmatpush1.msra.mxu0 0.0
    %577 = vmatprep.subr.mxu0 0.0
    %578 = vmatpush1.msra.mxu0 0.0
    %579 = vmatprep.subr.mxu0 0.0
    %580 = vmatpush1.msra.mxu0 0.0
    %581 = vmatprep.subr.mxu0 0.0
    %582 = vmatpush1.msra.mxu0 0.0
    %583 = vmatprep.subr.mxu0 0.0
    %584 = vmatpush1.msra.mxu0 0.0
    %585 = vmatprep.subr.mxu0 0.0
    %586 = vmatpush1.msra.mxu0 0.0
    %587 = vmatprep.mubr.f32.mxu0 0.0
    %588 = vmatmul.mubr.f32.gmra.mrb[0].mxu0 %v522
    %v589 = vpop.f32.mrb[0].mxu0
    %v590 = vadd.f32 %v58, %v589
    %v591 = vpop.f32.mrb[0].mxu0
    %592 = vdwg.mxu0
    %v593 = vmax.f32 %v590, 0.0
    %s594 = scalar_lea.vmem [#allocation2], 192
    %v595 = vld [vmem:[%s594] sm:$0xff]
    %v596 = vld [vmem:[%s594 + $0x8] sm:$0xff]
    %v597 = vld [vmem:[%s594 + $0x10] sm:$0xff]
    %v598 = vld [vmem:[%s594 + $0x18] sm:$0xff]
    %v599 = vld [vmem:[%s594 + $0x20] sm:$0xff]
    %v600 = vld [vmem:[%s594 + $0x28] sm:$0xff]
    %v601 = vld [vmem:[%s594 + $0x30] sm:$0xff]
    %v602 = vld [vmem:[%s594 + $0x38] sm:$0xff]
    %v604 = vsel %vm220, %v593, 0
    %606 = vmatprep.subr.mxu0 0.0
    %607 = vmatpush1.msra.mxu0 %v595
    %608 = vmatprep.subr.mxu0 0.0
    %609 = vmatpush1.msra.mxu0 %v596
    %610 = vmatprep.subr.mxu0 0.0
    %611 = vmatpush1.msra.mxu0 %v597
    %612 = vmatprep.subr.mxu0 0.0
    %613 = vmatpush1.msra.mxu0 %v598
    %614 = vmatprep.subr.mxu0 0.0
    %615 = vmatpush1.msra.mxu0 %v599
    %616 = vmatprep.subr.mxu0 0.0
    %617 = vmatpush1.msra.mxu0 %v600
    %618 = vmatprep.subr.mxu0 0.0
    %619 = vmatpush1.msra.mxu0 %v601
    %620 = vmatprep.subr.mxu0 0.0
    %621 = vmatpush1.msra.mxu0 %v602
    %622 = vmatprep.subr.mxu0 0.0
    %623 = vmatpush1.msra.mxu0 0.0
    %624 = vmatprep.subr.mxu0 0.0
    %625 = vmatpush1.msra.mxu0 0.0
    %626 = vmatprep.subr.mxu0 0.0
    %627 = vmatpush1.msra.mxu0 0.0
    %628 = vmatprep.subr.mxu0 0.0
    %629 = vmatpush1.msra.mxu0 0.0
    %630 = vmatprep.subr.mxu0 0.0
    %631 = vmatpush1.msra.mxu0 0.0
    %632 = vmatprep.subr.mxu0 0.0
    %633 = vmatpush1.msra.mxu0 0.0
    %634 = vmatprep.subr.mxu0 0.0
    %635 = vmatpush1.msra.mxu0 0.0
    %636 = vmatprep.subr.mxu0 0.0
    %637 = vmatpush1.msra.mxu0 0.0
    %638 = vmatprep.subr.mxu0 0.0
    %639 = vmatpush1.msra.mxu0 0.0
    %640 = vmatprep.subr.mxu0 0.0
    %641 = vmatpush1.msra.mxu0 0.0
    %642 = vmatprep.subr.mxu0 0.0
    %643 = vmatpush1.msra.mxu0 0.0
    %644 = vmatprep.subr.mxu0 0.0
    %645 = vmatpush1.msra.mxu0 0.0
    %646 = vmatprep.subr.mxu0 0.0
    %647 = vmatpush1.msra.mxu0 0.0
    %648 = vmatprep.subr.mxu0 0.0
    %649 = vmatpush1.msra.mxu0 0.0
    %650 = vmatprep.subr.mxu0 0.0
    %651 = vmatpush1.msra.mxu0 0.0
    %652 = vmatprep.subr.mxu0 0.0
    %653 = vmatpush1.msra.mxu0 0.0
    %654 = vmatprep.subr.mxu0 0.0
    %655 = vmatpush1.msra.mxu0 0.0
    %656 = vmatprep.subr.mxu0 0.0
    %657 = vmatpush1.msra.mxu0 0.0
    %658 = vmatprep.subr.mxu0 0.0
    %659 = vmatpush1.msra.mxu0 0.0
    %660 = vmatprep.subr.mxu0 0.0
    %661 = vmatpush1.msra.mxu0 0.0
    %662 = vmatprep.subr.mxu0 0.0
    %663 = vmatpush1.msra.mxu0 0.0
    %664 = vmatprep.subr.mxu0 0.0
    %665 = vmatpush1.msra.mxu0 0.0
    %666 = vmatprep.subr.mxu0 0.0
    %667 = vmatpush1.msra.mxu0 0.0
    %668 = vmatprep.subr.mxu0 0.0
    %669 = vmatpush1.msra.mxu0 0.0
    %670 = vmatprep.mubr.f32.mxu0 0.0
    %671 = vmatmul.mubr.f32.gmra.mrb[0].mxu0 %v604
    %v672 = vpop.f32.mrb[0].mxu0
    %v673 = vadd.f32 0.0, %v672
    %v674 = vpop.f32.mrb[0].mxu0
    %675 = vdwg.mxu0
    %v676 = vadd.f32 %v521, %v673
    %v677 = vld [vmem:[%s0 + $0x8] sm:$0x3]
    %678 = vmatprep.subr.mxu0 0.0
    %679 = vmatpush1.msra.mxu0 %v35
    %680 = vmatprep.subr.mxu0 0.0
    %681 = vmatpush1.msra.mxu0 %v36
    %682 = vmatprep.subr.mxu0 0.0
    %683 = vmatpush1.msra.mxu0 %v37
    %684 = vmatprep.subr.mxu0 0.0
    %685 = vmatpush1.msra.mxu0 %v38
    %686 = vmatprep.subr.mxu0 0.0
    %687 = vmatpush1.msra.mxu0 %v39
    %688 = vmatprep.subr.mxu0 0.0
    %689 = vmatpush1.msra.mxu0 %v40
    %690 = vmatprep.subr.mxu0 0.0
    %691 = vmatpush1.msra.mxu0 %v41
    %692 = vmatprep.subr.mxu0 0.0
    %693 = vmatpush1.msra.mxu0 %v42
    %694 = vmatprep.subr.mxu0 0.0
    %695 = vmatpush1.msra.mxu0 %v43
    %696 = vmatprep.subr.mxu0 0.0
    %697 = vmatpush1.msra.mxu0 %v44
    %698 = vmatprep.subr.mxu0 0.0
    %699 = vmatpush1.msra.mxu0 %v45
    %700 = vmatprep.subr.mxu0 0.0
    %701 = vmatpush1.msra.mxu0 %v46
    %702 = vmatprep.subr.mxu0 0.0
    %703 = vmatpush1.msra.mxu0 %v47
    %704 = vmatprep.subr.mxu0 0.0
    %705 = vmatpush1.msra.mxu0 %v48
    %706 = vmatprep.subr.mxu0 0.0
    %707 = vmatpush1.msra.mxu0 %v49
    %708 = vmatprep.subr.mxu0 0.0
    %709 = vmatpush1.msra.mxu0 %v50
    %710 = vmatprep.subr.mxu0 0.0
    %711 = vmatpush1.msra.mxu0 0.0
    %712 = vmatprep.subr.mxu0 0.0
    %713 = vmatpush1.msra.mxu0 0.0
    %714 = vmatprep.subr.mxu0 0.0
    %715 = vmatpush1.msra.mxu0 0.0
    %716 = vmatprep.subr.mxu0 0.0
    %717 = vmatpush1.msra.mxu0 0.0
    %718 = vmatprep.subr.mxu0 0.0
    %719 = vmatpush1.msra.mxu0 0.0
    %720 = vmatprep.subr.mxu0 0.0
    %721 = vmatpush1.msra.mxu0 0.0
    %722 = vmatprep.subr.mxu0 0.0
    %723 = vmatpush1.msra.mxu0 0.0
    %724 = vmatprep.subr.mxu0 0.0
    %725 = vmatpush1.msra.mxu0 0.0
    %726 = vmatprep.subr.mxu0 0.0
    %727 = vmatpush1.msra.mxu0 0.0
    %728 = vmatprep.subr.mxu0 0.0
    %729 = vmatpush1.msra.mxu0 0.0
    %730 = vmatprep.subr.mxu0 0.0
    %731 = vmatpush1.msra.mxu0 0.0
    %732 = vmatprep.subr.mxu0 0.0
    %733 = vmatpush1.msra.mxu0 0.0
    %734 = vmatprep.subr.mxu0 0.0
    %735 = vmatpush1.msra.mxu0 0.0
    %736 = vmatprep.subr.mxu0 0.0
    %737 = vmatpush1.msra.mxu0 0.0
    %738 = vmatprep.subr.mxu0 0.0
    %739 = vmatpush1.msra.mxu0 0.0
    %740 = vmatprep.subr.mxu0 0.0
    %741 = vmatpush1.msra.mxu0 0.0
    %742 = vmatprep.mubr.f32.mxu0 0.0
    %743 = vmatmul.mubr.f32.gmra.mrb[0].mxu0 %v677
    %v744 = vpop.f32.mrb[0].mxu0
    %v745 = vadd.f32 %v58, %v744
    %v746 = vpop.f32.mrb[0].mxu0
    %747 = vdwg.mxu0
    %v748 = vmax.f32 %v745, 0.0
    %s749 = scalar_lea.vmem [#allocation2], 256
    %v750 = vld [vmem:[%s749] sm:$0xff]
    %v751 = vld [vmem:[%s749 + $0x8] sm:$0xff]
    %v752 = vld [vmem:[%s749 + $0x10] sm:$0xff]
    %v753 = vld [vmem:[%s749 + $0x18] sm:$0xff]
    %v754 = vld [vmem:[%s749 + $0x20] sm:$0xff]
    %v755 = vld [vmem:[%s749 + $0x28] sm:$0xff]
    %v756 = vld [vmem:[%s749 + $0x30] sm:$0xff]
    %v757 = vld [vmem:[%s749 + $0x38] sm:$0xff]
    %v759 = vsel %vm220, %v748, 0
    %761 = vmatprep.subr.mxu0 0.0
    %762 = vmatpush1.msra.mxu0 %v750
    %763 = vmatprep.subr.mxu0 0.0
    %764 = vmatpush1.msra.mxu0 %v751
    %765 = vmatprep.subr.mxu0 0.0
    %766 = vmatpush1.msra.mxu0 %v752
    %767 = vmatprep.subr.mxu0 0.0
    %768 = vmatpush1.msra.mxu0 %v753
    %769 = vmatprep.subr.mxu0 0.0
    %770 = vmatpush1.msra.mxu0 %v754
    %771 = vmatprep.subr.mxu0 0.0
    %772 = vmatpush1.msra.mxu0 %v755
    %773 = vmatprep.subr.mxu0 0.0
    %774 = vmatpush1.msra.mxu0 %v756
    %775 = vmatprep.subr.mxu0 0.0
    %776 = vmatpush1.msra.mxu0 %v757
    %777 = vmatprep.subr.mxu0 0.0
    %778 = vmatpush1.msra.mxu0 0.0
    %779 = vmatprep.subr.mxu0 0.0
    %780 = vmatpush1.msra.mxu0 0.0
    %781 = vmatprep.subr.mxu0 0.0
    %782 = vmatpush1.msra.mxu0 0.0
    %783 = vmatprep.subr.mxu0 0.0
    %784 = vmatpush1.msra.mxu0 0.0
    %785 = vmatprep.subr.mxu0 0.0
    %786 = vmatpush1.msra.mxu0 0.0
    %787 = vmatprep.subr.mxu0 0.0
    %788 = vmatpush1.msra.mxu0 0.0
    %789 = vmatprep.subr.mxu0 0.0
    %790 = vmatpush1.msra.mxu0 0.0
    %791 = vmatprep.subr.mxu0 0.0
    %792 = vmatpush1.msra.mxu0 0.0
    %793 = vmatprep.subr.mxu0 0.0
    %794 = vmatpush1.msra.mxu0 0.0
    %795 = vmatprep.subr.mxu0 0.0
    %796 = vmatpush1.msra.mxu0 0.0
    %797 = vmatprep.subr.mxu0 0.0
    %798 = vmatpush1.msra.mxu0 0.0
    %799 = vmatprep.subr.mxu0 0.0
    %800 = vmatpush1.msra.mxu0 0.0
    %801 = vmatprep.subr.mxu0 0.0
    %802 = vmatpush1.msra.mxu0 0.0
    %803 = vmatprep.subr.mxu0 0.0
    %804 = vmatpush1.msra.mxu0 0.0
    %805 = vmatprep.subr.mxu0 0.0
    %806 = vmatpush1.msra.mxu0 0.0
    %807 = vmatprep.subr.mxu0 0.0
    %808 = vmatpush1.msra.mxu0 0.0
    %809 = vmatprep.subr.mxu0 0.0
    %810 = vmatpush1.msra.mxu0 0.0
    %811 = vmatprep.subr.mxu0 0.0
    %812 = vmatpush1.msra.mxu0 0.0
    %813 = vmatprep.subr.mxu0 0.0
    %814 = vmatpush1.msra.mxu0 0.0
    %815 = vmatprep.subr.mxu0 0.0
    %816 = vmatpush1.msra.mxu0 0.0
    %817 = vmatprep.subr.mxu0 0.0
    %818 = vmatpush1.msra.mxu0 0.0
    %819 = vmatprep.subr.mxu0 0.0
    %820 = vmatpush1.msra.mxu0 0.0
    %821 = vmatprep.subr.mxu0 0.0
    %822 = vmatpush1.msra.mxu0 0.0
    %823 = vmatprep.subr.mxu0 0.0
    %824 = vmatpush1.msra.mxu0 0.0
    %825 = vmatprep.mubr.f32.mxu0 0.0
    %826 = vmatmul.mubr.f32.gmra.mrb[0].mxu0 %v759
    %v827 = vpop.f32.mrb[0].mxu0
    %v828 = vadd.f32 0.0, %v827
    %v829 = vpop.f32.mrb[0].mxu0
    %830 = vdwg.mxu0
    %v831 = vadd.f32 %v676, %v828
    %v832 = vld [vmem:[%s0 + $0xa] sm:$0x3]
    %833 = vmatprep.subr.mxu0 0.0
    %834 = vmatpush1.msra.mxu0 %v35
    %835 = vmatprep.subr.mxu0 0.0
    %836 = vmatpush1.msra.mxu0 %v36
    %837 = vmatprep.subr.mxu0 0.0
    %838 = vmatpush1.msra.mxu0 %v37
    %839 = vmatprep.subr.mxu0 0.0
    %840 = vmatpush1.msra.mxu0 %v38
    %841 = vmatprep.subr.mxu0 0.0
    %842 = vmatpush1.msra.mxu0 %v39
    %843 = vmatprep.subr.mxu0 0.0
    %844 = vmatpush1.msra.mxu0 %v40
    %845 = vmatprep.subr.mxu0 0.0
    %846 = vmatpush1.msra.mxu0 %v41
    %847 = vmatprep.subr.mxu0 0.0
    %848 = vmatpush1.msra.mxu0 %v42
    %849 = vmatprep.subr.mxu0 0.0
    %850 = vmatpush1.msra.mxu0 %v43
    %851 = vmatprep.subr.mxu0 0.0
    %852 = vmatpush1.msra.mxu0 %v44
    %853 = vmatprep.subr.mxu0 0.0
    %854 = vmatpush1.msra.mxu0 %v45
    %855 = vmatprep.subr.mxu0 0.0
    %856 = vmatpush1.msra.mxu0 %v46
    %857 = vmatprep.subr.mxu0 0.0
    %858 = vmatpush1.msra.mxu0 %v47
    %859 = vmatprep.subr.mxu0 0.0
    %860 = vmatpush1.msra.mxu0 %v48
    %861 = vmatprep.subr.mxu0 0.0
    %862 = vmatpush1.msra.mxu0 %v49
    %863 = vmatprep.subr.mxu0 0.0
    %864 = vmatpush1.msra.mxu0 %v50
    %865 = vmatprep.subr.mxu0 0.0
    %866 = vmatpush1.msra.mxu0 0.0
    %867 = vmatprep.subr.mxu0 0.0
    %868 = vmatpush1.msra.mxu0 0.0
    %869 = vmatprep.subr.mxu0 0.0
    %870 = vmatpush1.msra.mxu0 0.0
    %871 = vmatprep.subr.mxu0 0.0
    %872 = vmatpush1.msra.mxu0 0.0
    %873 = vmatprep.subr.mxu0 0.0
    %874 = vmatpush1.msra.mxu0 0.0
    %875 = vmatprep.subr.mxu0 0.0
    %876 = vmatpush1.msra.mxu0 0.0
    %877 = vmatprep.subr.mxu0 0.0
    %878 = vmatpush1.msra.mxu0 0.0
    %879 = vmatprep.subr.mxu0 0.0
    %880 = vmatpush1.msra.mxu0 0.0
    %881 = vmatprep.subr.mxu0 0.0
    %882 = vmatpush1.msra.mxu0 0.0
    %883 = vmatprep.subr.mxu0 0.0
    %884 = vmatpush1.msra.mxu0 0.0
    %885 = vmatprep.subr.mxu0 0.0
    %886 = vmatpush1.msra.mxu0 0.0
    %887 = vmatprep.subr.mxu0 0.0
    %888 = vmatpush1.msra.mxu0 0.0
    %889 = vmatprep.subr.mxu0 0.0
    %890 = vmatpush1.msra.mxu0 0.0
    %891 = vmatprep.subr.mxu0 0.0
    %892 = vmatpush1.msra.mxu0 0.0
    %893 = vmatprep.subr.mxu0 0.0
    %894 = vmatpush1.msra.mxu0 0.0
    %895 = vmatprep.subr.mxu0 0.0
    %896 = vmatpush1.msra.mxu0 0.0
    %897 = vmatprep.mubr.f32.mxu0 0.0
    %898 = vmatmul.mubr.f32.gmra.mrb[0].mxu0 %v832
    %v899 = vpop.f32.mrb[0].mxu0
    %v900 = vadd.f32 %v58, %v899
    %v901 = vpop.f32.mrb[0].mxu0
    %902 = vdwg.mxu0
    %v903 = vmax.f32 %v900, 0.0
    %s904 = scalar_lea.vmem [#allocation2], 320
    %v905 = vld [vmem:[%s904] sm:$0xff]
    %v906 = vld [vmem:[%s904 + $0x8] sm:$0xff]
    %v907 = vld [vmem:[%s904 + $0x10] sm:$0xff]
    %v908 = vld [vmem:[%s904 + $0x18] sm:$0xff]
    %v909 = vld [vmem:[%s904 + $0x20] sm:$0xff]
    %v910 = vld [vmem:[%s904 + $0x28] sm:$0xff]
    %v911 = vld [vmem:[%s904 + $0x30] sm:$0xff]
    %v912 = vld [vmem:[%s904 + $0x38] sm:$0xff]
    %v914 = vsel %vm220, %v903, 0
    %916 = vmatprep.subr.mxu0 0.0
    %917 = vmatpush1.msra.mxu0 %v905
    %918 = vmatprep.subr.mxu0 0.0
    %919 = vmatpush1.msra.mxu0 %v906
    %920 = vmatprep.subr.mxu0 0.0
    %921 = vmatpush1.msra.mxu0 %v907
    %922 = vmatprep.subr.mxu0 0.0
    %923 = vmatpush1.msra.mxu0 %v908
    %924 = vmatprep.subr.mxu0 0.0
    %925 = vmatpush1.msra.mxu0 %v909
    %926 = vmatprep.subr.mxu0 0.0
    %927 = vmatpush1.msra.mxu0 %v910
    %928 = vmatprep.subr.mxu0 0.0
    %929 = vmatpush1.msra.mxu0 %v911
    %930 = vmatprep.subr.mxu0 0.0
    %931 = vmatpush1.msra.mxu0 %v912
    %932 = vmatprep.subr.mxu0 0.0
    %933 = vmatpush1.msra.mxu0 0.0
    %934 = vmatprep.subr.mxu0 0.0
    %935 = vmatpush1.msra.mxu0 0.0
    %936 = vmatprep.subr.mxu0 0.0
    %937 = vmatpush1.msra.mxu0 0.0
    %938 = vmatprep.subr.mxu0 0.0
    %939 = vmatpush1.msra.mxu0 0.0
    %940 = vmatprep.subr.mxu0 0.0
    %941 = vmatpush1.msra.mxu0 0.0
    %942 = vmatprep.subr.mxu0 0.0
    %943 = vmatpush1.msra.mxu0 0.0
    %944 = vmatprep.subr.mxu0 0.0
    %945 = vmatpush1.msra.mxu0 0.0
    %946 = vmatprep.subr.mxu0 0.0
    %947 = vmatpush1.msra.mxu0 0.0
    %948 = vmatprep.subr.mxu0 0.0
    %949 = vmatpush1.msra.mxu0 0.0
    %950 = vmatprep.subr.mxu0 0.0
    %951 = vmatpush1.msra.mxu0 0.0
    %952 = vmatprep.subr.mxu0 0.0
    %953 = vmatpush1.msra.mxu0 0.0
    %954 = vmatprep.subr.mxu0 0.0
    %955 = vmatpush1.msra.mxu0 0.0
    %956 = vmatprep.subr.mxu0 0.0
    %957 = vmatpush1.msra.mxu0 0.0
    %958 = vmatprep.subr.mxu0 0.0
    %959 = vmatpush1.msra.mxu0 0.0
    %960 = vmatprep.subr.mxu0 0.0
    %961 = vmatpush1.msra.mxu0 0.0
    %962 = vmatprep.subr.mxu0 0.0
    %963 = vmatpush1.msra.mxu0 0.0
    %964 = vmatprep.subr.mxu0 0.0
    %965 = vmatpush1.msra.mxu0 0.0
    %966 = vmatprep.subr.mxu0 0.0
    %967 = vmatpush1.msra.mxu0 0.0
    %968 = vmatprep.subr.mxu0 0.0
    %969 = vmatpush1.msra.mxu0 0.0
    %970 = vmatprep.subr.mxu0 0.0
    %971 = vmatpush1.msra.mxu0 0.0
    %972 = vmatprep.subr.mxu0 0.0
    %973 = vmatpush1.msra.mxu0 0.0
    %974 = vmatprep.subr.mxu0 0.0
    %975 = vmatpush1.msra.mxu0 0.0
    %976 = vmatprep.subr.mxu0 0.0
    %977 = vmatpush1.msra.mxu0 0.0
    %978 = vmatprep.subr.mxu0 0.0
    %979 = vmatpush1.msra.mxu0 0.0
    %980 = vmatprep.mubr.f32.mxu0 0.0
    %981 = vmatmul.mubr.f32.gmra.mrb[0].mxu0 %v914
    %v982 = vpop.f32.mrb[0].mxu0
    %v983 = vadd.f32 0.0, %v982
    %v984 = vpop.f32.mrb[0].mxu0
    %985 = vdwg.mxu0
    %v986 = vadd.f32 %v831, %v983
    %v987 = vld [vmem:[%s0 + $0xc] sm:$0x3]
    %988 = vmatprep.subr.mxu0 0.0
    %989 = vmatpush1.msra.mxu0 %v35
    %990 = vmatprep.subr.mxu0 0.0
    %991 = vmatpush1.msra.mxu0 %v36
    %992 = vmatprep.subr.mxu0 0.0
    %993 = vmatpush1.msra.mxu0 %v37
    %994 = vmatprep.subr.mxu0 0.0
    %995 = vmatpush1.msra.mxu0 %v38
    %996 = vmatprep.subr.mxu0 0.0
    %997 = vmatpush1.msra.mxu0 %v39
    %998 = vmatprep.subr.mxu0 0.0
    %999 = vmatpush1.msra.mxu0 %v40
    %1000 = vmatprep.subr.mxu0 0.0
    %1001 = vmatpush1.msra.mxu0 %v41
    %1002 = vmatprep.subr.mxu0 0.0
    %1003 = vmatpush1.msra.mxu0 %v42
    %1004 = vmatprep.subr.mxu0 0.0
    %1005 = vmatpush1.msra.mxu0 %v43
    %1006 = vmatprep.subr.mxu0 0.0
    %1007 = vmatpush1.msra.mxu0 %v44
    %1008 = vmatprep.subr.mxu0 0.0
    %1009 = vmatpush1.msra.mxu0 %v45
    %1010 = vmatprep.subr.mxu0 0.0
    %1011 = vmatpush1.msra.mxu0 %v46
    %1012 = vmatprep.subr.mxu0 0.0
    %1013 = vmatpush1.msra.mxu0 %v47
    %1014 = vmatprep.subr.mxu0 0.0
    %1015 = vmatpush1.msra.mxu0 %v48
    %1016 = vmatprep.subr.mxu0 0.0
    %1017 = vmatpush1.msra.mxu0 %v49
    %1018 = vmatprep.subr.mxu0 0.0
    %1019 = vmatpush1.msra.mxu0 %v50
    %1020 = vmatprep.subr.mxu0 0.0
    %1021 = vmatpush1.msra.mxu0 0.0
    %1022 = vmatprep.subr.mxu0 0.0
    %1023 = vmatpush1.msra.mxu0 0.0
    %1024 = vmatprep.subr.mxu0 0.0
    %1025 = vmatpush1.msra.mxu0 0.0
    %1026 = vmatprep.subr.mxu0 0.0
    %1027 = vmatpush1.msra.mxu0 0.0
    %1028 = vmatprep.subr.mxu0 0.0
    %1029 = vmatpush1.msra.mxu0 0.0
    %1030 = vmatprep.subr.mxu0 0.0
    %1031 = vmatpush1.msra.mxu0 0.0
    %1032 = vmatprep.subr.mxu0 0.0
    %1033 = vmatpush1.msra.mxu0 0.0
    %1034 = vmatprep.subr.mxu0 0.0
    %1035 = vmatpush1.msra.mxu0 0.0
    %1036 = vmatprep.subr.mxu0 0.0
    %1037 = vmatpush1.msra.mxu0 0.0
    %1038 = vmatprep.subr.mxu0 0.0
    %1039 = vmatpush1.msra.mxu0 0.0
    %1040 = vmatprep.subr.mxu0 0.0
    %1041 = vmatpush1.msra.mxu0 0.0
    %1042 = vmatprep.subr.mxu0 0.0
    %1043 = vmatpush1.msra.mxu0 0.0
    %1044 = vmatprep.subr.mxu0 0.0
    %1045 = vmatpush1.msra.mxu0 0.0
    %1046 = vmatprep.subr.mxu0 0.0
    %1047 = vmatpush1.msra.mxu0 0.0
    %1048 = vmatprep.subr.mxu0 0.0
    %1049 = vmatpush1.msra.mxu0 0.0
    %1050 = vmatprep.subr.mxu0 0.0
    %1051 = vmatpush1.msra.mxu0 0.0
    %1052 = vmatprep.mubr.f32.mxu0 0.0
    %1053 = vmatmul.mubr.f32.gmra.mrb[0].mxu0 %v987
    %v1054 = vpop.f32.mrb[0].mxu0
    %v1055 = vadd.f32 %v58, %v1054
    %v1056 = vpop.f32.mrb[0].mxu0
    %1057 = vdwg.mxu0
    %v1058 = vmax.f32 %v1055, 0.0
    %s1059 = scalar_lea.vmem [#allocation2], 384
    %v1060 = vld [vmem:[%s1059] sm:$0xff]
    %v1061 = vld [vmem:[%s1059 + $0x8] sm:$0xff]
    %v1062 = vld [vmem:[%s1059 + $0x10] sm:$0xff]
    %v1063 = vld [vmem:[%s1059 + $0x18] sm:$0xff]
    %v1064 = vld [vmem:[%s1059 + $0x20] sm:$0xff]
    %v1065 = vld [vmem:[%s1059 + $0x28] sm:$0xff]
    %v1066 = vld [vmem:[%s1059 + $0x30] sm:$0xff]
    %v1067 = vld [vmem:[%s1059 + $0x38] sm:$0xff]
    %v1069 = vsel %vm220, %v1058, 0
    %1071 = vmatprep.subr.mxu0 0.0
    %1072 = vmatpush1.msra.mxu0 %v1060
    %1073 = vmatprep.subr.mxu0 0.0
    %1074 = vmatpush1.msra.mxu0 %v1061
    %1075 = vmatprep.subr.mxu0 0.0
    %1076 = vmatpush1.msra.mxu0 %v1062
    %1077 = vmatprep.subr.mxu0 0.0
    %1078 = vmatpush1.msra.mxu0 %v1063
    %1079 = vmatprep.subr.mxu0 0.0
    %1080 = vmatpush1.msra.mxu0 %v1064
    %1081 = vmatprep.subr.mxu0 0.0
    %1082 = vmatpush1.msra.mxu0 %v1065
    %1083 = vmatprep.subr.mxu0 0.0
    %1084 = vmatpush1.msra.mxu0 %v1066
    %1085 = vmatprep.subr.mxu0 0.0
    %1086 = vmatpush1.msra.mxu0 %v1067
    %1087 = vmatprep.subr.mxu0 0.0
    %1088 = vmatpush1.msra.mxu0 0.0
    %1089 = vmatprep.subr.mxu0 0.0
    %1090 = vmatpush1.msra.mxu0 0.0
    %1091 = vmatprep.subr.mxu0 0.0
    %1092 = vmatpush1.msra.mxu0 0.0
    %1093 = vmatprep.subr.mxu0 0.0
    %1094 = vmatpush1.msra.mxu0 0.0
    %1095 = vmatprep.subr.mxu0 0.0
    %1096 = vmatpush1.msra.mxu0 0.0
    %1097 = vmatprep.subr.mxu0 0.0
    %1098 = vmatpush1.msra.mxu0 0.0
    %1099 = vmatprep.subr.mxu0 0.0
    %1100 = vmatpush1.msra.mxu0 0.0
    %1101 = vmatprep.subr.mxu0 0.0
    %1102 = vmatpush1.msra.mxu0 0.0
    %1103 = vmatprep.subr.mxu0 0.0
    %1104 = vmatpush1.msra.mxu0 0.0
    %1105 = vmatprep.subr.mxu0 0.0
    %1106 = vmatpush1.msra.mxu0 0.0
    %1107 = vmatprep.subr.mxu0 0.0
    %1108 = vmatpush1.msra.mxu0 0.0
    %1109 = vmatprep.subr.mxu0 0.0
    %1110 = vmatpush1.msra.mxu0 0.0
    %1111 = vmatprep.subr.mxu0 0.0
    %1112 = vmatpush1.msra.mxu0 0.0
    %1113 = vmatprep.subr.mxu0 0.0
    %1114 = vmatpush1.msra.mxu0 0.0
    %1115 = vmatprep.subr.mxu0 0.0
    %1116 = vmatpush1.msra.mxu0 0.0
    %1117 = vmatprep.subr.mxu0 0.0
    %1118 = vmatpush1.msra.mxu0 0.0
    %1119 = vmatprep.subr.mxu0 0.0
    %1120 = vmatpush1.msra.mxu0 0.0
    %1121 = vmatprep.subr.mxu0 0.0
    %1122 = vmatpush1.msra.mxu0 0.0
    %1123 = vmatprep.subr.mxu0 0.0
    %1124 = vmatpush1.msra.mxu0 0.0
    %1125 = vmatprep.subr.mxu0 0.0
    %1126 = vmatpush1.msra.mxu0 0.0
    %1127 = vmatprep.subr.mxu0 0.0
    %1128 = vmatpush1.msra.mxu0 0.0
    %1129 = vmatprep.subr.mxu0 0.0
    %1130 = vmatpush1.msra.mxu0 0.0
    %1131 = vmatprep.subr.mxu0 0.0
    %1132 = vmatpush1.msra.mxu0 0.0
    %1133 = vmatprep.subr.mxu0 0.0
    %1134 = vmatpush1.msra.mxu0 0.0
    %1135 = vmatprep.mubr.f32.mxu0 0.0
    %1136 = vmatmul.mubr.f32.gmra.mrb[0].mxu0 %v1069
    %v1137 = vpop.f32.mrb[0].mxu0
    %v1138 = vadd.f32 0.0, %v1137
    %v1139 = vpop.f32.mrb[0].mxu0
    %1140 = vdwg.mxu0
    %v1141 = vadd.f32 %v986, %v1138
    %v1142 = vld [vmem:[%s0 + $0xe] sm:$0x3]
    %1143 = vmatprep.subr.mxu0 0.0
    %1144 = vmatpush1.msra.mxu0 %v35
    %1145 = vmatprep.subr.mxu0 0.0
    %1146 = vmatpush1.msra.mxu0 %v36
    %1147 = vmatprep.subr.mxu0 0.0
    %1148 = vmatpush1.msra.mxu0 %v37
    %1149 = vmatprep.subr.mxu0 0.0
    %1150 = vmatpush1.msra.mxu0 %v38
    %1151 = vmatprep.subr.mxu0 0.0
    %1152 = vmatpush1.msra.mxu0 %v39
    %1153 = vmatprep.subr.mxu0 0.0
    %1154 = vmatpush1.msra.mxu0 %v40
    %1155 = vmatprep.subr.mxu0 0.0
    %1156 = vmatpush1.msra.mxu0 %v41
    %1157 = vmatprep.subr.mxu0 0.0
    %1158 = vmatpush1.msra.mxu0 %v42
    %1159 = vmatprep.subr.mxu0 0.0
    %1160 = vmatpush1.msra.mxu0 %v43
    %1161 = vmatprep.subr.mxu0 0.0
    %1162 = vmatpush1.msra.mxu0 %v44
    %1163 = vmatprep.subr.mxu0 0.0
    %1164 = vmatpush1.msra.mxu0 %v45
    %1165 = vmatprep.subr.mxu0 0.0
    %1166 = vmatpush1.msra.mxu0 %v46
    %1167 = vmatprep.subr.mxu0 0.0
    %1168 = vmatpush1.msra.mxu0 %v47
    %1169 = vmatprep.subr.mxu0 0.0
    %1170 = vmatpush1.msra.mxu0 %v48
    %1171 = vmatprep.subr.mxu0 0.0
    %1172 = vmatpush1.msra.mxu0 %v49
    %1173 = vmatprep.subr.mxu0 0.0
    %1174 = vmatpush1.msra.mxu0 %v50
    %1175 = vmatprep.subr.mxu0 0.0
    %1176 = vmatpush1.msra.mxu0 0.0
    %1177 = vmatprep.subr.mxu0 0.0
    %1178 = vmatpush1.msra.mxu0 0.0
    %1179 = vmatprep.subr.mxu0 0.0
    %1180 = vmatpush1.msra.mxu0 0.0
    %1181 = vmatprep.subr.mxu0 0.0
    %1182 = vmatpush1.msra.mxu0 0.0
    %1183 = vmatprep.subr.mxu0 0.0
    %1184 = vmatpush1.msra.mxu0 0.0
    %1185 = vmatprep.subr.mxu0 0.0
    %1186 = vmatpush1.msra.mxu0 0.0
    %1187 = vmatprep.subr.mxu0 0.0
    %1188 = vmatpush1.msra.mxu0 0.0
    %1189 = vmatprep.subr.mxu0 0.0
    %1190 = vmatpush1.msra.mxu0 0.0
    %1191 = vmatprep.subr.mxu0 0.0
    %1192 = vmatpush1.msra.mxu0 0.0
    %1193 = vmatprep.subr.mxu0 0.0
    %1194 = vmatpush1.msra.mxu0 0.0
    %1195 = vmatprep.subr.mxu0 0.0
    %1196 = vmatpush1.msra.mxu0 0.0
    %1197 = vmatprep.subr.mxu0 0.0
    %1198 = vmatpush1.msra.mxu0 0.0
    %1199 = vmatprep.subr.mxu0 0.0
    %1200 = vmatpush1.msra.mxu0 0.0
    %1201 = vmatprep.subr.mxu0 0.0
    %1202 = vmatpush1.msra.mxu0 0.0
    %1203 = vmatprep.subr.mxu0 0.0
    %1204 = vmatpush1.msra.mxu0 0.0
    %1205 = vmatprep.subr.mxu0 0.0
    %1206 = vmatpush1.msra.mxu0 0.0
    %1207 = vmatprep.mubr.f32.mxu0 0.0
    %1208 = vmatmul.mubr.f32.gmra.mrb[0].mxu0 %v1142
    %v1209 = vpop.f32.mrb[0].mxu0
    %v1210 = vadd.f32 %v58, %v1209
    %v1211 = vpop.f32.mrb[0].mxu0
    %1212 = vdwg.mxu0
    %v1213 = vmax.f32 %v1210, 0.0
    %s1214 = scalar_lea.vmem [#allocation2], 448
    %v1215 = vld [vmem:[%s1214] sm:$0xff]
    %v1216 = vld [vmem:[%s1214 + $0x8] sm:$0xff]
    %v1217 = vld [vmem:[%s1214 + $0x10] sm:$0xff]
    %v1218 = vld [vmem:[%s1214 + $0x18] sm:$0xff]
    %v1219 = vld [vmem:[%s1214 + $0x20] sm:$0xff]
    %v1220 = vld [vmem:[%s1214 + $0x28] sm:$0xff]
    %v1221 = vld [vmem:[%s1214 + $0x30] sm:$0xff]
    %v1222 = vld [vmem:[%s1214 + $0x38] sm:$0xff]
    %v1224 = vsel %vm220, %v1213, 0
    %1226 = vmatprep.subr.mxu0 0.0
    %1227 = vmatpush1.msra.mxu0 %v1215
    %1228 = vmatprep.subr.mxu0 0.0
    %1229 = vmatpush1.msra.mxu0 %v1216
    %1230 = vmatprep.subr.mxu0 0.0
    %1231 = vmatpush1.msra.mxu0 %v1217
    %1232 = vmatprep.subr.mxu0 0.0
    %1233 = vmatpush1.msra.mxu0 %v1218
    %1234 = vmatprep.subr.mxu0 0.0
    %1235 = vmatpush1.msra.mxu0 %v1219
    %1236 = vmatprep.subr.mxu0 0.0
    %1237 = vmatpush1.msra.mxu0 %v1220
    %1238 = vmatprep.subr.mxu0 0.0
    %1239 = vmatpush1.msra.mxu0 %v1221
    %1240 = vmatprep.subr.mxu0 0.0
    %1241 = vmatpush1.msra.mxu0 %v1222
    %1242 = vmatprep.subr.mxu0 0.0
    %1243 = vmatpush1.msra.mxu0 0.0
    %1244 = vmatprep.subr.mxu0 0.0
    %1245 = vmatpush1.msra.mxu0 0.0
    %1246 = vmatprep.subr.mxu0 0.0
    %1247 = vmatpush1.msra.mxu0 0.0
    %1248 = vmatprep.subr.mxu0 0.0
    %1249 = vmatpush1.msra.mxu0 0.0
    %1250 = vmatprep.subr.mxu0 0.0
    %1251 = vmatpush1.msra.mxu0 0.0
    %1252 = vmatprep.subr.mxu0 0.0
    %1253 = vmatpush1.msra.mxu0 0.0
    %1254 = vmatprep.subr.mxu0 0.0
    %1255 = vmatpush1.msra.mxu0 0.0
    %1256 = vmatprep.subr.mxu0 0.0
    %1257 = vmatpush1.msra.mxu0 0.0
    %1258 = vmatprep.subr.mxu0 0.0
    %1259 = vmatpush1.msra.mxu0 0.0
    %1260 = vmatprep.subr.mxu0 0.0
    %1261 = vmatpush1.msra.mxu0 0.0
    %1262 = vmatprep.subr.mxu0 0.0
    %1263 = vmatpush1.msra.mxu0 0.0
    %1264 = vmatprep.subr.mxu0 0.0
    %1265 = vmatpush1.msra.mxu0 0.0
    %1266 = vmatprep.subr.mxu0 0.0
    %1267 = vmatpush1.msra.mxu0 0.0
    %1268 = vmatprep.subr.mxu0 0.0
    %1269 = vmatpush1.msra.mxu0 0.0
    %1270 = vmatprep.subr.mxu0 0.0
    %1271 = vmatpush1.msra.mxu0 0.0
    %1272 = vmatprep.subr.mxu0 0.0
    %1273 = vmatpush1.msra.mxu0 0.0
    %1274 = vmatprep.subr.mxu0 0.0
    %1275 = vmatpush1.msra.mxu0 0.0
    %1276 = vmatprep.subr.mxu0 0.0
    %1277 = vmatpush1.msra.mxu0 0.0
    %1278 = vmatprep.subr.mxu0 0.0
    %1279 = vmatpush1.msra.mxu0 0.0
    %1280 = vmatprep.subr.mxu0 0.0
    %1281 = vmatpush1.msra.mxu0 0.0
    %1282 = vmatprep.subr.mxu0 0.0
    %1283 = vmatpush1.msra.mxu0 0.0
    %1284 = vmatprep.subr.mxu0 0.0
    %1285 = vmatpush1.msra.mxu0 0.0
    %1286 = vmatprep.subr.mxu0 0.0
    %1287 = vmatpush1.msra.mxu0 0.0
    %1288 = vmatprep.subr.mxu0 0.0
    %1289 = vmatpush1.msra.mxu0 0.0
    %1290 = vmatprep.mubr.f32.mxu0 0.0
    %1291 = vmatmul.mubr.f32.gmra.mrb[0].mxu0 %v1224
    %v1292 = vpop.f32.mrb[0].mxu0
    %v1293 = vadd.f32 0.0, %v1292
    %v1294 = vpop.f32.mrb[0].mxu0
    %1295 = vdwg.mxu0
    %v1296 = vadd.f32 %v1141, %v1293
    %v1297 = vld [vmem:[%s0 + $0x10] sm:$0x3]
    %1298 = vmatprep.subr.mxu0 0.0
    %1299 = vmatpush1.msra.mxu0 %v35
    %1300 = vmatprep.subr.mxu0 0.0
    %1301 = vmatpush1.msra.mxu0 %v36
    %1302 = vmatprep.subr.mxu0 0.0
    %1303 = vmatpush1.msra.mxu0 %v37
    %1304 = vmatprep.subr.mxu0 0.0
    %1305 = vmatpush1.msra.mxu0 %v38
    %1306 = vmatprep.subr.mxu0 0.0
    %1307 = vmatpush1.msra.mxu0 %v39
    %1308 = vmatprep.subr.mxu0 0.0
    %1309 = vmatpush1.msra.mxu0 %v40
    %1310 = vmatprep.subr.mxu0 0.0
    %1311 = vmatpush1.msra.mxu0 %v41
    %1312 = vmatprep.subr.mxu0 0.0
    %1313 = vmatpush1.msra.mxu0 %v42
    %1314 = vmatprep.subr.mxu0 0.0
    %1315 = vmatpush1.msra.mxu0 %v43
    %1316 = vmatprep.subr.mxu0 0.0
    %1317 = vmatpush1.msra.mxu0 %v44
    %1318 = vmatprep.subr.mxu0 0.0
    %1319 = vmatpush1.msra.mxu0 %v45
    %1320 = vmatprep.subr.mxu0 0.0
    %1321 = vmatpush1.msra.mxu0 %v46
    %1322 = vmatprep.subr.mxu0 0.0
    %1323 = vmatpush1.msra.mxu0 %v47
    %1324 = vmatprep.subr.mxu0 0.0
    %1325 = vmatpush1.msra.mxu0 %v48
    %1326 = vmatprep.subr.mxu0 0.0
    %1327 = vmatpush1.msra.mxu0 %v49
    %1328 = vmatprep.subr.mxu0 0.0
    %1329 = vmatpush1.msra.mxu0 %v50
    %1330 = vmatprep.subr.mxu0 0.0
    %1331 = vmatpush1.msra.mxu0 0.0
    %1332 = vmatprep.subr.mxu0 0.0
    %1333 = vmatpush1.msra.mxu0 0.0
    %1334 = vmatprep.subr.mxu0 0.0
    %1335 = vmatpush1.msra.mxu0 0.0
    %1336 = vmatprep.subr.mxu0 0.0
    %1337 = vmatpush1.msra.mxu0 0.0
    %1338 = vmatprep.subr.mxu0 0.0
    %1339 = vmatpush1.msra.mxu0 0.0
    %1340 = vmatprep.subr.mxu0 0.0
    %1341 = vmatpush1.msra.mxu0 0.0
    %1342 = vmatprep.subr.mxu0 0.0
    %1343 = vmatpush1.msra.mxu0 0.0
    %1344 = vmatprep.subr.mxu0 0.0
    %1345 = vmatpush1.msra.mxu0 0.0
    %1346 = vmatprep.subr.mxu0 0.0
    %1347 = vmatpush1.msra.mxu0 0.0
    %1348 = vmatprep.subr.mxu0 0.0
    %1349 = vmatpush1.msra.mxu0 0.0
    %1350 = vmatprep.subr.mxu0 0.0
    %1351 = vmatpush1.msra.mxu0 0.0
    %1352 = vmatprep.subr.mxu0 0.0
    %1353 = vmatpush1.msra.mxu0 0.0
    %1354 = vmatprep.subr.mxu0 0.0
    %1355 = vmatpush1.msra.mxu0 0.0
    %1356 = vmatprep.subr.mxu0 0.0
    %1357 = vmatpush1.msra.mxu0 0.0
    %1358 = vmatprep.subr.mxu0 0.0
    %1359 = vmatpush1.msra.mxu0 0.0
    %1360 = vmatprep.subr.mxu0 0.0
    %1361 = vmatpush1.msra.mxu0 0.0
    %1362 = vmatprep.mubr.f32.mxu0 0.0
    %1363 = vmatmul.mubr.f32.gmra.mrb[0].mxu0 %v1297
    %v1364 = vpop.f32.mrb[0].mxu0
    %v1365 = vadd.f32 %v58, %v1364
    %v1366 = vpop.f32.mrb[0].mxu0
    %1367 = vdwg.mxu0
    %v1368 = vmax.f32 %v1365, 0.0
    %s1369 = scalar_lea.vmem [#allocation2], 512
    %v1370 = vld [vmem:[%s1369] sm:$0xff]
    %v1371 = vld [vmem:[%s1369 + $0x8] sm:$0xff]
    %v1372 = vld [vmem:[%s1369 + $0x10] sm:$0xff]
    %v1373 = vld [vmem:[%s1369 + $0x18] sm:$0xff]
    %v1374 = vld [vmem:[%s1369 + $0x20] sm:$0xff]
    %v1375 = vld [vmem:[%s1369 + $0x28] sm:$0xff]
    %v1376 = vld [vmem:[%s1369 + $0x30] sm:$0xff]
    %v1377 = vld [vmem:[%s1369 + $0x38] sm:$0xff]
    %v1379 = vsel %vm220, %v1368, 0
    %1381 = vmatprep.subr.mxu0 0.0
    %1382 = vmatpush1.msra.mxu0 %v1370
    %1383 = vmatprep.subr.mxu0 0.0
    %1384 = vmatpush1.msra.mxu0 %v1371
    %1385 = vmatprep.subr.mxu0 0.0
    %1386 = vmatpush1.msra.mxu0 %v1372
    %1387 = vmatprep.subr.mxu0 0.0
    %1388 = vmatpush1.msra.mxu0 %v1373
    %1389 = vmatprep.subr.mxu0 0.0
    %1390 = vmatpush1.msra.mxu0 %v1374
    %1391 = vmatprep.subr.mxu0 0.0
    %1392 = vmatpush1.msra.mxu0 %v1375
    %1393 = vmatprep.subr.mxu0 0.0
    %1394 = vmatpush1.msra.mxu0 %v1376
    %1395 = vmatprep.subr.mxu0 0.0
    %1396 = vmatpush1.msra.mxu0 %v1377
    %1397 = vmatprep.subr.mxu0 0.0
    %1398 = vmatpush1.msra.mxu0 0.0
    %1399 = vmatprep.subr.mxu0 0.0
    %1400 = vmatpush1.msra.mxu0 0.0
    %1401 = vmatprep.subr.mxu0 0.0
    %1402 = vmatpush1.msra.mxu0 0.0
    %1403 = vmatprep.subr.mxu0 0.0
    %1404 = vmatpush1.msra.mxu0 0.0
    %1405 = vmatprep.subr.mxu0 0.0
    %1406 = vmatpush1.msra.mxu0 0.0
    %1407 = vmatprep.subr.mxu0 0.0
    %1408 = vmatpush1.msra.mxu0 0.0
    %1409 = vmatprep.subr.mxu0 0.0
    %1410 = vmatpush1.msra.mxu0 0.0
    %1411 = vmatprep.subr.mxu0 0.0
    %1412 = vmatpush1.msra.mxu0 0.0
    %1413 = vmatprep.subr.mxu0 0.0
    %1414 = vmatpush1.msra.mxu0 0.0
    %1415 = vmatprep.subr.mxu0 0.0
    %1416 = vmatpush1.msra.mxu0 0.0
    %1417 = vmatprep.subr.mxu0 0.0
    %1418 = vmatpush1.msra.mxu0 0.0
    %1419 = vmatprep.subr.mxu0 0.0
    %1420 = vmatpush1.msra.mxu0 0.0
    %1421 = vmatprep.subr.mxu0 0.0
    %1422 = vmatpush1.msra.mxu0 0.0
    %1423 = vmatprep.subr.mxu0 0.0
    %1424 = vmatpush1.msra.mxu0 0.0
    %1425 = vmatprep.subr.mxu0 0.0
    %1426 = vmatpush1.msra.mxu0 0.0
    %1427 = vmatprep.subr.mxu0 0.0
    %1428 = vmatpush1.msra.mxu0 0.0
    %1429 = vmatprep.subr.mxu0 0.0
    %1430 = vmatpush1.msra.mxu0 0.0
    %1431 = vmatprep.subr.mxu0 0.0
    %1432 = vmatpush1.msra.mxu0 0.0
    %1433 = vmatprep.subr.mxu0 0.0
    %1434 = vmatpush1.msra.mxu0 0.0
    %1435 = vmatprep.subr.mxu0 0.0
    %1436 = vmatpush1.msra.mxu0 0.0
    %1437 = vmatprep.subr.mxu0 0.0
    %1438 = vmatpush1.msra.mxu0 0.0
    %1439 = vmatprep.subr.mxu0 0.0
    %1440 = vmatpush1.msra.mxu0 0.0
    %1441 = vmatprep.subr.mxu0 0.0
    %1442 = vmatpush1.msra.mxu0 0.0
    %1443 = vmatprep.subr.mxu0 0.0
    %1444 = vmatpush1.msra.mxu0 0.0
    %1445 = vmatprep.mubr.f32.mxu0 0.0
    %1446 = vmatmul.mubr.f32.gmra.mrb[0].mxu0 %v1379
    %v1447 = vpop.f32.mrb[0].mxu0
    %v1448 = vadd.f32 0.0, %v1447
    %v1449 = vpop.f32.mrb[0].mxu0
    %1450 = vdwg.mxu0
    %v1451 = vadd.f32 %v1296, %v1448
    %v1452 = vld [vmem:[%s0 + $0x12] sm:$0x3]
    %1453 = vmatprep.subr.mxu0 0.0
    %1454 = vmatpush1.msra.mxu0 %v35
    %1455 = vmatprep.subr.mxu0 0.0
    %1456 = vmatpush1.msra.mxu0 %v36
    %1457 = vmatprep.subr.mxu0 0.0
    %1458 = vmatpush1.msra.mxu0 %v37
    %1459 = vmatprep.subr.mxu0 0.0
    %1460 = vmatpush1.msra.mxu0 %v38
    %1461 = vmatprep.subr.mxu0 0.0
    %1462 = vmatpush1.msra.mxu0 %v39
    %1463 = vmatprep.subr.mxu0 0.0
    %1464 = vmatpush1.msra.mxu0 %v40
    %1465 = vmatprep.subr.mxu0 0.0
    %1466 = vmatpush1.msra.mxu0 %v41
    %1467 = vmatprep.subr.mxu0 0.0
    %1468 = vmatpush1.msra.mxu0 %v42
    %1469 = vmatprep.subr.mxu0 0.0
    %1470 = vmatpush1.msra.mxu0 %v43
    %1471 = vmatprep.subr.mxu0 0.0
    %1472 = vmatpush1.msra.mxu0 %v44
    %1473 = vmatprep.subr.mxu0 0.0
    %1474 = vmatpush1.msra.mxu0 %v45
    %1475 = vmatprep.subr.mxu0 0.0
    %1476 = vmatpush1.msra.mxu0 %v46
    %1477 = vmatprep.subr.mxu0 0.0
    %1478 = vmatpush1.msra.mxu0 %v47
    %1479 = vmatprep.subr.mxu0 0.0
    %1480 = vmatpush1.msra.mxu0 %v48
    %1481 = vmatprep.subr.mxu0 0.0
    %1482 = vmatpush1.msra.mxu0 %v49
    %1483 = vmatprep.subr.mxu0 0.0
    %1484 = vmatpush1.msra.mxu0 %v50
    %1485 = vmatprep.subr.mxu0 0.0
    %1486 = vmatpush1.msra.mxu0 0.0
    %1487 = vmatprep.subr.mxu0 0.0
    %1488 = vmatpush1.msra.mxu0 0.0
    %1489 = vmatprep.subr.mxu0 0.0
    %1490 = vmatpush1.msra.mxu0 0.0
    %1491 = vmatprep.subr.mxu0 0.0
    %1492 = vmatpush1.msra.mxu0 0.0
    %1493 = vmatprep.subr.mxu0 0.0
    %1494 = vmatpush1.msra.mxu0 0.0
    %1495 = vmatprep.subr.mxu0 0.0
    %1496 = vmatpush1.msra.mxu0 0.0
    %1497 = vmatprep.subr.mxu0 0.0
    %1498 = vmatpush1.msra.mxu0 0.0
    %1499 = vmatprep.subr.mxu0 0.0
    %1500 = vmatpush1.msra.mxu0 0.0
    %1501 = vmatprep.subr.mxu0 0.0
    %1502 = vmatpush1.msra.mxu0 0.0
    %1503 = vmatprep.subr.mxu0 0.0
    %1504 = vmatpush1.msra.mxu0 0.0
    %1505 = vmatprep.subr.mxu0 0.0
    %1506 = vmatpush1.msra.mxu0 0.0
    %1507 = vmatprep.subr.mxu0 0.0
    %1508 = vmatpush1.msra.mxu0 0.0
    %1509 = vmatprep.subr.mxu0 0.0
    %1510 = vmatpush1.msra.mxu0 0.0
    %1511 = vmatprep.subr.mxu0 0.0
    %1512 = vmatpush1.msra.mxu0 0.0
    %1513 = vmatprep.subr.mxu0 0.0
    %1514 = vmatpush1.msra.mxu0 0.0
    %1515 = vmatprep.subr.mxu0 0.0
    %1516 = vmatpush1.msra.mxu0 0.0
    %1517 = vmatprep.mubr.f32.mxu0 0.0
    %1518 = vmatmul.mubr.f32.gmra.mrb[0].mxu0 %v1452
    %v1519 = vpop.f32.mrb[0].mxu0
    %v1520 = vadd.f32 %v58, %v1519
    %v1521 = vpop.f32.mrb[0].mxu0
    %1522 = vdwg.mxu0
    %v1523 = vmax.f32 %v1520, 0.0
    %s1524 = scalar_lea.vmem [#allocation2], 576
    %v1525 = vld [vmem:[%s1524] sm:$0xff]
    %v1526 = vld [vmem:[%s1524 + $0x8] sm:$0xff]
    %v1527 = vld [vmem:[%s1524 + $0x10] sm:$0xff]
    %v1528 = vld [vmem:[%s1524 + $0x18] sm:$0xff]
    %v1529 = vld [vmem:[%s1524 + $0x20] sm:$0xff]
    %v1530 = vld [vmem:[%s1524 + $0x28] sm:$0xff]
    %v1531 = vld [vmem:[%s1524 + $0x30] sm:$0xff]
    %v1532 = vld [vmem:[%s1524 + $0x38] sm:$0xff]
    %v1534 = vsel %vm220, %v1523, 0
    %1536 = vmatprep.subr.mxu0 0.0
    %1537 = vmatpush1.msra.mxu0 %v1525
    %1538 = vmatprep.subr.mxu0 0.0
    %1539 = vmatpush1.msra.mxu0 %v1526
    %1540 = vmatprep.subr.mxu0 0.0
    %1541 = vmatpush1.msra.mxu0 %v1527
    %1542 = vmatprep.subr.mxu0 0.0
    %1543 = vmatpush1.msra.mxu0 %v1528
    %1544 = vmatprep.subr.mxu0 0.0
    %1545 = vmatpush1.msra.mxu0 %v1529
    %1546 = vmatprep.subr.mxu0 0.0
    %1547 = vmatpush1.msra.mxu0 %v1530
    %1548 = vmatprep.subr.mxu0 0.0
    %1549 = vmatpush1.msra.mxu0 %v1531
    %1550 = vmatprep.subr.mxu0 0.0
    %1551 = vmatpush1.msra.mxu0 %v1532
    %1552 = vmatprep.subr.mxu0 0.0
    %1553 = vmatpush1.msra.mxu0 0.0
    %1554 = vmatprep.subr.mxu0 0.0
    %1555 = vmatpush1.msra.mxu0 0.0
    %1556 = vmatprep.subr.mxu0 0.0
    %1557 = vmatpush1.msra.mxu0 0.0
    %1558 = vmatprep.subr.mxu0 0.0
    %1559 = vmatpush1.msra.mxu0 0.0
    %1560 = vmatprep.subr.mxu0 0.0
    %1561 = vmatpush1.msra.mxu0 0.0
    %1562 = vmatprep.subr.mxu0 0.0
    %1563 = vmatpush1.msra.mxu0 0.0
    %1564 = vmatprep.subr.mxu0 0.0
    %1565 = vmatpush1.msra.mxu0 0.0
    %1566 = vmatprep.subr.mxu0 0.0
    %1567 = vmatpush1.msra.mxu0 0.0
    %1568 = vmatprep.subr.mxu0 0.0
    %1569 = vmatpush1.msra.mxu0 0.0
    %1570 = vmatprep.subr.mxu0 0.0
    %1571 = vmatpush1.msra.mxu0 0.0
    %1572 = vmatprep.subr.mxu0 0.0
    %1573 = vmatpush1.msra.mxu0 0.0
    %1574 = vmatprep.subr.mxu0 0.0
    %1575 = vmatpush1.msra.mxu0 0.0
    %1576 = vmatprep.subr.mxu0 0.0
    %1577 = vmatpush1.msra.mxu0 0.0
    %1578 = vmatprep.subr.mxu0 0.0
    %1579 = vmatpush1.msra.mxu0 0.0
    %1580 = vmatprep.subr.mxu0 0.0
    %1581 = vmatpush1.msra.mxu0 0.0
    %1582 = vmatprep.subr.mxu0 0.0
    %1583 = vmatpush1.msra.mxu0 0.0
    %1584 = vmatprep.subr.mxu0 0.0
    %1585 = vmatpush1.msra.mxu0 0.0
    %1586 = vmatprep.subr.mxu0 0.0
    %1587 = vmatpush1.msra.mxu0 0.0
    %1588 = vmatprep.subr.mxu0 0.0
    %1589 = vmatpush1.msra.mxu0 0.0
    %1590 = vmatprep.subr.mxu0 0.0
    %1591 = vmatpush1.msra.mxu0 0.0
    %1592 = vmatprep.subr.mxu0 0.0
    %1593 = vmatpush1.msra.mxu0 0.0
    %1594 = vmatprep.subr.mxu0 0.0
    %1595 = vmatpush1.msra.mxu0 0.0
    %1596 = vmatprep.subr.mxu0 0.0
    %1597 = vmatpush1.msra.mxu0 0.0
    %1598 = vmatprep.subr.mxu0 0.0
    %1599 = vmatpush1.msra.mxu0 0.0
    %1600 = vmatprep.mubr.f32.mxu0 0.0
    %1601 = vmatmul.mubr.f32.gmra.mrb[0].mxu0 %v1534
    %v1602 = vpop.f32.mrb[0].mxu0
    %v1603 = vadd.f32 0.0, %v1602
    %v1604 = vpop.f32.mrb[0].mxu0
    %1605 = vdwg.mxu0
    %v1606 = vadd.f32 %v1451, %v1603
    %v1607 = vld [vmem:[%s0 + $0x14] sm:$0x3]
    %1608 = vmatprep.subr.mxu0 0.0
    %1609 = vmatpush1.msra.mxu0 %v35
    %1610 = vmatprep.subr.mxu0 0.0
    %1611 = vmatpush1.msra.mxu0 %v36
    %1612 = vmatprep.subr.mxu0 0.0
    %1613 = vmatpush1.msra.mxu0 %v37
    %1614 = vmatprep.subr.mxu0 0.0
    %1615 = vmatpush1.msra.mxu0 %v38
    %1616 = vmatprep.subr.mxu0 0.0
    %1617 = vmatpush1.msra.mxu0 %v39
    %1618 = vmatprep.subr.mxu0 0.0
    %1619 = vmatpush1.msra.mxu0 %v40
    %1620 = vmatprep.subr.mxu0 0.0
    %1621 = vmatpush1.msra.mxu0 %v41
    %1622 = vmatprep.subr.mxu0 0.0
    %1623 = vmatpush1.msra.mxu0 %v42
    %1624 = vmatprep.subr.mxu0 0.0
    %1625 = vmatpush1.msra.mxu0 %v43
    %1626 = vmatprep.subr.mxu0 0.0
    %1627 = vmatpush1.msra.mxu0 %v44
    %1628 = vmatprep.subr.mxu0 0.0
    %1629 = vmatpush1.msra.mxu0 %v45
    %1630 = vmatprep.subr.mxu0 0.0
    %1631 = vmatpush1.msra.mxu0 %v46
    %1632 = vmatprep.subr.mxu0 0.0
    %1633 = vmatpush1.msra.mxu0 %v47
    %1634 = vmatprep.subr.mxu0 0.0
    %1635 = vmatpush1.msra.mxu0 %v48
    %1636 = vmatprep.subr.mxu0 0.0
    %1637 = vmatpush1.msra.mxu0 %v49
    %1638 = vmatprep.subr.mxu0 0.0
    %1639 = vmatpush1.msra.mxu0 %v50
    %1640 = vmatprep.subr.mxu0 0.0
    %1641 = vmatpush1.msra.mxu0 0.0
    %1642 = vmatprep.subr.mxu0 0.0
    %1643 = vmatpush1.msra.mxu0 0.0
    %1644 = vmatprep.subr.mxu0 0.0
    %1645 = vmatpush1.msra.mxu0 0.0
    %1646 = vmatprep.subr.mxu0 0.0
    %1647 = vmatpush1.msra.mxu0 0.0
    %1648 = vmatprep.subr.mxu0 0.0
    %1649 = vmatpush1.msra.mxu0 0.0
    %1650 = vmatprep.subr.mxu0 0.0
    %1651 = vmatpush1.msra.mxu0 0.0
    %1652 = vmatprep.subr.mxu0 0.0
    %1653 = vmatpush1.msra.mxu0 0.0
    %1654 = vmatprep.subr.mxu0 0.0
    %1655 = vmatpush1.msra.mxu0 0.0
    %1656 = vmatprep.subr.mxu0 0.0
    %1657 = vmatpush1.msra.mxu0 0.0
    %1658 = vmatprep.subr.mxu0 0.0
    %1659 = vmatpush1.msra.mxu0 0.0
    %1660 = vmatprep.subr.mxu0 0.0
    %1661 = vmatpush1.msra.mxu0 0.0
    %1662 = vmatprep.subr.mxu0 0.0
    %1663 = vmatpush1.msra.mxu0 0.0
    %1664 = vmatprep.subr.mxu0 0.0
    %1665 = vmatpush1.msra.mxu0 0.0
    %1666 = vmatprep.subr.mxu0 0.0
    %1667 = vmatpush1.msra.mxu0 0.0
    %1668 = vmatprep.subr.mxu0 0.0
    %1669 = vmatpush1.msra.mxu0 0.0
    %1670 = vmatprep.subr.mxu0 0.0
    %1671 = vmatpush1.msra.mxu0 0.0
    %1672 = vmatprep.mubr.f32.mxu0 0.0
    %1673 = vmatmul.mubr.f32.gmra.mrb[0].mxu0 %v1607
    %v1674 = vpop.f32.mrb[0].mxu0
    %v1675 = vadd.f32 %v58, %v1674
    %v1676 = vpop.f32.mrb[0].mxu0
    %1677 = vdwg.mxu0
    %v1678 = vmax.f32 %v1675, 0.0
    %s1679 = scalar_lea.vmem [#allocation2], 640
    %v1680 = vld [vmem:[%s1679] sm:$0xff]
    %v1681 = vld [vmem:[%s1679 + $0x8] sm:$0xff]
    %v1682 = vld [vmem:[%s1679 + $0x10] sm:$0xff]
    %v1683 = vld [vmem:[%s1679 + $0x18] sm:$0xff]
    %v1684 = vld [vmem:[%s1679 + $0x20] sm:$0xff]
    %v1685 = vld [vmem:[%s1679 + $0x28] sm:$0xff]
    %v1686 = vld [vmem:[%s1679 + $0x30] sm:$0xff]
    %v1687 = vld [vmem:[%s1679 + $0x38] sm:$0xff]
    %v1689 = vsel %vm220, %v1678, 0
    %1691 = vmatprep.subr.mxu0 0.0
    %1692 = vmatpush1.msra.mxu0 %v1680
    %1693 = vmatprep.subr.mxu0 0.0
    %1694 = vmatpush1.msra.mxu0 %v1681
    %1695 = vmatprep.subr.mxu0 0.0
    %1696 = vmatpush1.msra.mxu0 %v1682
    %1697 = vmatprep.subr.mxu0 0.0
    %1698 = vmatpush1.msra.mxu0 %v1683
    %1699 = vmatprep.subr.mxu0 0.0
    %1700 = vmatpush1.msra.mxu0 %v1684
    %1701 = vmatprep.subr.mxu0 0.0
    %1702 = vmatpush1.msra.mxu0 %v1685
    %1703 = vmatprep.subr.mxu0 0.0
    %1704 = vmatpush1.msra.mxu0 %v1686
    %1705 = vmatprep.subr.mxu0 0.0
    %1706 = vmatpush1.msra.mxu0 %v1687
    %1707 = vmatprep.subr.mxu0 0.0
    %1708 = vmatpush1.msra.mxu0 0.0
    %1709 = vmatprep.subr.mxu0 0.0
    %1710 = vmatpush1.msra.mxu0 0.0
    %1711 = vmatprep.subr.mxu0 0.0
    %1712 = vmatpush1.msra.mxu0 0.0
    %1713 = vmatprep.subr.mxu0 0.0
    %1714 = vmatpush1.msra.mxu0 0.0
    %1715 = vmatprep.subr.mxu0 0.0
    %1716 = vmatpush1.msra.mxu0 0.0
    %1717 = vmatprep.subr.mxu0 0.0
    %1718 = vmatpush1.msra.mxu0 0.0
    %1719 = vmatprep.subr.mxu0 0.0
    %1720 = vmatpush1.msra.mxu0 0.0
    %1721 = vmatprep.subr.mxu0 0.0
    %1722 = vmatpush1.msra.mxu0 0.0
    %1723 = vmatprep.subr.mxu0 0.0
    %1724 = vmatpush1.msra.mxu0 0.0
    %1725 = vmatprep.subr.mxu0 0.0
    %1726 = vmatpush1.msra.mxu0 0.0
    %1727 = vmatprep.subr.mxu0 0.0
    %1728 = vmatpush1.msra.mxu0 0.0
    %1729 = vmatprep.subr.mxu0 0.0
    %1730 = vmatpush1.msra.mxu0 0.0
    %1731 = vmatprep.subr.mxu0 0.0
    %1732 = vmatpush1.msra.mxu0 0.0
    %1733 = vmatprep.subr.mxu0 0.0
    %1734 = vmatpush1.msra.mxu0 0.0
    %1735 = vmatprep.subr.mxu0 0.0
    %1736 = vmatpush1.msra.mxu0 0.0
    %1737 = vmatprep.subr.mxu0 0.0
    %1738 = vmatpush1.msra.mxu0 0.0
    %1739 = vmatprep.subr.mxu0 0.0
    %1740 = vmatpush1.msra.mxu0 0.0
    %1741 = vmatprep.subr.mxu0 0.0
    %1742 = vmatpush1.msra.mxu0 0.0
    %1743 = vmatprep.subr.mxu0 0.0
    %1744 = vmatpush1.msra.mxu0 0.0
    %1745 = vmatprep.subr.mxu0 0.0
    %1746 = vmatpush1.msra.mxu0 0.0
    %1747 = vmatprep.subr.mxu0 0.0
    %1748 = vmatpush1.msra.mxu0 0.0
    %1749 = vmatprep.subr.mxu0 0.0
    %1750 = vmatpush1.msra.mxu0 0.0
    %1751 = vmatprep.subr.mxu0 0.0
    %1752 = vmatpush1.msra.mxu0 0.0
    %1753 = vmatprep.subr.mxu0 0.0
    %1754 = vmatpush1.msra.mxu0 0.0
    %1755 = vmatprep.mubr.f32.mxu0 0.0
    %1756 = vmatmul.mubr.f32.gmra.mrb[0].mxu0 %v1689
    %v1757 = vpop.f32.mrb[0].mxu0
    %v1758 = vadd.f32 0.0, %v1757
    %v1759 = vpop.f32.mrb[0].mxu0
    %1760 = vdwg.mxu0
    %v1761 = vadd.f32 %v1606, %v1758
    %v1762 = vld [vmem:[%s0 + $0x16] sm:$0x3]
    %1763 = vmatprep.subr.mxu0 0.0
    %1764 = vmatpush1.msra.mxu0 %v35
    %1765 = vmatprep.subr.mxu0 0.0
    %1766 = vmatpush1.msra.mxu0 %v36
    %1767 = vmatprep.subr.mxu0 0.0
    %1768 = vmatpush1.msra.mxu0 %v37
    %1769 = vmatprep.subr.mxu0 0.0
    %1770 = vmatpush1.msra.mxu0 %v38
    %1771 = vmatprep.subr.mxu0 0.0
    %1772 = vmatpush1.msra.mxu0 %v39
    %1773 = vmatprep.subr.mxu0 0.0
    %1774 = vmatpush1.msra.mxu0 %v40
    %1775 = vmatprep.subr.mxu0 0.0
    %1776 = vmatpush1.msra.mxu0 %v41
    %1777 = vmatprep.subr.mxu0 0.0
    %1778 = vmatpush1.msra.mxu0 %v42
    %1779 = vmatprep.subr.mxu0 0.0
    %1780 = vmatpush1.msra.mxu0 %v43
    %1781 = vmatprep.subr.mxu0 0.0
    %1782 = vmatpush1.msra.mxu0 %v44
    %1783 = vmatprep.subr.mxu0 0.0
    %1784 = vmatpush1.msra.mxu0 %v45
    %1785 = vmatprep.subr.mxu0 0.0
    %1786 = vmatpush1.msra.mxu0 %v46
    %1787 = vmatprep.subr.mxu0 0.0
    %1788 = vmatpush1.msra.mxu0 %v47
    %1789 = vmatprep.subr.mxu0 0.0
    %1790 = vmatpush1.msra.mxu0 %v48
    %1791 = vmatprep.subr.mxu0 0.0
    %1792 = vmatpush1.msra.mxu0 %v49
    %1793 = vmatprep.subr.mxu0 0.0
    %1794 = vmatpush1.msra.mxu0 %v50
    %1795 = vmatprep.subr.mxu0 0.0
    %1796 = vmatpush1.msra.mxu0 0.0
    %1797 = vmatprep.subr.mxu0 0.0
    %1798 = vmatpush1.msra.mxu0 0.0
    %1799 = vmatprep.subr.mxu0 0.0
    %1800 = vmatpush1.msra.mxu0 0.0
    %1801 = vmatprep.subr.mxu0 0.0
    %1802 = vmatpush1.msra.mxu0 0.0
    %1803 = vmatprep.subr.mxu0 0.0
    %1804 = vmatpush1.msra.mxu0 0.0
    %1805 = vmatprep.subr.mxu0 0.0
    %1806 = vmatpush1.msra.mxu0 0.0
    %1807 = vmatprep.subr.mxu0 0.0
    %1808 = vmatpush1.msra.mxu0 0.0
    %1809 = vmatprep.subr.mxu0 0.0
    %1810 = vmatpush1.msra.mxu0 0.0
    %1811 = vmatprep.subr.mxu0 0.0
    %1812 = vmatpush1.msra.mxu0 0.0
    %1813 = vmatprep.subr.mxu0 0.0
    %1814 = vmatpush1.msra.mxu0 0.0
    %1815 = vmatprep.subr.mxu0 0.0
    %1816 = vmatpush1.msra.mxu0 0.0
    %1817 = vmatprep.subr.mxu0 0.0
    %1818 = vmatpush1.msra.mxu0 0.0
    %1819 = vmatprep.subr.mxu0 0.0
    %1820 = vmatpush1.msra.mxu0 0.0
    %1821 = vmatprep.subr.mxu0 0.0
    %1822 = vmatpush1.msra.mxu0 0.0
    %1823 = vmatprep.subr.mxu0 0.0
    %1824 = vmatpush1.msra.mxu0 0.0
    %1825 = vmatprep.subr.mxu0 0.0
    %1826 = vmatpush1.msra.mxu0 0.0
    %1827 = vmatprep.mubr.f32.mxu0 0.0
    %1828 = vmatmul.mubr.f32.gmra.mrb[0].mxu0 %v1762
    %v1829 = vpop.f32.mrb[0].mxu0
    %v1830 = vadd.f32 %v58, %v1829
    %v1831 = vpop.f32.mrb[0].mxu0
    %1832 = vdwg.mxu0
    %v1833 = vmax.f32 %v1830, 0.0
    %s1834 = scalar_lea.vmem [#allocation2], 704
    %v1835 = vld [vmem:[%s1834] sm:$0xff]
    %v1836 = vld [vmem:[%s1834 + $0x8] sm:$0xff]
    %v1837 = vld [vmem:[%s1834 + $0x10] sm:$0xff]
    %v1838 = vld [vmem:[%s1834 + $0x18] sm:$0xff]
    %v1839 = vld [vmem:[%s1834 + $0x20] sm:$0xff]
    %v1840 = vld [vmem:[%s1834 + $0x28] sm:$0xff]
    %v1841 = vld [vmem:[%s1834 + $0x30] sm:$0xff]
    %v1842 = vld [vmem:[%s1834 + $0x38] sm:$0xff]
    %v1844 = vsel %vm220, %v1833, 0
    %1846 = vmatprep.subr.mxu0 0.0
    %1847 = vmatpush1.msra.mxu0 %v1835
    %1848 = vmatprep.subr.mxu0 0.0
    %1849 = vmatpush1.msra.mxu0 %v1836
    %1850 = vmatprep.subr.mxu0 0.0
    %1851 = vmatpush1.msra.mxu0 %v1837
    %1852 = vmatprep.subr.mxu0 0.0
    %1853 = vmatpush1.msra.mxu0 %v1838
    %1854 = vmatprep.subr.mxu0 0.0
    %1855 = vmatpush1.msra.mxu0 %v1839
    %1856 = vmatprep.subr.mxu0 0.0
    %1857 = vmatpush1.msra.mxu0 %v1840
    %1858 = vmatprep.subr.mxu0 0.0
    %1859 = vmatpush1.msra.mxu0 %v1841
    %1860 = vmatprep.subr.mxu0 0.0
    %1861 = vmatpush1.msra.mxu0 %v1842
    %1862 = vmatprep.subr.mxu0 0.0
    %1863 = vmatpush1.msra.mxu0 0.0
    %1864 = vmatprep.subr.mxu0 0.0
    %1865 = vmatpush1.msra.mxu0 0.0
    %1866 = vmatprep.subr.mxu0 0.0
    %1867 = vmatpush1.msra.mxu0 0.0
    %1868 = vmatprep.subr.mxu0 0.0
    %1869 = vmatpush1.msra.mxu0 0.0
    %1870 = vmatprep.subr.mxu0 0.0
    %1871 = vmatpush1.msra.mxu0 0.0
    %1872 = vmatprep.subr.mxu0 0.0
    %1873 = vmatpush1.msra.mxu0 0.0
    %1874 = vmatprep.subr.mxu0 0.0
    %1875 = vmatpush1.msra.mxu0 0.0
    %1876 = vmatprep.subr.mxu0 0.0
    %1877 = vmatpush1.msra.mxu0 0.0
    %1878 = vmatprep.subr.mxu0 0.0
    %1879 = vmatpush1.msra.mxu0 0.0
    %1880 = vmatprep.subr.mxu0 0.0
    %1881 = vmatpush1.msra.mxu0 0.0
    %1882 = vmatprep.subr.mxu0 0.0
    %1883 = vmatpush1.msra.mxu0 0.0
    %1884 = vmatprep.subr.mxu0 0.0
    %1885 = vmatpush1.msra.mxu0 0.0
    %1886 = vmatprep.subr.mxu0 0.0
    %1887 = vmatpush1.msra.mxu0 0.0
    %1888 = vmatprep.subr.mxu0 0.0
    %1889 = vmatpush1.msra.mxu0 0.0
    %1890 = vmatprep.subr.mxu0 0.0
    %1891 = vmatpush1.msra.mxu0 0.0
    %1892 = vmatprep.subr.mxu0 0.0
    %1893 = vmatpush1.msra.mxu0 0.0
    %1894 = vmatprep.subr.mxu0 0.0
    %1895 = vmatpush1.msra.mxu0 0.0
    %1896 = vmatprep.subr.mxu0 0.0
    %1897 = vmatpush1.msra.mxu0 0.0
    %1898 = vmatprep.subr.mxu0 0.0
    %1899 = vmatpush1.msra.mxu0 0.0
    %1900 = vmatprep.subr.mxu0 0.0
    %1901 = vmatpush1.msra.mxu0 0.0
    %1902 = vmatprep.subr.mxu0 0.0
    %1903 = vmatpush1.msra.mxu0 0.0
    %1904 = vmatprep.subr.mxu0 0.0
    %1905 = vmatpush1.msra.mxu0 0.0
    %1906 = vmatprep.subr.mxu0 0.0
    %1907 = vmatpush1.msra.mxu0 0.0
    %1908 = vmatprep.subr.mxu0 0.0
    %1909 = vmatpush1.msra.mxu0 0.0
    %1910 = vmatprep.mubr.f32.mxu0 0.0
    %1911 = vmatmul.mubr.f32.gmra.mrb[0].mxu0 %v1844
    %v1912 = vpop.f32.mrb[0].mxu0
    %v1913 = vadd.f32 0.0, %v1912
    %v1914 = vpop.f32.mrb[0].mxu0
    %1915 = vdwg.mxu0
    %v1916 = vadd.f32 %v1761, %v1913
    %v1917 = vld [vmem:[%s0 + $0x18] sm:$0x3]
    %1918 = vmatprep.subr.mxu0 0.0
    %1919 = vmatpush1.msra.mxu0 %v35
    %1920 = vmatprep.subr.mxu0 0.0
    %1921 = vmatpush1.msra.mxu0 %v36
    %1922 = vmatprep.subr.mxu0 0.0
    %1923 = vmatpush1.msra.mxu0 %v37
    %1924 = vmatprep.subr.mxu0 0.0
    %1925 = vmatpush1.msra.mxu0 %v38
    %1926 = vmatprep.subr.mxu0 0.0
    %1927 = vmatpush1.msra.mxu0 %v39
    %1928 = vmatprep.subr.mxu0 0.0
    %1929 = vmatpush1.msra.mxu0 %v40
    %1930 = vmatprep.subr.mxu0 0.0
    %1931 = vmatpush1.msra.mxu0 %v41
    %1932 = vmatprep.subr.mxu0 0.0
    %1933 = vmatpush1.msra.mxu0 %v42
    %1934 = vmatprep.subr.mxu0 0.0
    %1935 = vmatpush1.msra.mxu0 %v43
    %1936 = vmatprep.subr.mxu0 0.0
    %1937 = vmatpush1.msra.mxu0 %v44
    %1938 = vmatprep.subr.mxu0 0.0
    %1939 = vmatpush1.msra.mxu0 %v45
    %1940 = vmatprep.subr.mxu0 0.0
    %1941 = vmatpush1.msra.mxu0 %v46
    %1942 = vmatprep.subr.mxu0 0.0
    %1943 = vmatpush1.msra.mxu0 %v47
    %1944 = vmatprep.subr.mxu0 0.0
    %1945 = vmatpush1.msra.mxu0 %v48
    %1946 = vmatprep.subr.mxu0 0.0
    %1947 = vmatpush1.msra.mxu0 %v49
    %1948 = vmatprep.subr.mxu0 0.0
    %1949 = vmatpush1.msra.mxu0 %v50
    %1950 = vmatprep.subr.mxu0 0.0
    %1951 = vmatpush1.msra.mxu0 0.0
    %1952 = vmatprep.subr.mxu0 0.0
    %1953 = vmatpush1.msra.mxu0 0.0
    %1954 = vmatprep.subr.mxu0 0.0
    %1955 = vmatpush1.msra.mxu0 0.0
    %1956 = vmatprep.subr.mxu0 0.0
    %1957 = vmatpush1.msra.mxu0 0.0
    %1958 = vmatprep.subr.mxu0 0.0
    %1959 = vmatpush1.msra.mxu0 0.0
    %1960 = vmatprep.subr.mxu0 0.0
    %1961 = vmatpush1.msra.mxu0 0.0
    %1962 = vmatprep.subr.mxu0 0.0
    %1963 = vmatpush1.msra.mxu0 0.0
    %1964 = vmatprep.subr.mxu0 0.0
    %1965 = vmatpush1.msra.mxu0 0.0
    %1966 = vmatprep.subr.mxu0 0.0
    %1967 = vmatpush1.msra.mxu0 0.0
    %1968 = vmatprep.subr.mxu0 0.0
    %1969 = vmatpush1.msra.mxu0 0.0
    %1970 = vmatprep.subr.mxu0 0.0
    %1971 = vmatpush1.msra.mxu0 0.0
    %1972 = vmatprep.subr.mxu0 0.0
    %1973 = vmatpush1.msra.mxu0 0.0
    %1974 = vmatprep.subr.mxu0 0.0
    %1975 = vmatpush1.msra.mxu0 0.0
    %1976 = vmatprep.subr.mxu0 0.0
    %1977 = vmatpush1.msra.mxu0 0.0
    %1978 = vmatprep.subr.mxu0 0.0
    %1979 = vmatpush1.msra.mxu0 0.0
    %1980 = vmatprep.subr.mxu0 0.0
    %1981 = vmatpush1.msra.mxu0 0.0
    %1982 = vmatprep.mubr.f32.mxu0 0.0
    %1983 = vmatmul.mubr.f32.gmra.mrb[0].mxu0 %v1917
    %v1984 = vpop.f32.mrb[0].mxu0
    %v1985 = vadd.f32 %v58, %v1984
    %v1986 = vpop.f32.mrb[0].mxu0
    %1987 = vdwg.mxu0
    %v1988 = vmax.f32 %v1985, 0.0
    %s1989 = scalar_lea.vmem [#allocation2], 768
    %v1990 = vld [vmem:[%s1989] sm:$0xff]
    %v1991 = vld [vmem:[%s1989 + $0x8] sm:$0xff]
    %v1992 = vld [vmem:[%s1989 + $0x10] sm:$0xff]
    %v1993 = vld [vmem:[%s1989 + $0x18] sm:$0xff]
    %v1994 = vld [vmem:[%s1989 + $0x20] sm:$0xff]
    %v1995 = vld [vmem:[%s1989 + $0x28] sm:$0xff]
    %v1996 = vld [vmem:[%s1989 + $0x30] sm:$0xff]
    %v1997 = vld [vmem:[%s1989 + $0x38] sm:$0xff]
    %v1999 = vsel %vm220, %v1988, 0
    %2001 = vmatprep.subr.mxu0 0.0
    %2002 = vmatpush1.msra.mxu0 %v1990
    %2003 = vmatprep.subr.mxu0 0.0
    %2004 = vmatpush1.msra.mxu0 %v1991
    %2005 = vmatprep.subr.mxu0 0.0
    %2006 = vmatpush1.msra.mxu0 %v1992
    %2007 = vmatprep.subr.mxu0 0.0
    %2008 = vmatpush1.msra.mxu0 %v1993
    %2009 = vmatprep.subr.mxu0 0.0
    %2010 = vmatpush1.msra.mxu0 %v1994
    %2011 = vmatprep.subr.mxu0 0.0
    %2012 = vmatpush1.msra.mxu0 %v1995
    %2013 = vmatprep.subr.mxu0 0.0
    %2014 = vmatpush1.msra.mxu0 %v1996
    %2015 = vmatprep.subr.mxu0 0.0
    %2016 = vmatpush1.msra.mxu0 %v1997
    %2017 = vmatprep.subr.mxu0 0.0
    %2018 = vmatpush1.msra.mxu0 0.0
    %2019 = vmatprep.subr.mxu0 0.0
    %2020 = vmatpush1.msra.mxu0 0.0
    %2021 = vmatprep.subr.mxu0 0.0
    %2022 = vmatpush1.msra.mxu0 0.0
    %2023 = vmatprep.subr.mxu0 0.0
    %2024 = vmatpush1.msra.mxu0 0.0
    %2025 = vmatprep.subr.mxu0 0.0
    %2026 = vmatpush1.msra.mxu0 0.0
    %2027 = vmatprep.subr.mxu0 0.0
    %2028 = vmatpush1.msra.mxu0 0.0
    %2029 = vmatprep.subr.mxu0 0.0
    %2030 = vmatpush1.msra.mxu0 0.0
    %2031 = vmatprep.subr.mxu0 0.0
    %2032 = vmatpush1.msra.mxu0 0.0
    %2033 = vmatprep.subr.mxu0 0.0
    %2034 = vmatpush1.msra.mxu0 0.0
    %2035 = vmatprep.subr.mxu0 0.0
    %2036 = vmatpush1.msra.mxu0 0.0
    %2037 = vmatprep.subr.mxu0 0.0
    %2038 = vmatpush1.msra.mxu0 0.0
    %2039 = vmatprep.subr.mxu0 0.0
    %2040 = vmatpush1.msra.mxu0 0.0
    %2041 = vmatprep.subr.mxu0 0.0
    %2042 = vmatpush1.msra.mxu0 0.0
    %2043 = vmatprep.subr.mxu0 0.0
    %2044 = vmatpush1.msra.mxu0 0.0
    %2045 = vmatprep.subr.mxu0 0.0
    %2046 = vmatpush1.msra.mxu0 0.0
    %2047 = vmatprep.subr.mxu0 0.0
    %2048 = vmatpush1.msra.mxu0 0.0
    %2049 = vmatprep.subr.mxu0 0.0
    %2050 = vmatpush1.msra.mxu0 0.0
    %2051 = vmatprep.subr.mxu0 0.0
    %2052 = vmatpush1.msra.mxu0 0.0
    %2053 = vmatprep.subr.mxu0 0.0
    %2054 = vmatpush1.msra.mxu0 0.0
    %2055 = vmatprep.subr.mxu0 0.0
    %2056 = vmatpush1.msra.mxu0 0.0
    %2057 = vmatprep.subr.mxu0 0.0
    %2058 = vmatpush1.msra.mxu0 0.0
    %2059 = vmatprep.subr.mxu0 0.0
    %2060 = vmatpush1.msra.mxu0 0.0
    %2061 = vmatprep.subr.mxu0 0.0
    %2062 = vmatpush1.msra.mxu0 0.0
    %2063 = vmatprep.subr.mxu0 0.0
    %2064 = vmatpush1.msra.mxu0 0.0
    %2065 = vmatprep.mubr.f32.mxu0 0.0
    %2066 = vmatmul.mubr.f32.gmra.mrb[0].mxu0 %v1999
    %v2067 = vpop.f32.mrb[0].mxu0
    %v2068 = vadd.f32 0.0, %v2067
    %v2069 = vpop.f32.mrb[0].mxu0
    %2070 = vdwg.mxu0
    %v2071 = vadd.f32 %v1916, %v2068
    %v2072 = vld [vmem:[%s0 + $0x1a] sm:$0x3]
    %2073 = vmatprep.subr.mxu0 0.0
    %2074 = vmatpush1.msra.mxu0 %v35
    %2075 = vmatprep.subr.mxu0 0.0
    %2076 = vmatpush1.msra.mxu0 %v36
    %2077 = vmatprep.subr.mxu0 0.0
    %2078 = vmatpush1.msra.mxu0 %v37
    %2079 = vmatprep.subr.mxu0 0.0
    %2080 = vmatpush1.msra.mxu0 %v38
    %2081 = vmatprep.subr.mxu0 0.0
    %2082 = vmatpush1.msra.mxu0 %v39
    %2083 = vmatprep.subr.mxu0 0.0
    %2084 = vmatpush1.msra.mxu0 %v40
    %2085 = vmatprep.subr.mxu0 0.0
    %2086 = vmatpush1.msra.mxu0 %v41
    %2087 = vmatprep.subr.mxu0 0.0
    %2088 = vmatpush1.msra.mxu0 %v42
    %2089 = vmatprep.subr.mxu0 0.0
    %2090 = vmatpush1.msra.mxu0 %v43
    %2091 = vmatprep.subr.mxu0 0.0
    %2092 = vmatpush1.msra.mxu0 %v44
    %2093 = vmatprep.subr.mxu0 0.0
    %2094 = vmatpush1.msra.mxu0 %v45
    %2095 = vmatprep.subr.mxu0 0.0
    %2096 = vmatpush1.msra.mxu0 %v46
    %2097 = vmatprep.subr.mxu0 0.0
    %2098 = vmatpush1.msra.mxu0 %v47
    %2099 = vmatprep.subr.mxu0 0.0
    %2100 = vmatpush1.msra.mxu0 %v48
    %2101 = vmatprep.subr.mxu0 0.0
    %2102 = vmatpush1.msra.mxu0 %v49
    %2103 = vmatprep.subr.mxu0 0.0
    %2104 = vmatpush1.msra.mxu0 %v50
    %2105 = vmatprep.subr.mxu0 0.0
    %2106 = vmatpush1.msra.mxu0 0.0
    %2107 = vmatprep.subr.mxu0 0.0
    %2108 = vmatpush1.msra.mxu0 0.0
    %2109 = vmatprep.subr.mxu0 0.0
    %2110 = vmatpush1.msra.mxu0 0.0
    %2111 = vmatprep.subr.mxu0 0.0
    %2112 = vmatpush1.msra.mxu0 0.0
    %2113 = vmatprep.subr.mxu0 0.0
    %2114 = vmatpush1.msra.mxu0 0.0
    %2115 = vmatprep.subr.mxu0 0.0
    %2116 = vmatpush1.msra.mxu0 0.0
    %2117 = vmatprep.subr.mxu0 0.0
    %2118 = vmatpush1.msra.mxu0 0.0
    %2119 = vmatprep.subr.mxu0 0.0
    %2120 = vmatpush1.msra.mxu0 0.0
    %2121 = vmatprep.subr.mxu0 0.0
    %2122 = vmatpush1.msra.mxu0 0.0
    %2123 = vmatprep.subr.mxu0 0.0
    %2124 = vmatpush1.msra.mxu0 0.0
    %2125 = vmatprep.subr.mxu0 0.0
    %2126 = vmatpush1.msra.mxu0 0.0
    %2127 = vmatprep.subr.mxu0 0.0
    %2128 = vmatpush1.msra.mxu0 0.0
    %2129 = vmatprep.subr.mxu0 0.0
    %2130 = vmatpush1.msra.mxu0 0.0
    %2131 = vmatprep.subr.mxu0 0.0
    %2132 = vmatpush1.msra.mxu0 0.0
    %2133 = vmatprep.subr.mxu0 0.0
    %2134 = vmatpush1.msra.mxu0 0.0
    %2135 = vmatprep.subr.mxu0 0.0
    %2136 = vmatpush1.msra.mxu0 0.0
    %2137 = vmatprep.mubr.f32.mxu0 0.0
    %2138 = vmatmul.mubr.f32.gmra.mrb[0].mxu0 %v2072
    %v2139 = vpop.f32.mrb[0].mxu0
    %v2140 = vadd.f32 %v58, %v2139
    %v2141 = vpop.f32.mrb[0].mxu0
    %2142 = vdwg.mxu0
    %v2143 = vmax.f32 %v2140, 0.0
    %s2144 = scalar_lea.vmem [#allocation2], 832
    %v2145 = vld [vmem:[%s2144] sm:$0xff]
    %v2146 = vld [vmem:[%s2144 + $0x8] sm:$0xff]
    %v2147 = vld [vmem:[%s2144 + $0x10] sm:$0xff]
    %v2148 = vld [vmem:[%s2144 + $0x18] sm:$0xff]
    %v2149 = vld [vmem:[%s2144 + $0x20] sm:$0xff]
    %v2150 = vld [vmem:[%s2144 + $0x28] sm:$0xff]
    %v2151 = vld [vmem:[%s2144 + $0x30] sm:$0xff]
    %v2152 = vld [vmem:[%s2144 + $0x38] sm:$0xff]
    %v2154 = vsel %vm220, %v2143, 0
    %2156 = vmatprep.subr.mxu0 0.0
    %2157 = vmatpush1.msra.mxu0 %v2145
    %2158 = vmatprep.subr.mxu0 0.0
    %2159 = vmatpush1.msra.mxu0 %v2146
    %2160 = vmatprep.subr.mxu0 0.0
    %2161 = vmatpush1.msra.mxu0 %v2147
    %2162 = vmatprep.subr.mxu0 0.0
    %2163 = vmatpush1.msra.mxu0 %v2148
    %2164 = vmatprep.subr.mxu0 0.0
    %2165 = vmatpush1.msra.mxu0 %v2149
    %2166 = vmatprep.subr.mxu0 0.0
    %2167 = vmatpush1.msra.mxu0 %v2150
    %2168 = vmatprep.subr.mxu0 0.0
    %2169 = vmatpush1.msra.mxu0 %v2151
    %2170 = vmatprep.subr.mxu0 0.0
    %2171 = vmatpush1.msra.mxu0 %v2152
    %2172 = vmatprep.subr.mxu0 0.0
    %2173 = vmatpush1.msra.mxu0 0.0
    %2174 = vmatprep.subr.mxu0 0.0
    %2175 = vmatpush1.msra.mxu0 0.0
    %2176 = vmatprep.subr.mxu0 0.0
    %2177 = vmatpush1.msra.mxu0 0.0
    %2178 = vmatprep.subr.mxu0 0.0
    %2179 = vmatpush1.msra.mxu0 0.0
    %2180 = vmatprep.subr.mxu0 0.0
    %2181 = vmatpush1.msra.mxu0 0.0
    %2182 = vmatprep.subr.mxu0 0.0
    %2183 = vmatpush1.msra.mxu0 0.0
    %2184 = vmatprep.subr.mxu0 0.0
    %2185 = vmatpush1.msra.mxu0 0.0
    %2186 = vmatprep.subr.mxu0 0.0
    %2187 = vmatpush1.msra.mxu0 0.0
    %2188 = vmatprep.subr.mxu0 0.0
    %2189 = vmatpush1.msra.mxu0 0.0
    %2190 = vmatprep.subr.mxu0 0.0
    %2191 = vmatpush1.msra.mxu0 0.0
    %2192 = vmatprep.subr.mxu0 0.0
    %2193 = vmatpush1.msra.mxu0 0.0
    %2194 = vmatprep.subr.mxu0 0.0
    %2195 = vmatpush1.msra.mxu0 0.0
    %2196 = vmatprep.subr.mxu0 0.0
    %2197 = vmatpush1.msra.mxu0 0.0
    %2198 = vmatprep.subr.mxu0 0.0
    %2199 = vmatpush1.msra.mxu0 0.0
    %2200 = vmatprep.subr.mxu0 0.0
    %2201 = vmatpush1.msra.mxu0 0.0
    %2202 = vmatprep.subr.mxu0 0.0
    %2203 = vmatpush1.msra.mxu0 0.0
    %2204 = vmatprep.subr.mxu0 0.0
    %2205 = vmatpush1.msra.mxu0 0.0
    %2206 = vmatprep.subr.mxu0 0.0
    %2207 = vmatpush1.msra.mxu0 0.0
    %2208 = vmatprep.subr.mxu0 0.0
    %2209 = vmatpush1.msra.mxu0 0.0
    %2210 = vmatprep.subr.mxu0 0.0
    %2211 = vmatpush1.msra.mxu0 0.0
    %2212 = vmatprep.subr.mxu0 0.0
    %2213 = vmatpush1.msra.mxu0 0.0
    %2214 = vmatprep.subr.mxu0 0.0
    %2215 = vmatpush1.msra.mxu0 0.0
    %2216 = vmatprep.subr.mxu0 0.0
    %2217 = vmatpush1.msra.mxu0 0.0
    %2218 = vmatprep.subr.mxu0 0.0
    %2219 = vmatpush1.msra.mxu0 0.0
    %2220 = vmatprep.mubr.f32.mxu0 0.0
    %2221 = vmatmul.mubr.f32.gmra.mrb[0].mxu0 %v2154
    %v2222 = vpop.f32.mrb[0].mxu0
    %v2223 = vadd.f32 0.0, %v2222
    %v2224 = vpop.f32.mrb[0].mxu0
    %2225 = vdwg.mxu0
    %v2226 = vadd.f32 %v2071, %v2223
    %v2227 = vld [vmem:[%s0 + $0x1c] sm:$0x3]
    %2228 = vmatprep.subr.mxu0 0.0
    %2229 = vmatpush1.msra.mxu0 %v35
    %2230 = vmatprep.subr.mxu0 0.0
    %2231 = vmatpush1.msra.mxu0 %v36
    %2232 = vmatprep.subr.mxu0 0.0
    %2233 = vmatpush1.msra.mxu0 %v37
    %2234 = vmatprep.subr.mxu0 0.0
    %2235 = vmatpush1.msra.mxu0 %v38
    %2236 = vmatprep.subr.mxu0 0.0
    %2237 = vmatpush1.msra.mxu0 %v39
    %2238 = vmatprep.subr.mxu0 0.0
    %2239 = vmatpush1.msra.mxu0 %v40
    %2240 = vmatprep.subr.mxu0 0.0
    %2241 = vmatpush1.msra.mxu0 %v41
    %2242 = vmatprep.subr.mxu0 0.0
    %2243 = vmatpush1.msra.mxu0 %v42
    %2244 = vmatprep.subr.mxu0 0.0
    %2245 = vmatpush1.msra.mxu0 %v43
    %2246 = vmatprep.subr.mxu0 0.0
    %2247 = vmatpush1.msra.mxu0 %v44
    %2248 = vmatprep.subr.mxu0 0.0
    %2249 = vmatpush1.msra.mxu0 %v45
    %2250 = vmatprep.subr.mxu0 0.0
    %2251 = vmatpush1.msra.mxu0 %v46
    %2252 = vmatprep.subr.mxu0 0.0
    %2253 = vmatpush1.msra.mxu0 %v47
    %2254 = vmatprep.subr.mxu0 0.0
    %2255 = vmatpush1.msra.mxu0 %v48
    %2256 = vmatprep.subr.mxu0 0.0
    %2257 = vmatpush1.msra.mxu0 %v49
    %2258 = vmatprep.subr.mxu0 0.0
    %2259 = vmatpush1.msra.mxu0 %v50
    %2260 = vmatprep.subr.mxu0 0.0
    %2261 = vmatpush1.msra.mxu0 0.0
    %2262 = vmatprep.subr.mxu0 0.0
    %2263 = vmatpush1.msra.mxu0 0.0
    %2264 = vmatprep.subr.mxu0 0.0
    %2265 = vmatpush1.msra.mxu0 0.0
    %2266 = vmatprep.subr.mxu0 0.0
    %2267 = vmatpush1.msra.mxu0 0.0
    %2268 = vmatprep.subr.mxu0 0.0
    %2269 = vmatpush1.msra.mxu0 0.0
    %2270 = vmatprep.subr.mxu0 0.0
    %2271 = vmatpush1.msra.mxu0 0.0
    %2272 = vmatprep.subr.mxu0 0.0
    %2273 = vmatpush1.msra.mxu0 0.0
    %2274 = vmatprep.subr.mxu0 0.0
    %2275 = vmatpush1.msra.mxu0 0.0
    %2276 = vmatprep.subr.mxu0 0.0
    %2277 = vmatpush1.msra.mxu0 0.0
    %2278 = vmatprep.subr.mxu0 0.0
    %2279 = vmatpush1.msra.mxu0 0.0
    %2280 = vmatprep.subr.mxu0 0.0
    %2281 = vmatpush1.msra.mxu0 0.0
    %2282 = vmatprep.subr.mxu0 0.0
    %2283 = vmatpush1.msra.mxu0 0.0
    %2284 = vmatprep.subr.mxu0 0.0
    %2285 = vmatpush1.msra.mxu0 0.0
    %2286 = vmatprep.subr.mxu0 0.0
    %2287 = vmatpush1.msra.mxu0 0.0
    %2288 = vmatprep.subr.mxu0 0.0
    %2289 = vmatpush1.msra.mxu0 0.0
    %2290 = vmatprep.subr.mxu0 0.0
    %2291 = vmatpush1.msra.mxu0 0.0
    %2292 = vmatprep.mubr.f32.mxu0 0.0
    %2293 = vmatmul.mubr.f32.gmra.mrb[0].mxu0 %v2227
    %v2294 = vpop.f32.mrb[0].mxu0
    %v2295 = vadd.f32 %v58, %v2294
    %v2296 = vpop.f32.mrb[0].mxu0
    %2297 = vdwg.mxu0
    %v2298 = vmax.f32 %v2295, 0.0
    %s2299 = scalar_lea.vmem [#allocation2], 896
    %v2300 = vld [vmem:[%s2299] sm:$0xff]
    %v2301 = vld [vmem:[%s2299 + $0x8] sm:$0xff]
    %v2302 = vld [vmem:[%s2299 + $0x10] sm:$0xff]
    %v2303 = vld [vmem:[%s2299 + $0x18] sm:$0xff]
    %v2304 = vld [vmem:[%s2299 + $0x20] sm:$0xff]
    %v2305 = vld [vmem:[%s2299 + $0x28] sm:$0xff]
    %v2306 = vld [vmem:[%s2299 + $0x30] sm:$0xff]
    %v2307 = vld [vmem:[%s2299 + $0x38] sm:$0xff]
    %v2309 = vsel %vm220, %v2298, 0
    %2311 = vmatprep.subr.mxu0 0.0
    %2312 = vmatpush1.msra.mxu0 %v2300
    %2313 = vmatprep.subr.mxu0 0.0
    %2314 = vmatpush1.msra.mxu0 %v2301
    %2315 = vmatprep.subr.mxu0 0.0
    %2316 = vmatpush1.msra.mxu0 %v2302
    %2317 = vmatprep.subr.mxu0 0.0
    %2318 = vmatpush1.msra.mxu0 %v2303
    %2319 = vmatprep.subr.mxu0 0.0
    %2320 = vmatpush1.msra.mxu0 %v2304
    %2321 = vmatprep.subr.mxu0 0.0
    %2322 = vmatpush1.msra.mxu0 %v2305
    %2323 = vmatprep.subr.mxu0 0.0
    %2324 = vmatpush1.msra.mxu0 %v2306
    %2325 = vmatprep.subr.mxu0 0.0
    %2326 = vmatpush1.msra.mxu0 %v2307
    %2327 = vmatprep.subr.mxu0 0.0
    %2328 = vmatpush1.msra.mxu0 0.0
    %2329 = vmatprep.subr.mxu0 0.0
    %2330 = vmatpush1.msra.mxu0 0.0
    %2331 = vmatprep.subr.mxu0 0.0
    %2332 = vmatpush1.msra.mxu0 0.0
    %2333 = vmatprep.subr.mxu0 0.0
    %2334 = vmatpush1.msra.mxu0 0.0
    %2335 = vmatprep.subr.mxu0 0.0
    %2336 = vmatpush1.msra.mxu0 0.0
    %2337 = vmatprep.subr.mxu0 0.0
    %2338 = vmatpush1.msra.mxu0 0.0
    %2339 = vmatprep.subr.mxu0 0.0
    %2340 = vmatpush1.msra.mxu0 0.0
    %2341 = vmatprep.subr.mxu0 0.0
    %2342 = vmatpush1.msra.mxu0 0.0
    %2343 = vmatprep.subr.mxu0 0.0
    %2344 = vmatpush1.msra.mxu0 0.0
    %2345 = vmatprep.subr.mxu0 0.0
    %2346 = vmatpush1.msra.mxu0 0.0
    %2347 = vmatprep.subr.mxu0 0.0
    %2348 = vmatpush1.msra.mxu0 0.0
    %2349 = vmatprep.subr.mxu0 0.0
    %2350 = vmatpush1.msra.mxu0 0.0
    %2351 = vmatprep.subr.mxu0 0.0
    %2352 = vmatpush1.msra.mxu0 0.0
    %2353 = vmatprep.subr.mxu0 0.0
    %2354 = vmatpush1.msra.mxu0 0.0
    %2355 = vmatprep.subr.mxu0 0.0
    %2356 = vmatpush1.msra.mxu0 0.0
    %2357 = vmatprep.subr.mxu0 0.0
    %2358 = vmatpush1.msra.mxu0 0.0
    %2359 = vmatprep.subr.mxu0 0.0
    %2360 = vmatpush1.msra.mxu0 0.0
    %2361 = vmatprep.subr.mxu0 0.0
    %2362 = vmatpush1.msra.mxu0 0.0
    %2363 = vmatprep.subr.mxu0 0.0
    %2364 = vmatpush1.msra.mxu0 0.0
    %2365 = vmatprep.subr.mxu0 0.0
    %2366 = vmatpush1.msra.mxu0 0.0
    %2367 = vmatprep.subr.mxu0 0.0
    %2368 = vmatpush1.msra.mxu0 0.0
    %2369 = vmatprep.subr.mxu0 0.0
    %2370 = vmatpush1.msra.mxu0 0.0
    %2371 = vmatprep.subr.mxu0 0.0
    %2372 = vmatpush1.msra.mxu0 0.0
    %2373 = vmatprep.subr.mxu0 0.0
    %2374 = vmatpush1.msra.mxu0 0.0
    %2375 = vmatprep.mubr.f32.mxu0 0.0
    %2376 = vmatmul.mubr.f32.gmra.mrb[0].mxu0 %v2309
    %v2377 = vpop.f32.mrb[0].mxu0
    %v2378 = vadd.f32 0.0, %v2377
    %v2379 = vpop.f32.mrb[0].mxu0
    %2380 = vdwg.mxu0
    %v2381 = vadd.f32 %v2226, %v2378
    %v2382 = vld [vmem:[%s0 + $0x1e] sm:$0x3]
    %2383 = vmatprep.subr.mxu0 0.0
    %2384 = vmatpush1.msra.mxu0 %v35
    %2385 = vmatprep.subr.mxu0 0.0
    %2386 = vmatpush1.msra.mxu0 %v36
    %2387 = vmatprep.subr.mxu0 0.0
    %2388 = vmatpush1.msra.mxu0 %v37
    %2389 = vmatprep.subr.mxu0 0.0
    %2390 = vmatpush1.msra.mxu0 %v38
    %2391 = vmatprep.subr.mxu0 0.0
    %2392 = vmatpush1.msra.mxu0 %v39
    %2393 = vmatprep.subr.mxu0 0.0
    %2394 = vmatpush1.msra.mxu0 %v40
    %2395 = vmatprep.subr.mxu0 0.0
    %2396 = vmatpush1.msra.mxu0 %v41
    %2397 = vmatprep.subr.mxu0 0.0
    %2398 = vmatpush1.msra.mxu0 %v42
    %2399 = vmatprep.subr.mxu0 0.0
    %2400 = vmatpush1.msra.mxu0 %v43
    %2401 = vmatprep.subr.mxu0 0.0
    %2402 = vmatpush1.msra.mxu0 %v44
    %2403 = vmatprep.subr.mxu0 0.0
    %2404 = vmatpush1.msra.mxu0 %v45
    %2405 = vmatprep.subr.mxu0 0.0
    %2406 = vmatpush1.msra.mxu0 %v46
    %2407 = vmatprep.subr.mxu0 0.0
    %2408 = vmatpush1.msra.mxu0 %v47
    %2409 = vmatprep.subr.mxu0 0.0
    %2410 = vmatpush1.msra.mxu0 %v48
    %2411 = vmatprep.subr.mxu0 0.0
    %2412 = vmatpush1.msra.mxu0 %v49
    %2413 = vmatprep.subr.mxu0 0.0
    %2414 = vmatpush1.msra.mxu0 %v50
    %2415 = vmatprep.subr.mxu0 0.0
    %2416 = vmatpush1.msra.mxu0 0.0
    %2417 = vmatprep.subr.mxu0 0.0
    %2418 = vmatpush1.msra.mxu0 0.0
    %2419 = vmatprep.subr.mxu0 0.0
    %2420 = vmatpush1.msra.mxu0 0.0
    %2421 = vmatprep.subr.mxu0 0.0
    %2422 = vmatpush1.msra.mxu0 0.0
    %2423 = vmatprep.subr.mxu0 0.0
    %2424 = vmatpush1.msra.mxu0 0.0
    %2425 = vmatprep.subr.mxu0 0.0
    %2426 = vmatpush1.msra.mxu0 0.0
    %2427 = vmatprep.subr.mxu0 0.0
    %2428 = vmatpush1.msra.mxu0 0.0
    %2429 = vmatprep.subr.mxu0 0.0
    %2430 = vmatpush1.msra.mxu0 0.0
    %2431 = vmatprep.subr.mxu0 0.0
    %2432 = vmatpush1.msra.mxu0 0.0
    %2433 = vmatprep.subr.mxu0 0.0
    %2434 = vmatpush1.msra.mxu0 0.0
    %2435 = vmatprep.subr.mxu0 0.0
    %2436 = vmatpush1.msra.mxu0 0.0
    %2437 = vmatprep.subr.mxu0 0.0
    %2438 = vmatpush1.msra.mxu0 0.0
    %2439 = vmatprep.subr.mxu0 0.0
    %2440 = vmatpush1.msra.mxu0 0.0
    %2441 = vmatprep.subr.mxu0 0.0
    %2442 = vmatpush1.msra.mxu0 0.0
    %2443 = vmatprep.subr.mxu0 0.0
    %2444 = vmatpush1.msra.mxu0 0.0
    %2445 = vmatprep.subr.mxu0 0.0
    %2446 = vmatpush1.msra.mxu0 0.0
    %2447 = vmatprep.mubr.f32.mxu0 0.0
    %2448 = vmatmul.mubr.f32.gmra.mrb[0].mxu0 %v2382
    %v2449 = vpop.f32.mrb[0].mxu0
    %v2450 = vadd.f32 %v58, %v2449
    %v2451 = vpop.f32.mrb[0].mxu0
    %2452 = vdwg.mxu0
    %v2453 = vmax.f32 %v2450, 0.0
    %s2454 = scalar_lea.vmem [#allocation2], 960
    %v2455 = vld [vmem:[%s2454] sm:$0xff]
    %v2456 = vld [vmem:[%s2454 + $0x8] sm:$0xff]
    %v2457 = vld [vmem:[%s2454 + $0x10] sm:$0xff]
    %v2458 = vld [vmem:[%s2454 + $0x18] sm:$0xff]
    %v2459 = vld [vmem:[%s2454 + $0x20] sm:$0xff]
    %v2460 = vld [vmem:[%s2454 + $0x28] sm:$0xff]
    %v2461 = vld [vmem:[%s2454 + $0x30] sm:$0xff]
    %v2462 = vld [vmem:[%s2454 + $0x38] sm:$0xff]
    %v2464 = vsel %vm220, %v2453, 0
    %2466 = vmatprep.subr.mxu0 0.0
    %2467 = vmatpush1.msra.mxu0 %v2455
    %2468 = vmatprep.subr.mxu0 0.0
    %2469 = vmatpush1.msra.mxu0 %v2456
    %2470 = vmatprep.subr.mxu0 0.0
    %2471 = vmatpush1.msra.mxu0 %v2457
    %2472 = vmatprep.subr.mxu0 0.0
    %2473 = vmatpush1.msra.mxu0 %v2458
    %2474 = vmatprep.subr.mxu0 0.0
    %2475 = vmatpush1.msra.mxu0 %v2459
    %2476 = vmatprep.subr.mxu0 0.0
    %2477 = vmatpush1.msra.mxu0 %v2460
    %2478 = vmatprep.subr.mxu0 0.0
    %2479 = vmatpush1.msra.mxu0 %v2461
    %2480 = vmatprep.subr.mxu0 0.0
    %2481 = vmatpush1.msra.mxu0 %v2462
    %2482 = vmatprep.subr.mxu0 0.0
    %2483 = vmatpush1.msra.mxu0 0.0
    %2484 = vmatprep.subr.mxu0 0.0
    %2485 = vmatpush1.msra.mxu0 0.0
    %2486 = vmatprep.subr.mxu0 0.0
    %2487 = vmatpush1.msra.mxu0 0.0
    %2488 = vmatprep.subr.mxu0 0.0
    %2489 = vmatpush1.msra.mxu0 0.0
    %2490 = vmatprep.subr.mxu0 0.0
    %2491 = vmatpush1.msra.mxu0 0.0
    %2492 = vmatprep.subr.mxu0 0.0
    %2493 = vmatpush1.msra.mxu0 0.0
    %2494 = vmatprep.subr.mxu0 0.0
    %2495 = vmatpush1.msra.mxu0 0.0
    %2496 = vmatprep.subr.mxu0 0.0
    %2497 = vmatpush1.msra.mxu0 0.0
    %2498 = vmatprep.subr.mxu0 0.0
    %2499 = vmatpush1.msra.mxu0 0.0
    %2500 = vmatprep.subr.mxu0 0.0
    %2501 = vmatpush1.msra.mxu0 0.0
    %2502 = vmatprep.subr.mxu0 0.0
    %2503 = vmatpush1.msra.mxu0 0.0
    %2504 = vmatprep.subr.mxu0 0.0
    %2505 = vmatpush1.msra.mxu0 0.0
    %2506 = vmatprep.subr.mxu0 0.0
    %2507 = vmatpush1.msra.mxu0 0.0
    %2508 = vmatprep.subr.mxu0 0.0
    %2509 = vmatpush1.msra.mxu0 0.0
    %2510 = vmatprep.subr.mxu0 0.0
    %2511 = vmatpush1.msra.mxu0 0.0
    %2512 = vmatprep.subr.mxu0 0.0
    %2513 = vmatpush1.msra.mxu0 0.0
    %2514 = vmatprep.subr.mxu0 0.0
    %2515 = vmatpush1.msra.mxu0 0.0
    %2516 = vmatprep.subr.mxu0 0.0
    %2517 = vmatpush1.msra.mxu0 0.0
    %2518 = vmatprep.subr.mxu0 0.0
    %2519 = vmatpush1.msra.mxu0 0.0
    %2520 = vmatprep.subr.mxu0 0.0
    %2521 = vmatpush1.msra.mxu0 0.0
    %2522 = vmatprep.subr.mxu0 0.0
    %2523 = vmatpush1.msra.mxu0 0.0
    %2524 = vmatprep.subr.mxu0 0.0
    %2525 = vmatpush1.msra.mxu0 0.0
    %2526 = vmatprep.subr.mxu0 0.0
    %2527 = vmatpush1.msra.mxu0 0.0
    %2528 = vmatprep.subr.mxu0 0.0
    %2529 = vmatpush1.msra.mxu0 0.0
    %2530 = vmatprep.mubr.f32.mxu0 0.0
    %2531 = vmatmul.mubr.f32.gmra.mrb[0].mxu0 %v2464
    %v2532 = vpop.f32.mrb[0].mxu0
    %v2533 = vadd.f32 0.0, %v2532
    %v2534 = vpop.f32.mrb[0].mxu0
    %2535 = vdwg.mxu0
    %v2536 = vadd.f32 %v2381, %v2533
    %v2537 = vld [vmem:[%s0 + $0x20] sm:$0x3]
    %2538 = vmatprep.subr.mxu0 0.0
    %2539 = vmatpush1.msra.mxu0 %v35
    %2540 = vmatprep.subr.mxu0 0.0
    %2541 = vmatpush1.msra.mxu0 %v36
    %2542 = vmatprep.subr.mxu0 0.0
    %2543 = vmatpush1.msra.mxu0 %v37
    %2544 = vmatprep.subr.mxu0 0.0
    %2545 = vmatpush1.msra.mxu0 %v38
    %2546 = vmatprep.subr.mxu0 0.0
    %2547 = vmatpush1.msra.mxu0 %v39
    %2548 = vmatprep.subr.mxu0 0.0
    %2549 = vmatpush1.msra.mxu0 %v40
    %2550 = vmatprep.subr.mxu0 0.0
    %2551 = vmatpush1.msra.mxu0 %v41
    %2552 = vmatprep.subr.mxu0 0.0
    %2553 = vmatpush1.msra.mxu0 %v42
    %2554 = vmatprep.subr.mxu0 0.0
    %2555 = vmatpush1.msra.mxu0 %v43
    %2556 = vmatprep.subr.mxu0 0.0
    %2557 = vmatpush1.msra.mxu0 %v44
    %2558 = vmatprep.subr.mxu0 0.0
    %2559 = vmatpush1.msra.mxu0 %v45
    %2560 = vmatprep.subr.mxu0 0.0
    %2561 = vmatpush1.msra.mxu0 %v46
    %2562 = vmatprep.subr.mxu0 0.0
    %2563 = vmatpush1.msra.mxu0 %v47
    %2564 = vmatprep.subr.mxu0 0.0
    %2565 = vmatpush1.msra.mxu0 %v48
    %2566 = vmatprep.subr.mxu0 0.0
    %2567 = vmatpush1.msra.mxu0 %v49
    %2568 = vmatprep.subr.mxu0 0.0
    %2569 = vmatpush1.msra.mxu0 %v50
    %2570 = vmatprep.subr.mxu0 0.0
    %2571 = vmatpush1.msra.mxu0 0.0
    %2572 = vmatprep.subr.mxu0 0.0
    %2573 = vmatpush1.msra.mxu0 0.0
    %2574 = vmatprep.subr.mxu0 0.0
    %2575 = vmatpush1.msra.mxu0 0.0
    %2576 = vmatprep.subr.mxu0 0.0
    %2577 = vmatpush1.msra.mxu0 0.0
    %2578 = vmatprep.subr.mxu0 0.0
    %2579 = vmatpush1.msra.mxu0 0.0
    %2580 = vmatprep.subr.mxu0 0.0
    %2581 = vmatpush1.msra.mxu0 0.0
    %2582 = vmatprep.subr.mxu0 0.0
    %2583 = vmatpush1.msra.mxu0 0.0
    %2584 = vmatprep.subr.mxu0 0.0
    %2585 = vmatpush1.msra.mxu0 0.0
    %2586 = vmatprep.subr.mxu0 0.0
    %2587 = vmatpush1.msra.mxu0 0.0
    %2588 = vmatprep.subr.mxu0 0.0
    %2589 = vmatpush1.msra.mxu0 0.0
    %2590 = vmatprep.subr.mxu0 0.0
    %2591 = vmatpush1.msra.mxu0 0.0
    %2592 = vmatprep.subr.mxu0 0.0
    %2593 = vmatpush1.msra.mxu0 0.0
    %2594 = vmatprep.subr.mxu0 0.0
    %2595 = vmatpush1.msra.mxu0 0.0
    %2596 = vmatprep.subr.mxu0 0.0
    %2597 = vmatpush1.msra.mxu0 0.0
    %2598 = vmatprep.subr.mxu0 0.0
    %2599 = vmatpush1.msra.mxu0 0.0
    %2600 = vmatprep.subr.mxu0 0.0
    %2601 = vmatpush1.msra.mxu0 0.0
    %2602 = vmatprep.mubr.f32.mxu0 0.0
    %2603 = vmatmul.mubr.f32.gmra.mrb[0].mxu0 %v2537
    %v2604 = vpop.f32.mrb[0].mxu0
    %v2605 = vadd.f32 %v58, %v2604
    %v2606 = vpop.f32.mrb[0].mxu0
    %2607 = vdwg.mxu0
    %v2608 = vmax.f32 %v2605, 0.0
    %s2609 = scalar_lea.vmem [#allocation2], 1024
    %v2610 = vld [vmem:[%s2609] sm:$0xff]
    %v2611 = vld [vmem:[%s2609 + $0x8] sm:$0xff]
    %v2612 = vld [vmem:[%s2609 + $0x10] sm:$0xff]
    %v2613 = vld [vmem:[%s2609 + $0x18] sm:$0xff]
    %v2614 = vld [vmem:[%s2609 + $0x20] sm:$0xff]
    %v2615 = vld [vmem:[%s2609 + $0x28] sm:$0xff]
    %v2616 = vld [vmem:[%s2609 + $0x30] sm:$0xff]
    %v2617 = vld [vmem:[%s2609 + $0x38] sm:$0xff]
    %v2619 = vsel %vm220, %v2608, 0
    %2621 = vmatprep.subr.mxu0 0.0
    %2622 = vmatpush1.msra.mxu0 %v2610
    %2623 = vmatprep.subr.mxu0 0.0
    %2624 = vmatpush1.msra.mxu0 %v2611
    %2625 = vmatprep.subr.mxu0 0.0
    %2626 = vmatpush1.msra.mxu0 %v2612
    %2627 = vmatprep.subr.mxu0 0.0
    %2628 = vmatpush1.msra.mxu0 %v2613
    %2629 = vmatprep.subr.mxu0 0.0
    %2630 = vmatpush1.msra.mxu0 %v2614
    %2631 = vmatprep.subr.mxu0 0.0
    %2632 = vmatpush1.msra.mxu0 %v2615
    %2633 = vmatprep.subr.mxu0 0.0
    %2634 = vmatpush1.msra.mxu0 %v2616
    %2635 = vmatprep.subr.mxu0 0.0
    %2636 = vmatpush1.msra.mxu0 %v2617
    %2637 = vmatprep.subr.mxu0 0.0
    %2638 = vmatpush1.msra.mxu0 0.0
    %2639 = vmatprep.subr.mxu0 0.0
    %2640 = vmatpush1.msra.mxu0 0.0
    %2641 = vmatprep.subr.mxu0 0.0
    %2642 = vmatpush1.msra.mxu0 0.0
    %2643 = vmatprep.subr.mxu0 0.0
    %2644 = vmatpush1.msra.mxu0 0.0
    %2645 = vmatprep.subr.mxu0 0.0
    %2646 = vmatpush1.msra.mxu0 0.0
    %2647 = vmatprep.subr.mxu0 0.0
    %2648 = vmatpush1.msra.mxu0 0.0
    %2649 = vmatprep.subr.mxu0 0.0
    %2650 = vmatpush1.msra.mxu0 0.0
    %2651 = vmatprep.subr.mxu0 0.0
    %2652 = vmatpush1.msra.mxu0 0.0
    %2653 = vmatprep.subr.mxu0 0.0
    %2654 = vmatpush1.msra.mxu0 0.0
    %2655 = vmatprep.subr.mxu0 0.0
    %2656 = vmatpush1.msra.mxu0 0.0
    %2657 = vmatprep.subr.mxu0 0.0
    %2658 = vmatpush1.msra.mxu0 0.0
    %2659 = vmatprep.subr.mxu0 0.0
    %2660 = vmatpush1.msra.mxu0 0.0
    %2661 = vmatprep.subr.mxu0 0.0
    %2662 = vmatpush1.msra.mxu0 0.0
    %2663 = vmatprep.subr.mxu0 0.0
    %2664 = vmatpush1.msra.mxu0 0.0
    %2665 = vmatprep.subr.mxu0 0.0
    %2666 = vmatpush1.msra.mxu0 0.0
    %2667 = vmatprep.subr.mxu0 0.0
    %2668 = vmatpush1.msra.mxu0 0.0
    %2669 = vmatprep.subr.mxu0 0.0
    %2670 = vmatpush1.msra.mxu0 0.0
    %2671 = vmatprep.subr.mxu0 0.0
    %2672 = vmatpush1.msra.mxu0 0.0
    %2673 = vmatprep.subr.mxu0 0.0
    %2674 = vmatpush1.msra.mxu0 0.0
    %2675 = vmatprep.subr.mxu0 0.0
    %2676 = vmatpush1.msra.mxu0 0.0
    %2677 = vmatprep.subr.mxu0 0.0
    %2678 = vmatpush1.msra.mxu0 0.0
    %2679 = vmatprep.subr.mxu0 0.0
    %2680 = vmatpush1.msra.mxu0 0.0
    %2681 = vmatprep.subr.mxu0 0.0
    %2682 = vmatpush1.msra.mxu0 0.0
    %2683 = vmatprep.subr.mxu0 0.0
    %2684 = vmatpush1.msra.mxu0 0.0
    %2685 = vmatprep.mubr.f32.mxu0 0.0
    %2686 = vmatmul.mubr.f32.gmra.mrb[0].mxu0 %v2619
    %v2687 = vpop.f32.mrb[0].mxu0
    %v2688 = vadd.f32 0.0, %v2687
    %v2689 = vpop.f32.mrb[0].mxu0
    %2690 = vdwg.mxu0
    %v2691 = vadd.f32 %v2536, %v2688
    %v2692 = vld [vmem:[%s0 + $0x22] sm:$0x3]
    %2693 = vmatprep.subr.mxu0 0.0
    %2694 = vmatpush1.msra.mxu0 %v35
    %2695 = vmatprep.subr.mxu0 0.0
    %2696 = vmatpush1.msra.mxu0 %v36
    %2697 = vmatprep.subr.mxu0 0.0
    %2698 = vmatpush1.msra.mxu0 %v37
    %2699 = vmatprep.subr.mxu0 0.0
    %2700 = vmatpush1.msra.mxu0 %v38
    %2701 = vmatprep.subr.mxu0 0.0
    %2702 = vmatpush1.msra.mxu0 %v39
    %2703 = vmatprep.subr.mxu0 0.0
    %2704 = vmatpush1.msra.mxu0 %v40
    %2705 = vmatprep.subr.mxu0 0.0
    %2706 = vmatpush1.msra.mxu0 %v41
    %2707 = vmatprep.subr.mxu0 0.0
    %2708 = vmatpush1.msra.mxu0 %v42
    %2709 = vmatprep.subr.mxu0 0.0
    %2710 = vmatpush1.msra.mxu0 %v43
    %2711 = vmatprep.subr.mxu0 0.0
    %2712 = vmatpush1.msra.mxu0 %v44
    %2713 = vmatprep.subr.mxu0 0.0
    %2714 = vmatpush1.msra.mxu0 %v45
    %2715 = vmatprep.subr.mxu0 0.0
    %2716 = vmatpush1.msra.mxu0 %v46
    %2717 = vmatprep.subr.mxu0 0.0
    %2718 = vmatpush1.msra.mxu0 %v47
    %2719 = vmatprep.subr.mxu0 0.0
    %2720 = vmatpush1.msra.mxu0 %v48
    %2721 = vmatprep.subr.mxu0 0.0
    %2722 = vmatpush1.msra.mxu0 %v49
    %2723 = vmatprep.subr.mxu0 0.0
    %2724 = vmatpush1.msra.mxu0 %v50
    %2725 = vmatprep.subr.mxu0 0.0
    %2726 = vmatpush1.msra.mxu0 0.0
    %2727 = vmatprep.subr.mxu0 0.0
    %2728 = vmatpush1.msra.mxu0 0.0
    %2729 = vmatprep.subr.mxu0 0.0
    %2730 = vmatpush1.msra.mxu0 0.0
    %2731 = vmatprep.subr.mxu0 0.0
    %2732 = vmatpush1.msra.mxu0 0.0
    %2733 = vmatprep.subr.mxu0 0.0
    %2734 = vmatpush1.msra.mxu0 0.0
    %2735 = vmatprep.subr.mxu0 0.0
    %2736 = vmatpush1.msra.mxu0 0.0
    %2737 = vmatprep.subr.mxu0 0.0
    %2738 = vmatpush1.msra.mxu0 0.0
    %2739 = vmatprep.subr.mxu0 0.0
    %2740 = vmatpush1.msra.mxu0 0.0
    %2741 = vmatprep.subr.mxu0 0.0
    %2742 = vmatpush1.msra.mxu0 0.0
    %2743 = vmatprep.subr.mxu0 0.0
    %2744 = vmatpush1.msra.mxu0 0.0
    %2745 = vmatprep.subr.mxu0 0.0
    %2746 = vmatpush1.msra.mxu0 0.0
    %2747 = vmatprep.subr.mxu0 0.0
    %2748 = vmatpush1.msra.mxu0 0.0
    %2749 = vmatprep.subr.mxu0 0.0
    %2750 = vmatpush1.msra.mxu0 0.0
    %2751 = vmatprep.subr.mxu0 0.0
    %2752 = vmatpush1.msra.mxu0 0.0
    %2753 = vmatprep.subr.mxu0 0.0
    %2754 = vmatpush1.msra.mxu0 0.0
    %2755 = vmatprep.subr.mxu0 0.0
    %2756 = vmatpush1.msra.mxu0 0.0
    %2757 = vmatprep.mubr.f32.mxu0 0.0
    %2758 = vmatmul.mubr.f32.gmra.mrb[0].mxu0 %v2692
    %v2759 = vpop.f32.mrb[0].mxu0
    %v2760 = vadd.f32 %v58, %v2759
    %v2761 = vpop.f32.mrb[0].mxu0
    %2762 = vdwg.mxu0
    %v2763 = vmax.f32 %v2760, 0.0
    %s2764 = scalar_lea.vmem [#allocation2], 1088
    %v2765 = vld [vmem:[%s2764] sm:$0xff]
    %v2766 = vld [vmem:[%s2764 + $0x8] sm:$0xff]
    %v2767 = vld [vmem:[%s2764 + $0x10] sm:$0xff]
    %v2768 = vld [vmem:[%s2764 + $0x18] sm:$0xff]
    %v2769 = vld [vmem:[%s2764 + $0x20] sm:$0xff]
    %v2770 = vld [vmem:[%s2764 + $0x28] sm:$0xff]
    %v2771 = vld [vmem:[%s2764 + $0x30] sm:$0xff]
    %v2772 = vld [vmem:[%s2764 + $0x38] sm:$0xff]
    %v2774 = vsel %vm220, %v2763, 0
    %2776 = vmatprep.subr.mxu0 0.0
    %2777 = vmatpush1.msra.mxu0 %v2765
    %2778 = vmatprep.subr.mxu0 0.0
    %2779 = vmatpush1.msra.mxu0 %v2766
    %2780 = vmatprep.subr.mxu0 0.0
    %2781 = vmatpush1.msra.mxu0 %v2767
    %2782 = vmatprep.subr.mxu0 0.0
    %2783 = vmatpush1.msra.mxu0 %v2768
    %2784 = vmatprep.subr.mxu0 0.0
    %2785 = vmatpush1.msra.mxu0 %v2769
    %2786 = vmatprep.subr.mxu0 0.0
    %2787 = vmatpush1.msra.mxu0 %v2770
    %2788 = vmatprep.subr.mxu0 0.0
    %2789 = vmatpush1.msra.mxu0 %v2771
    %2790 = vmatprep.subr.mxu0 0.0
    %2791 = vmatpush1.msra.mxu0 %v2772
    %2792 = vmatprep.subr.mxu0 0.0
    %2793 = vmatpush1.msra.mxu0 0.0
    %2794 = vmatprep.subr.mxu0 0.0
    %2795 = vmatpush1.msra.mxu0 0.0
    %2796 = vmatprep.subr.mxu0 0.0
    %2797 = vmatpush1.msra.mxu0 0.0
    %2798 = vmatprep.subr.mxu0 0.0
    %2799 = vmatpush1.msra.mxu0 0.0
    %2800 = vmatprep.subr.mxu0 0.0
    %2801 = vmatpush1.msra.mxu0 0.0
    %2802 = vmatprep.subr.mxu0 0.0
    %2803 = vmatpush1.msra.mxu0 0.0
    %2804 = vmatprep.subr.mxu0 0.0
    %2805 = vmatpush1.msra.mxu0 0.0
    %2806 = vmatprep.subr.mxu0 0.0
    %2807 = vmatpush1.msra.mxu0 0.0
    %2808 = vmatprep.subr.mxu0 0.0
    %2809 = vmatpush1.msra.mxu0 0.0
    %2810 = vmatprep.subr.mxu0 0.0
    %2811 = vmatpush1.msra.mxu0 0.0
    %2812 = vmatprep.subr.mxu0 0.0
    %2813 = vmatpush1.msra.mxu0 0.0
    %2814 = vmatprep.subr.mxu0 0.0
    %2815 = vmatpush1.msra.mxu0 0.0
    %2816 = vmatprep.subr.mxu0 0.0
    %2817 = vmatpush1.msra.mxu0 0.0
    %2818 = vmatprep.subr.mxu0 0.0
    %2819 = vmatpush1.msra.mxu0 0.0
    %2820 = vmatprep.subr.mxu0 0.0
    %2821 = vmatpush1.msra.mxu0 0.0
    %2822 = vmatprep.subr.mxu0 0.0
    %2823 = vmatpush1.msra.mxu0 0.0
    %2824 = vmatprep.subr.mxu0 0.0
    %2825 = vmatpush1.msra.mxu0 0.0
    %2826 = vmatprep.subr.mxu0 0.0
    %2827 = vmatpush1.msra.mxu0 0.0
    %2828 = vmatprep.subr.mxu0 0.0
    %2829 = vmatpush1.msra.mxu0 0.0
    %2830 = vmatprep.subr.mxu0 0.0
    %2831 = vmatpush1.msra.mxu0 0.0
    %2832 = vmatprep.subr.mxu0 0.0
    %2833 = vmatpush1.msra.mxu0 0.0
    %2834 = vmatprep.subr.mxu0 0.0
    %2835 = vmatpush1.msra.mxu0 0.0
    %2836 = vmatprep.subr.mxu0 0.0
    %2837 = vmatpush1.msra.mxu0 0.0
    %2838 = vmatprep.subr.mxu0 0.0
    %2839 = vmatpush1.msra.mxu0 0.0
    %2840 = vmatprep.mubr.f32.mxu0 0.0
    %2841 = vmatmul.mubr.f32.gmra.mrb[0].mxu0 %v2774
    %v2842 = vpop.f32.mrb[0].mxu0
    %v2843 = vadd.f32 0.0, %v2842
    %v2844 = vpop.f32.mrb[0].mxu0
    %2845 = vdwg.mxu0
    %v2846 = vadd.f32 %v2691, %v2843
    %v2847 = vld [vmem:[%s0 + $0x24] sm:$0x3]
    %2848 = vmatprep.subr.mxu0 0.0
    %2849 = vmatpush1.msra.mxu0 %v35
    %2850 = vmatprep.subr.mxu0 0.0
    %2851 = vmatpush1.msra.mxu0 %v36
    %2852 = vmatprep.subr.mxu0 0.0
    %2853 = vmatpush1.msra.mxu0 %v37
    %2854 = vmatprep.subr.mxu0 0.0
    %2855 = vmatpush1.msra.mxu0 %v38
    %2856 = vmatprep.subr.mxu0 0.0
    %2857 = vmatpush1.msra.mxu0 %v39
    %2858 = vmatprep.subr.mxu0 0.0
    %2859 = vmatpush1.msra.mxu0 %v40
    %2860 = vmatprep.subr.mxu0 0.0
    %2861 = vmatpush1.msra.mxu0 %v41
    %2862 = vmatprep.subr.mxu0 0.0
    %2863 = vmatpush1.msra.mxu0 %v42
    %2864 = vmatprep.subr.mxu0 0.0
    %2865 = vmatpush1.msra.mxu0 %v43
    %2866 = vmatprep.subr.mxu0 0.0
    %2867 = vmatpush1.msra.mxu0 %v44
    %2868 = vmatprep.subr.mxu0 0.0
    %2869 = vmatpush1.msra.mxu0 %v45
    %2870 = vmatprep.subr.mxu0 0.0
    %2871 = vmatpush1.msra.mxu0 %v46
    %2872 = vmatprep.subr.mxu0 0.0
    %2873 = vmatpush1.msra.mxu0 %v47
    %2874 = vmatprep.subr.mxu0 0.0
    %2875 = vmatpush1.msra.mxu0 %v48
    %2876 = vmatprep.subr.mxu0 0.0
    %2877 = vmatpush1.msra.mxu0 %v49
    %2878 = vmatprep.subr.mxu0 0.0
    %2879 = vmatpush1.msra.mxu0 %v50
    %2880 = vmatprep.subr.mxu0 0.0
    %2881 = vmatpush1.msra.mxu0 0.0
    %2882 = vmatprep.subr.mxu0 0.0
    %2883 = vmatpush1.msra.mxu0 0.0
    %2884 = vmatprep.subr.mxu0 0.0
    %2885 = vmatpush1.msra.mxu0 0.0
    %2886 = vmatprep.subr.mxu0 0.0
    %2887 = vmatpush1.msra.mxu0 0.0
    %2888 = vmatprep.subr.mxu0 0.0
    %2889 = vmatpush1.msra.mxu0 0.0
    %2890 = vmatprep.subr.mxu0 0.0
    %2891 = vmatpush1.msra.mxu0 0.0
    %2892 = vmatprep.subr.mxu0 0.0
    %2893 = vmatpush1.msra.mxu0 0.0
    %2894 = vmatprep.subr.mxu0 0.0
    %2895 = vmatpush1.msra.mxu0 0.0
    %2896 = vmatprep.subr.mxu0 0.0
    %2897 = vmatpush1.msra.mxu0 0.0
    %2898 = vmatprep.subr.mxu0 0.0
    %2899 = vmatpush1.msra.mxu0 0.0
    %2900 = vmatprep.subr.mxu0 0.0
    %2901 = vmatpush1.msra.mxu0 0.0
    %2902 = vmatprep.subr.mxu0 0.0
    %2903 = vmatpush1.msra.mxu0 0.0
    %2904 = vmatprep.subr.mxu0 0.0
    %2905 = vmatpush1.msra.mxu0 0.0
    %2906 = vmatprep.subr.mxu0 0.0
    %2907 = vmatpush1.msra.mxu0 0.0
    %2908 = vmatprep.subr.mxu0 0.0
    %2909 = vmatpush1.msra.mxu0 0.0
    %2910 = vmatprep.subr.mxu0 0.0
    %2911 = vmatpush1.msra.mxu0 0.0
    %2912 = vmatprep.mubr.f32.mxu0 0.0
    %2913 = vmatmul.mubr.f32.gmra.mrb[0].mxu0 %v2847
    %v2914 = vpop.f32.mrb[0].mxu0
    %v2915 = vadd.f32 %v58, %v2914
    %v2916 = vpop.f32.mrb[0].mxu0
    %2917 = vdwg.mxu0
    %v2918 = vmax.f32 %v2915, 0.0
    %s2919 = scalar_lea.vmem [#allocation2], 1152
    %v2920 = vld [vmem:[%s2919] sm:$0xff]
    %v2921 = vld [vmem:[%s2919 + $0x8] sm:$0xff]
    %v2922 = vld [vmem:[%s2919 + $0x10] sm:$0xff]
    %v2923 = vld [vmem:[%s2919 + $0x18] sm:$0xff]
    %v2924 = vld [vmem:[%s2919 + $0x20] sm:$0xff]
    %v2925 = vld [vmem:[%s2919 + $0x28] sm:$0xff]
    %v2926 = vld [vmem:[%s2919 + $0x30] sm:$0xff]
    %v2927 = vld [vmem:[%s2919 + $0x38] sm:$0xff]
    %v2929 = vsel %vm220, %v2918, 0
    %2931 = vmatprep.subr.mxu0 0.0
    %2932 = vmatpush1.msra.mxu0 %v2920
    %2933 = vmatprep.subr.mxu0 0.0
    %2934 = vmatpush1.msra.mxu0 %v2921
    %2935 = vmatprep.subr.mxu0 0.0
    %2936 = vmatpush1.msra.mxu0 %v2922
    %2937 = vmatprep.subr.mxu0 0.0
    %2938 = vmatpush1.msra.mxu0 %v2923
    %2939 = vmatprep.subr.mxu0 0.0
    %2940 = vmatpush1.msra.mxu0 %v2924
    %2941 = vmatprep.subr.mxu0 0.0
    %2942 = vmatpush1.msra.mxu0 %v2925
    %2943 = vmatprep.subr.mxu0 0.0
    %2944 = vmatpush1.msra.mxu0 %v2926
    %2945 = vmatprep.subr.mxu0 0.0
    %2946 = vmatpush1.msra.mxu0 %v2927
    %2947 = vmatprep.subr.mxu0 0.0
    %2948 = vmatpush1.msra.mxu0 0.0
    %2949 = vmatprep.subr.mxu0 0.0
    %2950 = vmatpush1.msra.mxu0 0.0
    %2951 = vmatprep.subr.mxu0 0.0
    %2952 = vmatpush1.msra.mxu0 0.0
    %2953 = vmatprep.subr.mxu0 0.0
    %2954 = vmatpush1.msra.mxu0 0.0
    %2955 = vmatprep.subr.mxu0 0.0
    %2956 = vmatpush1.msra.mxu0 0.0
    %2957 = vmatprep.subr.mxu0 0.0
    %2958 = vmatpush1.msra.mxu0 0.0
    %2959 = vmatprep.subr.mxu0 0.0
    %2960 = vmatpush1.msra.mxu0 0.0
    %2961 = vmatprep.subr.mxu0 0.0
    %2962 = vmatpush1.msra.mxu0 0.0
    %2963 = vmatprep.subr.mxu0 0.0
    %2964 = vmatpush1.msra.mxu0 0.0
    %2965 = vmatprep.subr.mxu0 0.0
    %2966 = vmatpush1.msra.mxu0 0.0
    %2967 = vmatprep.subr.mxu0 0.0
    %2968 = vmatpush1.msra.mxu0 0.0
    %2969 = vmatprep.subr.mxu0 0.0
    %2970 = vmatpush1.msra.mxu0 0.0
    %2971 = vmatprep.subr.mxu0 0.0
    %2972 = vmatpush1.msra.mxu0 0.0
    %2973 = vmatprep.subr.mxu0 0.0
    %2974 = vmatpush1.msra.mxu0 0.0
    %2975 = vmatprep.subr.mxu0 0.0
    %2976 = vmatpush1.msra.mxu0 0.0
    %2977 = vmatprep.subr.mxu0 0.0
    %2978 = vmatpush1.msra.mxu0 0.0
    %2979 = vmatprep.subr.mxu0 0.0
    %2980 = vmatpush1.msra.mxu0 0.0
    %2981 = vmatprep.subr.mxu0 0.0
    %2982 = vmatpush1.msra.mxu0 0.0
    %2983 = vmatprep.subr.mxu0 0.0
    %2984 = vmatpush1.msra.mxu0 0.0
    %2985 = vmatprep.subr.mxu0 0.0
    %2986 = vmatpush1.msra.mxu0 0.0
    %2987 = vmatprep.subr.mxu0 0.0
    %2988 = vmatpush1.msra.mxu0 0.0
    %2989 = vmatprep.subr.mxu0 0.0
    %2990 = vmatpush1.msra.mxu0 0.0
    %2991 = vmatprep.subr.mxu0 0.0
    %2992 = vmatpush1.msra.mxu0 0.0
    %2993 = vmatprep.subr.mxu0 0.0
    %2994 = vmatpush1.msra.mxu0 0.0
    %2995 = vmatprep.mubr.f32.mxu0 0.0
    %2996 = vmatmul.mubr.f32.gmra.mrb[0].mxu0 %v2929
    %v2997 = vpop.f32.mrb[0].mxu0
    %v2998 = vadd.f32 0.0, %v2997
    %v2999 = vpop.f32.mrb[0].mxu0
    %3000 = vdwg.mxu0
    %v3001 = vadd.f32 %v2846, %v2998
    %v3002 = vld [vmem:[%s0 + $0x26] sm:$0x3]
    %3003 = vmatprep.subr.mxu0 0.0
    %3004 = vmatpush1.msra.mxu0 %v35
    %3005 = vmatprep.subr.mxu0 0.0
    %3006 = vmatpush1.msra.mxu0 %v36
    %3007 = vmatprep.subr.mxu0 0.0
    %3008 = vmatpush1.msra.mxu0 %v37
    %3009 = vmatprep.subr.mxu0 0.0
    %3010 = vmatpush1.msra.mxu0 %v38
    %3011 = vmatprep.subr.mxu0 0.0
    %3012 = vmatpush1.msra.mxu0 %v39
    %3013 = vmatprep.subr.mxu0 0.0
    %3014 = vmatpush1.msra.mxu0 %v40
    %3015 = vmatprep.subr.mxu0 0.0
    %3016 = vmatpush1.msra.mxu0 %v41
    %3017 = vmatprep.subr.mxu0 0.0
    %3018 = vmatpush1.msra.mxu0 %v42
    %3019 = vmatprep.subr.mxu0 0.0
    %3020 = vmatpush1.msra.mxu0 %v43
    %3021 = vmatprep.subr.mxu0 0.0
    %3022 = vmatpush1.msra.mxu0 %v44
    %3023 = vmatprep.subr.mxu0 0.0
    %3024 = vmatpush1.msra.mxu0 %v45
    %3025 = vmatprep.subr.mxu0 0.0
    %3026 = vmatpush1.msra.mxu0 %v46
    %3027 = vmatprep.subr.mxu0 0.0
    %3028 = vmatpush1.msra.mxu0 %v47
    %3029 = vmatprep.subr.mxu0 0.0
    %3030 = vmatpush1.msra.mxu0 %v48
    %3031 = vmatprep.subr.mxu0 0.0
    %3032 = vmatpush1.msra.mxu0 %v49
    %3033 = vmatprep.subr.mxu0 0.0
    %3034 = vmatpush1.msra.mxu0 %v50
    %3035 = vmatprep.subr.mxu0 0.0
    %3036 = vmatpush1.msra.mxu0 0.0
    %3037 = vmatprep.subr.mxu0 0.0
    %3038 = vmatpush1.msra.mxu0 0.0
    %3039 = vmatprep.subr.mxu0 0.0
    %3040 = vmatpush1.msra.mxu0 0.0
    %3041 = vmatprep.subr.mxu0 0.0
    %3042 = vmatpush1.msra.mxu0 0.0
    %3043 = vmatprep.subr.mxu0 0.0
    %3044 = vmatpush1.msra.mxu0 0.0
    %3045 = vmatprep.subr.mxu0 0.0
    %3046 = vmatpush1.msra.mxu0 0.0
    %3047 = vmatprep.subr.mxu0 0.0
    %3048 = vmatpush1.msra.mxu0 0.0
    %3049 = vmatprep.subr.mxu0 0.0
    %3050 = vmatpush1.msra.mxu0 0.0
    %3051 = vmatprep.subr.mxu0 0.0
    %3052 = vmatpush1.msra.mxu0 0.0
    %3053 = vmatprep.subr.mxu0 0.0
    %3054 = vmatpush1.msra.mxu0 0.0
    %3055 = vmatprep.subr.mxu0 0.0
    %3056 = vmatpush1.msra.mxu0 0.0
    %3057 = vmatprep.subr.mxu0 0.0
    %3058 = vmatpush1.msra.mxu0 0.0
    %3059 = vmatprep.subr.mxu0 0.0
    %3060 = vmatpush1.msra.mxu0 0.0
    %3061 = vmatprep.subr.mxu0 0.0
    %3062 = vmatpush1.msra.mxu0 0.0
    %3063 = vmatprep.subr.mxu0 0.0
    %3064 = vmatpush1.msra.mxu0 0.0
    %3065 = vmatprep.subr.mxu0 0.0
    %3066 = vmatpush1.msra.mxu0 0.0
    %3067 = vmatprep.mubr.f32.mxu0 0.0
    %3068 = vmatmul.mubr.f32.gmra.mrb[0].mxu0 %v3002
    %v3069 = vpop.f32.mrb[0].mxu0
    %v3070 = vadd.f32 %v58, %v3069
    %v3071 = vpop.f32.mrb[0].mxu0
    %3072 = vdwg.mxu0
    %v3073 = vmax.f32 %v3070, 0.0
    %s3074 = scalar_lea.vmem [#allocation2], 1216
    %v3075 = vld [vmem:[%s3074] sm:$0xff]
    %v3076 = vld [vmem:[%s3074 + $0x8] sm:$0xff]
    %v3077 = vld [vmem:[%s3074 + $0x10] sm:$0xff]
    %v3078 = vld [vmem:[%s3074 + $0x18] sm:$0xff]
    %v3079 = vld [vmem:[%s3074 + $0x20] sm:$0xff]
    %v3080 = vld [vmem:[%s3074 + $0x28] sm:$0xff]
    %v3081 = vld [vmem:[%s3074 + $0x30] sm:$0xff]
    %v3082 = vld [vmem:[%s3074 + $0x38] sm:$0xff]
    %v3084 = vsel %vm220, %v3073, 0
    %3086 = vmatprep.subr.mxu0 0.0
    %3087 = vmatpush1.msra.mxu0 %v3075
    %3088 = vmatprep.subr.mxu0 0.0
    %3089 = vmatpush1.msra.mxu0 %v3076
    %3090 = vmatprep.subr.mxu0 0.0
    %3091 = vmatpush1.msra.mxu0 %v3077
    %3092 = vmatprep.subr.mxu0 0.0
    %3093 = vmatpush1.msra.mxu0 %v3078
    %3094 = vmatprep.subr.mxu0 0.0
    %3095 = vmatpush1.msra.mxu0 %v3079
    %3096 = vmatprep.subr.mxu0 0.0
    %3097 = vmatpush1.msra.mxu0 %v3080
    %3098 = vmatprep.subr.mxu0 0.0
    %3099 = vmatpush1.msra.mxu0 %v3081
    %3100 = vmatprep.subr.mxu0 0.0
    %3101 = vmatpush1.msra.mxu0 %v3082
    %3102 = vmatprep.subr.mxu0 0.0
    %3103 = vmatpush1.msra.mxu0 0.0
    %3104 = vmatprep.subr.mxu0 0.0
    %3105 = vmatpush1.msra.mxu0 0.0
    %3106 = vmatprep.subr.mxu0 0.0
    %3107 = vmatpush1.msra.mxu0 0.0
    %3108 = vmatprep.subr.mxu0 0.0
    %3109 = vmatpush1.msra.mxu0 0.0
    %3110 = vmatprep.subr.mxu0 0.0
    %3111 = vmatpush1.msra.mxu0 0.0
    %3112 = vmatprep.subr.mxu0 0.0
    %3113 = vmatpush1.msra.mxu0 0.0
    %3114 = vmatprep.subr.mxu0 0.0
    %3115 = vmatpush1.msra.mxu0 0.0
    %3116 = vmatprep.subr.mxu0 0.0
    %3117 = vmatpush1.msra.mxu0 0.0
    %3118 = vmatprep.subr.mxu0 0.0
    %3119 = vmatpush1.msra.mxu0 0.0
    %3120 = vmatprep.subr.mxu0 0.0
    %3121 = vmatpush1.msra.mxu0 0.0
    %3122 = vmatprep.subr.mxu0 0.0
    %3123 = vmatpush1.msra.mxu0 0.0
    %3124 = vmatprep.subr.mxu0 0.0
    %3125 = vmatpush1.msra.mxu0 0.0
    %3126 = vmatprep.subr.mxu0 0.0
    %3127 = vmatpush1.msra.mxu0 0.0
    %3128 = vmatprep.subr.mxu0 0.0
    %3129 = vmatpush1.msra.mxu0 0.0
    %3130 = vmatprep.subr.mxu0 0.0
    %3131 = vmatpush1.msra.mxu0 0.0
    %3132 = vmatprep.subr.mxu0 0.0
    %3133 = vmatpush1.msra.mxu0 0.0
    %3134 = vmatprep.subr.mxu0 0.0
    %3135 = vmatpush1.msra.mxu0 0.0
    %3136 = vmatprep.subr.mxu0 0.0
    %3137 = vmatpush1.msra.mxu0 0.0
    %3138 = vmatprep.subr.mxu0 0.0
    %3139 = vmatpush1.msra.mxu0 0.0
    %3140 = vmatprep.subr.mxu0 0.0
    %3141 = vmatpush1.msra.mxu0 0.0
    %3142 = vmatprep.subr.mxu0 0.0
    %3143 = vmatpush1.msra.mxu0 0.0
    %3144 = vmatprep.subr.mxu0 0.0
    %3145 = vmatpush1.msra.mxu0 0.0
    %3146 = vmatprep.subr.mxu0 0.0
    %3147 = vmatpush1.msra.mxu0 0.0
    %3148 = vmatprep.subr.mxu0 0.0
    %3149 = vmatpush1.msra.mxu0 0.0
    %3150 = vmatprep.mubr.f32.mxu0 0.0
    %3151 = vmatmul.mubr.f32.gmra.mrb[0].mxu0 %v3084
    %v3152 = vpop.f32.mrb[0].mxu0
    %v3153 = vadd.f32 0.0, %v3152
    %v3154 = vpop.f32.mrb[0].mxu0
    %3155 = vdwg.mxu0
    %v3156 = vadd.f32 %v3001, %v3153
    %v3157 = vld [vmem:[%s0 + $0x28] sm:$0x3]
    %3158 = vmatprep.subr.mxu0 0.0
    %3159 = vmatpush1.msra.mxu0 %v35
    %3160 = vmatprep.subr.mxu0 0.0
    %3161 = vmatpush1.msra.mxu0 %v36
    %3162 = vmatprep.subr.mxu0 0.0
    %3163 = vmatpush1.msra.mxu0 %v37
    %3164 = vmatprep.subr.mxu0 0.0
    %3165 = vmatpush1.msra.mxu0 %v38
    %3166 = vmatprep.subr.mxu0 0.0
    %3167 = vmatpush1.msra.mxu0 %v39
    %3168 = vmatprep.subr.mxu0 0.0
    %3169 = vmatpush1.msra.mxu0 %v40
    %3170 = vmatprep.subr.mxu0 0.0
    %3171 = vmatpush1.msra.mxu0 %v41
    %3172 = vmatprep.subr.mxu0 0.0
    %3173 = vmatpush1.msra.mxu0 %v42
    %3174 = vmatprep.subr.mxu0 0.0
    %3175 = vmatpush1.msra.mxu0 %v43
    %3176 = vmatprep.subr.mxu0 0.0
    %3177 = vmatpush1.msra.mxu0 %v44
    %3178 = vmatprep.subr.mxu0 0.0
    %3179 = vmatpush1.msra.mxu0 %v45
    %3180 = vmatprep.subr.mxu0 0.0
    %3181 = vmatpush1.msra.mxu0 %v46
    %3182 = vmatprep.subr.mxu0 0.0
    %3183 = vmatpush1.msra.mxu0 %v47
    %3184 = vmatprep.subr.mxu0 0.0
    %3185 = vmatpush1.msra.mxu0 %v48
    %3186 = vmatprep.subr.mxu0 0.0
    %3187 = vmatpush1.msra.mxu0 %v49
    %3188 = vmatprep.subr.mxu0 0.0
    %3189 = vmatpush1.msra.mxu0 %v50
    %3190 = vmatprep.subr.mxu0 0.0
    %3191 = vmatpush1.msra.mxu0 0.0
    %3192 = vmatprep.subr.mxu0 0.0
    %3193 = vmatpush1.msra.mxu0 0.0
    %3194 = vmatprep.subr.mxu0 0.0
    %3195 = vmatpush1.msra.mxu0 0.0
    %3196 = vmatprep.subr.mxu0 0.0
    %3197 = vmatpush1.msra.mxu0 0.0
    %3198 = vmatprep.subr.mxu0 0.0
    %3199 = vmatpush1.msra.mxu0 0.0
    %3200 = vmatprep.subr.mxu0 0.0
    %3201 = vmatpush1.msra.mxu0 0.0
    %3202 = vmatprep.subr.mxu0 0.0
    %3203 = vmatpush1.msra.mxu0 0.0
    %3204 = vmatprep.subr.mxu0 0.0
    %3205 = vmatpush1.msra.mxu0 0.0
    %3206 = vmatprep.subr.mxu0 0.0
    %3207 = vmatpush1.msra.mxu0 0.0
    %3208 = vmatprep.subr.mxu0 0.0
    %3209 = vmatpush1.msra.mxu0 0.0
    %3210 = vmatprep.subr.mxu0 0.0
    %3211 = vmatpush1.msra.mxu0 0.0
    %3212 = vmatprep.subr.mxu0 0.0
    %3213 = vmatpush1.msra.mxu0 0.0
    %3214 = vmatprep.subr.mxu0 0.0
    %3215 = vmatpush1.msra.mxu0 0.0
    %3216 = vmatprep.subr.mxu0 0.0
    %3217 = vmatpush1.msra.mxu0 0.0
    %3218 = vmatprep.subr.mxu0 0.0
    %3219 = vmatpush1.msra.mxu0 0.0
    %3220 = vmatprep.subr.mxu0 0.0
    %3221 = vmatpush1.msra.mxu0 0.0
    %3222 = vmatprep.mubr.f32.mxu0 0.0
    %3223 = vmatmul.mubr.f32.gmra.mrb[0].mxu0 %v3157
    %v3224 = vpop.f32.mrb[0].mxu0
    %v3225 = vadd.f32 %v58, %v3224
    %v3226 = vpop.f32.mrb[0].mxu0
    %3227 = vdwg.mxu0
    %v3228 = vmax.f32 %v3225, 0.0
    %s3229 = scalar_lea.vmem [#allocation2], 1280
    %v3230 = vld [vmem:[%s3229] sm:$0xff]
    %v3231 = vld [vmem:[%s3229 + $0x8] sm:$0xff]
    %v3232 = vld [vmem:[%s3229 + $0x10] sm:$0xff]
    %v3233 = vld [vmem:[%s3229 + $0x18] sm:$0xff]
    %v3234 = vld [vmem:[%s3229 + $0x20] sm:$0xff]
    %v3235 = vld [vmem:[%s3229 + $0x28] sm:$0xff]
    %v3236 = vld [vmem:[%s3229 + $0x30] sm:$0xff]
    %v3237 = vld [vmem:[%s3229 + $0x38] sm:$0xff]
    %v3239 = vsel %vm220, %v3228, 0
    %3241 = vmatprep.subr.mxu0 0.0
    %3242 = vmatpush1.msra.mxu0 %v3230
    %3243 = vmatprep.subr.mxu0 0.0
    %3244 = vmatpush1.msra.mxu0 %v3231
    %3245 = vmatprep.subr.mxu0 0.0
    %3246 = vmatpush1.msra.mxu0 %v3232
    %3247 = vmatprep.subr.mxu0 0.0
    %3248 = vmatpush1.msra.mxu0 %v3233
    %3249 = vmatprep.subr.mxu0 0.0
    %3250 = vmatpush1.msra.mxu0 %v3234
    %3251 = vmatprep.subr.mxu0 0.0
    %3252 = vmatpush1.msra.mxu0 %v3235
    %3253 = vmatprep.subr.mxu0 0.0
    %3254 = vmatpush1.msra.mxu0 %v3236
    %3255 = vmatprep.subr.mxu0 0.0
    %3256 = vmatpush1.msra.mxu0 %v3237
    %3257 = vmatprep.subr.mxu0 0.0
    %3258 = vmatpush1.msra.mxu0 0.0
    %3259 = vmatprep.subr.mxu0 0.0
    %3260 = vmatpush1.msra.mxu0 0.0
    %3261 = vmatprep.subr.mxu0 0.0
    %3262 = vmatpush1.msra.mxu0 0.0
    %3263 = vmatprep.subr.mxu0 0.0
    %3264 = vmatpush1.msra.mxu0 0.0
    %3265 = vmatprep.subr.mxu0 0.0
    %3266 = vmatpush1.msra.mxu0 0.0
    %3267 = vmatprep.subr.mxu0 0.0
    %3268 = vmatpush1.msra.mxu0 0.0
    %3269 = vmatprep.subr.mxu0 0.0
    %3270 = vmatpush1.msra.mxu0 0.0
    %3271 = vmatprep.subr.mxu0 0.0
    %3272 = vmatpush1.msra.mxu0 0.0
    %3273 = vmatprep.subr.mxu0 0.0
    %3274 = vmatpush1.msra.mxu0 0.0
    %3275 = vmatprep.subr.mxu0 0.0
    %3276 = vmatpush1.msra.mxu0 0.0
    %3277 = vmatprep.subr.mxu0 0.0
    %3278 = vmatpush1.msra.mxu0 0.0
    %3279 = vmatprep.subr.mxu0 0.0
    %3280 = vmatpush1.msra.mxu0 0.0
    %3281 = vmatprep.subr.mxu0 0.0
    %3282 = vmatpush1.msra.mxu0 0.0
    %3283 = vmatprep.subr.mxu0 0.0
    %3284 = vmatpush1.msra.mxu0 0.0
    %3285 = vmatprep.subr.mxu0 0.0
    %3286 = vmatpush1.msra.mxu0 0.0
    %3287 = vmatprep.subr.mxu0 0.0
    %3288 = vmatpush1.msra.mxu0 0.0
    %3289 = vmatprep.subr.mxu0 0.0
    %3290 = vmatpush1.msra.mxu0 0.0
    %3291 = vmatprep.subr.mxu0 0.0
    %3292 = vmatpush1.msra.mxu0 0.0
    %3293 = vmatprep.subr.mxu0 0.0
    %3294 = vmatpush1.msra.mxu0 0.0
    %3295 = vmatprep.subr.mxu0 0.0
    %3296 = vmatpush1.msra.mxu0 0.0
    %3297 = vmatprep.subr.mxu0 0.0
    %3298 = vmatpush1.msra.mxu0 0.0
    %3299 = vmatprep.subr.mxu0 0.0
    %3300 = vmatpush1.msra.mxu0 0.0
    %3301 = vmatprep.subr.mxu0 0.0
    %3302 = vmatpush1.msra.mxu0 0.0
    %3303 = vmatprep.subr.mxu0 0.0
    %3304 = vmatpush1.msra.mxu0 0.0
    %3305 = vmatprep.mubr.f32.mxu0 0.0
    %3306 = vmatmul.mubr.f32.gmra.mrb[0].mxu0 %v3239
    %v3307 = vpop.f32.mrb[0].mxu0
    %v3308 = vadd.f32 0.0, %v3307
    %v3309 = vpop.f32.mrb[0].mxu0
    %3310 = vdwg.mxu0
    %v3311 = vadd.f32 %v3156, %v3308
    %v3312 = vld [vmem:[%s0 + $0x2a] sm:$0x3]
    %3313 = vmatprep.subr.mxu0 0.0
    %3314 = vmatpush1.msra.mxu0 %v35
    %3315 = vmatprep.subr.mxu0 0.0
    %3316 = vmatpush1.msra.mxu0 %v36
    %3317 = vmatprep.subr.mxu0 0.0
    %3318 = vmatpush1.msra.mxu0 %v37
    %3319 = vmatprep.subr.mxu0 0.0
    %3320 = vmatpush1.msra.mxu0 %v38
    %3321 = vmatprep.subr.mxu0 0.0
    %3322 = vmatpush1.msra.mxu0 %v39
    %3323 = vmatprep.subr.mxu0 0.0
    %3324 = vmatpush1.msra.mxu0 %v40
    %3325 = vmatprep.subr.mxu0 0.0
    %3326 = vmatpush1.msra.mxu0 %v41
    %3327 = vmatprep.subr.mxu0 0.0
    %3328 = vmatpush1.msra.mxu0 %v42
    %3329 = vmatprep.subr.mxu0 0.0
    %3330 = vmatpush1.msra.mxu0 %v43
    %3331 = vmatprep.subr.mxu0 0.0
    %3332 = vmatpush1.msra.mxu0 %v44
    %3333 = vmatprep.subr.mxu0 0.0
    %3334 = vmatpush1.msra.mxu0 %v45
    %3335 = vmatprep.subr.mxu0 0.0
    %3336 = vmatpush1.msra.mxu0 %v46
    %3337 = vmatprep.subr.mxu0 0.0
    %3338 = vmatpush1.msra.mxu0 %v47
    %3339 = vmatprep.subr.mxu0 0.0
    %3340 = vmatpush1.msra.mxu0 %v48
    %3341 = vmatprep.subr.mxu0 0.0
    %3342 = vmatpush1.msra.mxu0 %v49
    %3343 = vmatprep.subr.mxu0 0.0
    %3344 = vmatpush1.msra.mxu0 %v50
    %3345 = vmatprep.subr.mxu0 0.0
    %3346 = vmatpush1.msra.mxu0 0.0
    %3347 = vmatprep.subr.mxu0 0.0
    %3348 = vmatpush1.msra.mxu0 0.0
    %3349 = vmatprep.subr.mxu0 0.0
    %3350 = vmatpush1.msra.mxu0 0.0
    %3351 = vmatprep.subr.mxu0 0.0
    %3352 = vmatpush1.msra.mxu0 0.0
    %3353 = vmatprep.subr.mxu0 0.0
    %3354 = vmatpush1.msra.mxu0 0.0
    %3355 = vmatprep.subr.mxu0 0.0
    %3356 = vmatpush1.msra.mxu0 0.0
    %3357 = vmatprep.subr.mxu0 0.0
    %3358 = vmatpush1.msra.mxu0 0.0
    %3359 = vmatprep.subr.mxu0 0.0
    %3360 = vmatpush1.msra.mxu0 0.0
    %3361 = vmatprep.subr.mxu0 0.0
    %3362 = vmatpush1.msra.mxu0 0.0
    %3363 = vmatprep.subr.mxu0 0.0
    %3364 = vmatpush1.msra.mxu0 0.0
    %3365 = vmatprep.subr.mxu0 0.0
    %3366 = vmatpush1.msra.mxu0 0.0
    %3367 = vmatprep.subr.mxu0 0.0
    %3368 = vmatpush1.msra.mxu0 0.0
    %3369 = vmatprep.subr.mxu0 0.0
    %3370 = vmatpush1.msra.mxu0 0.0
    %3371 = vmatprep.subr.mxu0 0.0
    %3372 = vmatpush1.msra.mxu0 0.0
    %3373 = vmatprep.subr.mxu0 0.0
    %3374 = vmatpush1.msra.mxu0 0.0
    %3375 = vmatprep.subr.mxu0 0.0
    %3376 = vmatpush1.msra.mxu0 0.0
    %3377 = vmatprep.mubr.f32.mxu0 0.0
    %3378 = vmatmul.mubr.f32.gmra.mrb[0].mxu0 %v3312
    %v3379 = vpop.f32.mrb[0].mxu0
    %v3380 = vadd.f32 %v58, %v3379
    %v3381 = vpop.f32.mrb[0].mxu0
    %3382 = vdwg.mxu0
    %v3383 = vmax.f32 %v3380, 0.0
    %s3384 = scalar_lea.vmem [#allocation2], 1344
    %v3385 = vld [vmem:[%s3384] sm:$0xff]
    %v3386 = vld [vmem:[%s3384 + $0x8] sm:$0xff]
    %v3387 = vld [vmem:[%s3384 + $0x10] sm:$0xff]
    %v3388 = vld [vmem:[%s3384 + $0x18] sm:$0xff]
    %v3389 = vld [vmem:[%s3384 + $0x20] sm:$0xff]
    %v3390 = vld [vmem:[%s3384 + $0x28] sm:$0xff]
    %v3391 = vld [vmem:[%s3384 + $0x30] sm:$0xff]
    %v3392 = vld [vmem:[%s3384 + $0x38] sm:$0xff]
    %v3394 = vsel %vm220, %v3383, 0
    %3396 = vmatprep.subr.mxu0 0.0
    %3397 = vmatpush1.msra.mxu0 %v3385
    %3398 = vmatprep.subr.mxu0 0.0
    %3399 = vmatpush1.msra.mxu0 %v3386
    %3400 = vmatprep.subr.mxu0 0.0
    %3401 = vmatpush1.msra.mxu0 %v3387
    %3402 = vmatprep.subr.mxu0 0.0
    %3403 = vmatpush1.msra.mxu0 %v3388
    %3404 = vmatprep.subr.mxu0 0.0
    %3405 = vmatpush1.msra.mxu0 %v3389
    %3406 = vmatprep.subr.mxu0 0.0
    %3407 = vmatpush1.msra.mxu0 %v3390
    %3408 = vmatprep.subr.mxu0 0.0
    %3409 = vmatpush1.msra.mxu0 %v3391
    %3410 = vmatprep.subr.mxu0 0.0
    %3411 = vmatpush1.msra.mxu0 %v3392
    %3412 = vmatprep.subr.mxu0 0.0
    %3413 = vmatpush1.msra.mxu0 0.0
    %3414 = vmatprep.subr.mxu0 0.0
    %3415 = vmatpush1.msra.mxu0 0.0
    %3416 = vmatprep.subr.mxu0 0.0
    %3417 = vmatpush1.msra.mxu0 0.0
    %3418 = vmatprep.subr.mxu0 0.0
    %3419 = vmatpush1.msra.mxu0 0.0
    %3420 = vmatprep.subr.mxu0 0.0
    %3421 = vmatpush1.msra.mxu0 0.0
    %3422 = vmatprep.subr.mxu0 0.0
    %3423 = vmatpush1.msra.mxu0 0.0
    %3424 = vmatprep.subr.mxu0 0.0
    %3425 = vmatpush1.msra.mxu0 0.0
    %3426 = vmatprep.subr.mxu0 0.0
    %3427 = vmatpush1.msra.mxu0 0.0
    %3428 = vmatprep.subr.mxu0 0.0
    %3429 = vmatpush1.msra.mxu0 0.0
    %3430 = vmatprep.subr.mxu0 0.0
    %3431 = vmatpush1.msra.mxu0 0.0
    %3432 = vmatprep.subr.mxu0 0.0
    %3433 = vmatpush1.msra.mxu0 0.0
    %3434 = vmatprep.subr.mxu0 0.0
    %3435 = vmatpush1.msra.mxu0 0.0
    %3436 = vmatprep.subr.mxu0 0.0
    %3437 = vmatpush1.msra.mxu0 0.0
    %3438 = vmatprep.subr.mxu0 0.0
    %3439 = vmatpush1.msra.mxu0 0.0
    %3440 = vmatprep.subr.mxu0 0.0
    %3441 = vmatpush1.msra.mxu0 0.0
    %3442 = vmatprep.subr.mxu0 0.0
    %3443 = vmatpush1.msra.mxu0 0.0
    %3444 = vmatprep.subr.mxu0 0.0
    %3445 = vmatpush1.msra.mxu0 0.0
    %3446 = vmatprep.subr.mxu0 0.0
    %3447 = vmatpush1.msra.mxu0 0.0
    %3448 = vmatprep.subr.mxu0 0.0
    %3449 = vmatpush1.msra.mxu0 0.0
    %3450 = vmatprep.subr.mxu0 0.0
    %3451 = vmatpush1.msra.mxu0 0.0
    %3452 = vmatprep.subr.mxu0 0.0
    %3453 = vmatpush1.msra.mxu0 0.0
    %3454 = vmatprep.subr.mxu0 0.0
    %3455 = vmatpush1.msra.mxu0 0.0
    %3456 = vmatprep.subr.mxu0 0.0
    %3457 = vmatpush1.msra.mxu0 0.0
    %3458 = vmatprep.subr.mxu0 0.0
    %3459 = vmatpush1.msra.mxu0 0.0
    %3460 = vmatprep.mubr.f32.mxu0 0.0
    %3461 = vmatmul.mubr.f32.gmra.mrb[0].mxu0 %v3394
    %v3462 = vpop.f32.mrb[0].mxu0
    %v3463 = vadd.f32 0.0, %v3462
    %v3464 = vpop.f32.mrb[0].mxu0
    %3465 = vdwg.mxu0
    %v3466 = vadd.f32 %v3311, %v3463
    %v3467 = vld [vmem:[%s0 + $0x2c] sm:$0x3]
    %3468 = vmatprep.subr.mxu0 0.0
    %3469 = vmatpush1.msra.mxu0 %v35
    %3470 = vmatprep.subr.mxu0 0.0
    %3471 = vmatpush1.msra.mxu0 %v36
    %3472 = vmatprep.subr.mxu0 0.0
    %3473 = vmatpush1.msra.mxu0 %v37
    %3474 = vmatprep.subr.mxu0 0.0
    %3475 = vmatpush1.msra.mxu0 %v38
    %3476 = vmatprep.subr.mxu0 0.0
    %3477 = vmatpush1.msra.mxu0 %v39
    %3478 = vmatprep.subr.mxu0 0.0
    %3479 = vmatpush1.msra.mxu0 %v40
    %3480 = vmatprep.subr.mxu0 0.0
    %3481 = vmatpush1.msra.mxu0 %v41
    %3482 = vmatprep.subr.mxu0 0.0
    %3483 = vmatpush1.msra.mxu0 %v42
    %3484 = vmatprep.subr.mxu0 0.0
    %3485 = vmatpush1.msra.mxu0 %v43
    %3486 = vmatprep.subr.mxu0 0.0
    %3487 = vmatpush1.msra.mxu0 %v44
    %3488 = vmatprep.subr.mxu0 0.0
    %3489 = vmatpush1.msra.mxu0 %v45
    %3490 = vmatprep.subr.mxu0 0.0
    %3491 = vmatpush1.msra.mxu0 %v46
    %3492 = vmatprep.subr.mxu0 0.0
    %3493 = vmatpush1.msra.mxu0 %v47
    %3494 = vmatprep.subr.mxu0 0.0
    %3495 = vmatpush1.msra.mxu0 %v48
    %3496 = vmatprep.subr.mxu0 0.0
    %3497 = vmatpush1.msra.mxu0 %v49
    %3498 = vmatprep.subr.mxu0 0.0
    %3499 = vmatpush1.msra.mxu0 %v50
    %3500 = vmatprep.subr.mxu0 0.0
    %3501 = vmatpush1.msra.mxu0 0.0
    %3502 = vmatprep.subr.mxu0 0.0
    %3503 = vmatpush1.msra.mxu0 0.0
    %3504 = vmatprep.subr.mxu0 0.0
    %3505 = vmatpush1.msra.mxu0 0.0
    %3506 = vmatprep.subr.mxu0 0.0
    %3507 = vmatpush1.msra.mxu0 0.0
    %3508 = vmatprep.subr.mxu0 0.0
    %3509 = vmatpush1.msra.mxu0 0.0
    %3510 = vmatprep.subr.mxu0 0.0
    %3511 = vmatpush1.msra.mxu0 0.0
    %3512 = vmatprep.subr.mxu0 0.0
    %3513 = vmatpush1.msra.mxu0 0.0
    %3514 = vmatprep.subr.mxu0 0.0
    %3515 = vmatpush1.msra.mxu0 0.0
    %3516 = vmatprep.subr.mxu0 0.0
    %3517 = vmatpush1.msra.mxu0 0.0
    %3518 = vmatprep.subr.mxu0 0.0
    %3519 = vmatpush1.msra.mxu0 0.0
    %3520 = vmatprep.subr.mxu0 0.0
    %3521 = vmatpush1.msra.mxu0 0.0
    %3522 = vmatprep.subr.mxu0 0.0
    %3523 = vmatpush1.msra.mxu0 0.0
    %3524 = vmatprep.subr.mxu0 0.0
    %3525 = vmatpush1.msra.mxu0 0.0
    %3526 = vmatprep.subr.mxu0 0.0
    %3527 = vmatpush1.msra.mxu0 0.0
    %3528 = vmatprep.subr.mxu0 0.0
    %3529 = vmatpush1.msra.mxu0 0.0
    %3530 = vmatprep.subr.mxu0 0.0
    %3531 = vmatpush1.msra.mxu0 0.0
    %3532 = vmatprep.mubr.f32.mxu0 0.0
    %3533 = vmatmul.mubr.f32.gmra.mrb[0].mxu0 %v3467
    %v3534 = vpop.f32.mrb[0].mxu0
    %v3535 = vadd.f32 %v58, %v3534
    %v3536 = vpop.f32.mrb[0].mxu0
    %3537 = vdwg.mxu0
    %v3538 = vmax.f32 %v3535, 0.0
    %s3539 = scalar_lea.vmem [#allocation2], 1408
    %v3540 = vld [vmem:[%s3539] sm:$0xff]
    %v3541 = vld [vmem:[%s3539 + $0x8] sm:$0xff]
    %v3542 = vld [vmem:[%s3539 + $0x10] sm:$0xff]
    %v3543 = vld [vmem:[%s3539 + $0x18] sm:$0xff]
    %v3544 = vld [vmem:[%s3539 + $0x20] sm:$0xff]
    %v3545 = vld [vmem:[%s3539 + $0x28] sm:$0xff]
    %v3546 = vld [vmem:[%s3539 + $0x30] sm:$0xff]
    %v3547 = vld [vmem:[%s3539 + $0x38] sm:$0xff]
    %v3549 = vsel %vm220, %v3538, 0
    %3551 = vmatprep.subr.mxu0 0.0
    %3552 = vmatpush1.msra.mxu0 %v3540
    %3553 = vmatprep.subr.mxu0 0.0
    %3554 = vmatpush1.msra.mxu0 %v3541
    %3555 = vmatprep.subr.mxu0 0.0
    %3556 = vmatpush1.msra.mxu0 %v3542
    %3557 = vmatprep.subr.mxu0 0.0
    %3558 = vmatpush1.msra.mxu0 %v3543
    %3559 = vmatprep.subr.mxu0 0.0
    %3560 = vmatpush1.msra.mxu0 %v3544
    %3561 = vmatprep.subr.mxu0 0.0
    %3562 = vmatpush1.msra.mxu0 %v3545
    %3563 = vmatprep.subr.mxu0 0.0
    %3564 = vmatpush1.msra.mxu0 %v3546
    %3565 = vmatprep.subr.mxu0 0.0
    %3566 = vmatpush1.msra.mxu0 %v3547
    %3567 = vmatprep.subr.mxu0 0.0
    %3568 = vmatpush1.msra.mxu0 0.0
    %3569 = vmatprep.subr.mxu0 0.0
    %3570 = vmatpush1.msra.mxu0 0.0
    %3571 = vmatprep.subr.mxu0 0.0
    %3572 = vmatpush1.msra.mxu0 0.0
    %3573 = vmatprep.subr.mxu0 0.0
    %3574 = vmatpush1.msra.mxu0 0.0
    %3575 = vmatprep.subr.mxu0 0.0
    %3576 = vmatpush1.msra.mxu0 0.0
    %3577 = vmatprep.subr.mxu0 0.0
    %3578 = vmatpush1.msra.mxu0 0.0
    %3579 = vmatprep.subr.mxu0 0.0
    %3580 = vmatpush1.msra.mxu0 0.0
    %3581 = vmatprep.subr.mxu0 0.0
    %3582 = vmatpush1.msra.mxu0 0.0
    %3583 = vmatprep.subr.mxu0 0.0
    %3584 = vmatpush1.msra.mxu0 0.0
    %3585 = vmatprep.subr.mxu0 0.0
    %3586 = vmatpush1.msra.mxu0 0.0
    %3587 = vmatprep.subr.mxu0 0.0
    %3588 = vmatpush1.msra.mxu0 0.0
    %3589 = vmatprep.subr.mxu0 0.0
    %3590 = vmatpush1.msra.mxu0 0.0
    %3591 = vmatprep.subr.mxu0 0.0
    %3592 = vmatpush1.msra.mxu0 0.0
    %3593 = vmatprep.subr.mxu0 0.0
    %3594 = vmatpush1.msra.mxu0 0.0
    %3595 = vmatprep.subr.mxu0 0.0
    %3596 = vmatpush1.msra.mxu0 0.0
    %3597 = vmatprep.subr.mxu0 0.0
    %3598 = vmatpush1.msra.mxu0 0.0
    %3599 = vmatprep.subr.mxu0 0.0
    %3600 = vmatpush1.msra.mxu0 0.0
    %3601 = vmatprep.subr.mxu0 0.0
    %3602 = vmatpush1.msra.mxu0 0.0
    %3603 = vmatprep.subr.mxu0 0.0
    %3604 = vmatpush1.msra.mxu0 0.0
    %3605 = vmatprep.subr.mxu0 0.0
    %3606 = vmatpush1.msra.mxu0 0.0
    %3607 = vmatprep.subr.mxu0 0.0
    %3608 = vmatpush1.msra.mxu0 0.0
    %3609 = vmatprep.subr.mxu0 0.0
    %3610 = vmatpush1.msra.mxu0 0.0
    %3611 = vmatprep.subr.mxu0 0.0
    %3612 = vmatpush1.msra.mxu0 0.0
    %3613 = vmatprep.subr.mxu0 0.0
    %3614 = vmatpush1.msra.mxu0 0.0
    %3615 = vmatprep.mubr.f32.mxu0 0.0
    %3616 = vmatmul.mubr.f32.gmra.mrb[0].mxu0 %v3549
    %v3617 = vpop.f32.mrb[0].mxu0
    %v3618 = vadd.f32 0.0, %v3617
    %v3619 = vpop.f32.mrb[0].mxu0
    %3620 = vdwg.mxu0
    %v3621 = vadd.f32 %v3466, %v3618
    %v3622 = vld [vmem:[%s0 + $0x2e] sm:$0x3]
    %3623 = vmatprep.subr.mxu0 0.0
    %3624 = vmatpush1.msra.mxu0 %v35
    %3625 = vmatprep.subr.mxu0 0.0
    %3626 = vmatpush1.msra.mxu0 %v36
    %3627 = vmatprep.subr.mxu0 0.0
    %3628 = vmatpush1.msra.mxu0 %v37
    %3629 = vmatprep.subr.mxu0 0.0
    %3630 = vmatpush1.msra.mxu0 %v38
    %3631 = vmatprep.subr.mxu0 0.0
    %3632 = vmatpush1.msra.mxu0 %v39
    %3633 = vmatprep.subr.mxu0 0.0
    %3634 = vmatpush1.msra.mxu0 %v40
    %3635 = vmatprep.subr.mxu0 0.0
    %3636 = vmatpush1.msra.mxu0 %v41
    %3637 = vmatprep.subr.mxu0 0.0
    %3638 = vmatpush1.msra.mxu0 %v42
    %3639 = vmatprep.subr.mxu0 0.0
    %3640 = vmatpush1.msra.mxu0 %v43
    %3641 = vmatprep.subr.mxu0 0.0
    %3642 = vmatpush1.msra.mxu0 %v44
    %3643 = vmatprep.subr.mxu0 0.0
    %3644 = vmatpush1.msra.mxu0 %v45
    %3645 = vmatprep.subr.mxu0 0.0
    %3646 = vmatpush1.msra.mxu0 %v46
    %3647 = vmatprep.subr.mxu0 0.0
    %3648 = vmatpush1.msra.mxu0 %v47
    %3649 = vmatprep.subr.mxu0 0.0
    %3650 = vmatpush1.msra.mxu0 %v48
    %3651 = vmatprep.subr.mxu0 0.0
    %3652 = vmatpush1.msra.mxu0 %v49
    %3653 = vmatprep.subr.mxu0 0.0
    %3654 = vmatpush1.msra.mxu0 %v50
    %3655 = vmatprep.subr.mxu0 0.0
    %3656 = vmatpush1.msra.mxu0 0.0
    %3657 = vmatprep.subr.mxu0 0.0
    %3658 = vmatpush1.msra.mxu0 0.0
    %3659 = vmatprep.subr.mxu0 0.0
    %3660 = vmatpush1.msra.mxu0 0.0
    %3661 = vmatprep.subr.mxu0 0.0
    %3662 = vmatpush1.msra.mxu0 0.0
    %3663 = vmatprep.subr.mxu0 0.0
    %3664 = vmatpush1.msra.mxu0 0.0
    %3665 = vmatprep.subr.mxu0 0.0
    %3666 = vmatpush1.msra.mxu0 0.0
    %3667 = vmatprep.subr.mxu0 0.0
    %3668 = vmatpush1.msra.mxu0 0.0
    %3669 = vmatprep.subr.mxu0 0.0
    %3670 = vmatpush1.msra.mxu0 0.0
    %3671 = vmatprep.subr.mxu0 0.0
    %3672 = vmatpush1.msra.mxu0 0.0
    %3673 = vmatprep.subr.mxu0 0.0
    %3674 = vmatpush1.msra.mxu0 0.0
    %3675 = vmatprep.subr.mxu0 0.0
    %3676 = vmatpush1.msra.mxu0 0.0
    %3677 = vmatprep.subr.mxu0 0.0
    %3678 = vmatpush1.msra.mxu0 0.0
    %3679 = vmatprep.subr.mxu0 0.0
    %3680 = vmatpush1.msra.mxu0 0.0
    %3681 = vmatprep.subr.mxu0 0.0
    %3682 = vmatpush1.msra.mxu0 0.0
    %3683 = vmatprep.subr.mxu0 0.0
    %3684 = vmatpush1.msra.mxu0 0.0
    %3685 = vmatprep.subr.mxu0 0.0
    %3686 = vmatpush1.msra.mxu0 0.0
    %3687 = vmatprep.mubr.f32.mxu0 0.0
    %3688 = vmatmul.mubr.f32.gmra.mrb[0].mxu0 %v3622
    %v3689 = vpop.f32.mrb[0].mxu0
    %v3690 = vadd.f32 %v58, %v3689
    %v3691 = vpop.f32.mrb[0].mxu0
    %3692 = vdwg.mxu0
    %v3693 = vmax.f32 %v3690, 0.0
    %s3694 = scalar_lea.vmem [#allocation2], 1472
    %v3695 = vld [vmem:[%s3694] sm:$0xff]
    %v3696 = vld [vmem:[%s3694 + $0x8] sm:$0xff]
    %v3697 = vld [vmem:[%s3694 + $0x10] sm:$0xff]
    %v3698 = vld [vmem:[%s3694 + $0x18] sm:$0xff]
    %v3699 = vld [vmem:[%s3694 + $0x20] sm:$0xff]
    %v3700 = vld [vmem:[%s3694 + $0x28] sm:$0xff]
    %v3701 = vld [vmem:[%s3694 + $0x30] sm:$0xff]
    %v3702 = vld [vmem:[%s3694 + $0x38] sm:$0xff]
    %v3704 = vsel %vm220, %v3693, 0
    %3706 = vmatprep.subr.mxu0 0.0
    %3707 = vmatpush1.msra.mxu0 %v3695
    %3708 = vmatprep.subr.mxu0 0.0
    %3709 = vmatpush1.msra.mxu0 %v3696
    %3710 = vmatprep.subr.mxu0 0.0
    %3711 = vmatpush1.msra.mxu0 %v3697
    %3712 = vmatprep.subr.mxu0 0.0
    %3713 = vmatpush1.msra.mxu0 %v3698
    %3714 = vmatprep.subr.mxu0 0.0
    %3715 = vmatpush1.msra.mxu0 %v3699
    %3716 = vmatprep.subr.mxu0 0.0
    %3717 = vmatpush1.msra.mxu0 %v3700
    %3718 = vmatprep.subr.mxu0 0.0
    %3719 = vmatpush1.msra.mxu0 %v3701
    %3720 = vmatprep.subr.mxu0 0.0
    %3721 = vmatpush1.msra.mxu0 %v3702
    %3722 = vmatprep.subr.mxu0 0.0
    %3723 = vmatpush1.msra.mxu0 0.0
    %3724 = vmatprep.subr.mxu0 0.0
    %3725 = vmatpush1.msra.mxu0 0.0
    %3726 = vmatprep.subr.mxu0 0.0
    %3727 = vmatpush1.msra.mxu0 0.0
    %3728 = vmatprep.subr.mxu0 0.0
    %3729 = vmatpush1.msra.mxu0 0.0
    %3730 = vmatprep.subr.mxu0 0.0
    %3731 = vmatpush1.msra.mxu0 0.0
    %3732 = vmatprep.subr.mxu0 0.0
    %3733 = vmatpush1.msra.mxu0 0.0
    %3734 = vmatprep.subr.mxu0 0.0
    %3735 = vmatpush1.msra.mxu0 0.0
    %3736 = vmatprep.subr.mxu0 0.0
    %3737 = vmatpush1.msra.mxu0 0.0
    %3738 = vmatprep.subr.mxu0 0.0
    %3739 = vmatpush1.msra.mxu0 0.0
    %3740 = vmatprep.subr.mxu0 0.0
    %3741 = vmatpush1.msra.mxu0 0.0
    %3742 = vmatprep.subr.mxu0 0.0
    %3743 = vmatpush1.msra.mxu0 0.0
    %3744 = vmatprep.subr.mxu0 0.0
    %3745 = vmatpush1.msra.mxu0 0.0
    %3746 = vmatprep.subr.mxu0 0.0
    %3747 = vmatpush1.msra.mxu0 0.0
    %3748 = vmatprep.subr.mxu0 0.0
    %3749 = vmatpush1.msra.mxu0 0.0
    %3750 = vmatprep.subr.mxu0 0.0
    %3751 = vmatpush1.msra.mxu0 0.0
    %3752 = vmatprep.subr.mxu0 0.0
    %3753 = vmatpush1.msra.mxu0 0.0
    %3754 = vmatprep.subr.mxu0 0.0
    %3755 = vmatpush1.msra.mxu0 0.0
    %3756 = vmatprep.subr.mxu0 0.0
    %3757 = vmatpush1.msra.mxu0 0.0
    %3758 = vmatprep.subr.mxu0 0.0
    %3759 = vmatpush1.msra.mxu0 0.0
    %3760 = vmatprep.subr.mxu0 0.0
    %3761 = vmatpush1.msra.mxu0 0.0
    %3762 = vmatprep.subr.mxu0 0.0
    %3763 = vmatpush1.msra.mxu0 0.0
    %3764 = vmatprep.subr.mxu0 0.0
    %3765 = vmatpush1.msra.mxu0 0.0
    %3766 = vmatprep.subr.mxu0 0.0
    %3767 = vmatpush1.msra.mxu0 0.0
    %3768 = vmatprep.subr.mxu0 0.0
    %3769 = vmatpush1.msra.mxu0 0.0
    %3770 = vmatprep.mubr.f32.mxu0 0.0
    %3771 = vmatmul.mubr.f32.gmra.mrb[0].mxu0 %v3704
    %v3772 = vpop.f32.mrb[0].mxu0
    %v3773 = vadd.f32 0.0, %v3772
    %v3774 = vpop.f32.mrb[0].mxu0
    %3775 = vdwg.mxu0
    %v3776 = vadd.f32 %v3621, %v3773
    %v3777 = vld [vmem:[%s0 + $0x30] sm:$0x3]
    %3778 = vmatprep.subr.mxu0 0.0
    %3779 = vmatpush1.msra.mxu0 %v35
    %3780 = vmatprep.subr.mxu0 0.0
    %3781 = vmatpush1.msra.mxu0 %v36
    %3782 = vmatprep.subr.mxu0 0.0
    %3783 = vmatpush1.msra.mxu0 %v37
    %3784 = vmatprep.subr.mxu0 0.0
    %3785 = vmatpush1.msra.mxu0 %v38
    %3786 = vmatprep.subr.mxu0 0.0
    %3787 = vmatpush1.msra.mxu0 %v39
    %3788 = vmatprep.subr.mxu0 0.0
    %3789 = vmatpush1.msra.mxu0 %v40
    %3790 = vmatprep.subr.mxu0 0.0
    %3791 = vmatpush1.msra.mxu0 %v41
    %3792 = vmatprep.subr.mxu0 0.0
    %3793 = vmatpush1.msra.mxu0 %v42
    %3794 = vmatprep.subr.mxu0 0.0
    %3795 = vmatpush1.msra.mxu0 %v43
    %3796 = vmatprep.subr.mxu0 0.0
    %3797 = vmatpush1.msra.mxu0 %v44
    %3798 = vmatprep.subr.mxu0 0.0
    %3799 = vmatpush1.msra.mxu0 %v45
    %3800 = vmatprep.subr.mxu0 0.0
    %3801 = vmatpush1.msra.mxu0 %v46
    %3802 = vmatprep.subr.mxu0 0.0
    %3803 = vmatpush1.msra.mxu0 %v47
    %3804 = vmatprep.subr.mxu0 0.0
    %3805 = vmatpush1.msra.mxu0 %v48
    %3806 = vmatprep.subr.mxu0 0.0
    %3807 = vmatpush1.msra.mxu0 %v49
    %3808 = vmatprep.subr.mxu0 0.0
    %3809 = vmatpush1.msra.mxu0 %v50
    %3810 = vmatprep.subr.mxu0 0.0
    %3811 = vmatpush1.msra.mxu0 0.0
    %3812 = vmatprep.subr.mxu0 0.0
    %3813 = vmatpush1.msra.mxu0 0.0
    %3814 = vmatprep.subr.mxu0 0.0
    %3815 = vmatpush1.msra.mxu0 0.0
    %3816 = vmatprep.subr.mxu0 0.0
    %3817 = vmatpush1.msra.mxu0 0.0
    %3818 = vmatprep.subr.mxu0 0.0
    %3819 = vmatpush1.msra.mxu0 0.0
    %3820 = vmatprep.subr.mxu0 0.0
    %3821 = vmatpush1.msra.mxu0 0.0
    %3822 = vmatprep.subr.mxu0 0.0
    %3823 = vmatpush1.msra.mxu0 0.0
    %3824 = vmatprep.subr.mxu0 0.0
    %3825 = vmatpush1.msra.mxu0 0.0
    %3826 = vmatprep.subr.mxu0 0.0
    %3827 = vmatpush1.msra.mxu0 0.0
    %3828 = vmatprep.subr.mxu0 0.0
    %3829 = vmatpush1.msra.mxu0 0.0
    %3830 = vmatprep.subr.mxu0 0.0
    %3831 = vmatpush1.msra.mxu0 0.0
    %3832 = vmatprep.subr.mxu0 0.0
    %3833 = vmatpush1.msra.mxu0 0.0
    %3834 = vmatprep.subr.mxu0 0.0
    %3835 = vmatpush1.msra.mxu0 0.0
    %3836 = vmatprep.subr.mxu0 0.0
    %3837 = vmatpush1.msra.mxu0 0.0
    %3838 = vmatprep.subr.mxu0 0.0
    %3839 = vmatpush1.msra.mxu0 0.0
    %3840 = vmatprep.subr.mxu0 0.0
    %3841 = vmatpush1.msra.mxu0 0.0
    %3842 = vmatprep.mubr.f32.mxu0 0.0
    %3843 = vmatmul.mubr.f32.gmra.mrb[0].mxu0 %v3777
    %v3844 = vpop.f32.mrb[0].mxu0
    %v3845 = vadd.f32 %v58, %v3844
    %v3846 = vpop.f32.mrb[0].mxu0
    %3847 = vdwg.mxu0
    %v3848 = vmax.f32 %v3845, 0.0
    %s3849 = scalar_lea.vmem [#allocation2], 1536
    %v3850 = vld [vmem:[%s3849] sm:$0xff]
    %v3851 = vld [vmem:[%s3849 + $0x8] sm:$0xff]
    %v3852 = vld [vmem:[%s3849 + $0x10] sm:$0xff]
    %v3853 = vld [vmem:[%s3849 + $0x18] sm:$0xff]
    %v3854 = vld [vmem:[%s3849 + $0x20] sm:$0xff]
    %v3855 = vld [vmem:[%s3849 + $0x28] sm:$0xff]
    %v3856 = vld [vmem:[%s3849 + $0x30] sm:$0xff]
    %v3857 = vld [vmem:[%s3849 + $0x38] sm:$0xff]
    %v3859 = vsel %vm220, %v3848, 0
    %3861 = vmatprep.subr.mxu0 0.0
    %3862 = vmatpush1.msra.mxu0 %v3850
    %3863 = vmatprep.subr.mxu0 0.0
    %3864 = vmatpush1.msra.mxu0 %v3851
    %3865 = vmatprep.subr.mxu0 0.0
    %3866 = vmatpush1.msra.mxu0 %v3852
    %3867 = vmatprep.subr.mxu0 0.0
    %3868 = vmatpush1.msra.mxu0 %v3853
    %3869 = vmatprep.subr.mxu0 0.0
    %3870 = vmatpush1.msra.mxu0 %v3854
    %3871 = vmatprep.subr.mxu0 0.0
    %3872 = vmatpush1.msra.mxu0 %v3855
    %3873 = vmatprep.subr.mxu0 0.0
    %3874 = vmatpush1.msra.mxu0 %v3856
    %3875 = vmatprep.subr.mxu0 0.0
    %3876 = vmatpush1.msra.mxu0 %v3857
    %3877 = vmatprep.subr.mxu0 0.0
    %3878 = vmatpush1.msra.mxu0 0.0
    %3879 = vmatprep.subr.mxu0 0.0
    %3880 = vmatpush1.msra.mxu0 0.0
    %3881 = vmatprep.subr.mxu0 0.0
    %3882 = vmatpush1.msra.mxu0 0.0
    %3883 = vmatprep.subr.mxu0 0.0
    %3884 = vmatpush1.msra.mxu0 0.0
    %3885 = vmatprep.subr.mxu0 0.0
    %3886 = vmatpush1.msra.mxu0 0.0
    %3887 = vmatprep.subr.mxu0 0.0
    %3888 = vmatpush1.msra.mxu0 0.0
    %3889 = vmatprep.subr.mxu0 0.0
    %3890 = vmatpush1.msra.mxu0 0.0
    %3891 = vmatprep.subr.mxu0 0.0
    %3892 = vmatpush1.msra.mxu0 0.0
    %3893 = vmatprep.subr.mxu0 0.0
    %3894 = vmatpush1.msra.mxu0 0.0
    %3895 = vmatprep.subr.mxu0 0.0
    %3896 = vmatpush1.msra.mxu0 0.0
    %3897 = vmatprep.subr.mxu0 0.0
    %3898 = vmatpush1.msra.mxu0 0.0
    %3899 = vmatprep.subr.mxu0 0.0
    %3900 = vmatpush1.msra.mxu0 0.0
    %3901 = vmatprep.subr.mxu0 0.0
    %3902 = vmatpush1.msra.mxu0 0.0
    %3903 = vmatprep.subr.mxu0 0.0
    %3904 = vmatpush1.msra.mxu0 0.0
    %3905 = vmatprep.subr.mxu0 0.0
    %3906 = vmatpush1.msra.mxu0 0.0
    %3907 = vmatprep.subr.mxu0 0.0
    %3908 = vmatpush1.msra.mxu0 0.0
    %3909 = vmatprep.subr.mxu0 0.0
    %3910 = vmatpush1.msra.mxu0 0.0
    %3911 = vmatprep.subr.mxu0 0.0
    %3912 = vmatpush1.msra.mxu0 0.0
    %3913 = vmatprep.subr.mxu0 0.0
    %3914 = vmatpush1.msra.mxu0 0.0
    %3915 = vmatprep.subr.mxu0 0.0
    %3916 = vmatpush1.msra.mxu0 0.0
    %3917 = vmatprep.subr.mxu0 0.0
    %3918 = vmatpush1.msra.mxu0 0.0
    %3919 = vmatprep.subr.mxu0 0.0
    %3920 = vmatpush1.msra.mxu0 0.0
    %3921 = vmatprep.subr.mxu0 0.0
    %3922 = vmatpush1.msra.mxu0 0.0
    %3923 = vmatprep.subr.mxu0 0.0
    %3924 = vmatpush1.msra.mxu0 0.0
    %3925 = vmatprep.mubr.f32.mxu0 0.0
    %3926 = vmatmul.mubr.f32.gmra.mrb[0].mxu0 %v3859
    %v3927 = vpop.f32.mrb[0].mxu0
    %v3928 = vadd.f32 0.0, %v3927
    %v3929 = vpop.f32.mrb[0].mxu0
    %3930 = vdwg.mxu0
    %v3931 = vadd.f32 %v3776, %v3928
    %v3932 = vld [vmem:[%s0 + $0x32] sm:$0x3]
    %3933 = vmatprep.subr.mxu0 0.0
    %3934 = vmatpush1.msra.mxu0 %v35
    %3935 = vmatprep.subr.mxu0 0.0
    %3936 = vmatpush1.msra.mxu0 %v36
    %3937 = vmatprep.subr.mxu0 0.0
    %3938 = vmatpush1.msra.mxu0 %v37
    %3939 = vmatprep.subr.mxu0 0.0
    %3940 = vmatpush1.msra.mxu0 %v38
    %3941 = vmatprep.subr.mxu0 0.0
    %3942 = vmatpush1.msra.mxu0 %v39
    %3943 = vmatprep.subr.mxu0 0.0
    %3944 = vmatpush1.msra.mxu0 %v40
    %3945 = vmatprep.subr.mxu0 0.0
    %3946 = vmatpush1.msra.mxu0 %v41
    %3947 = vmatprep.subr.mxu0 0.0
    %3948 = vmatpush1.msra.mxu0 %v42
    %3949 = vmatprep.subr.mxu0 0.0
    %3950 = vmatpush1.msra.mxu0 %v43
    %3951 = vmatprep.subr.mxu0 0.0
    %3952 = vmatpush1.msra.mxu0 %v44
    %3953 = vmatprep.subr.mxu0 0.0
    %3954 = vmatpush1.msra.mxu0 %v45
    %3955 = vmatprep.subr.mxu0 0.0
    %3956 = vmatpush1.msra.mxu0 %v46
    %3957 = vmatprep.subr.mxu0 0.0
    %3958 = vmatpush1.msra.mxu0 %v47
    %3959 = vmatprep.subr.mxu0 0.0
    %3960 = vmatpush1.msra.mxu0 %v48
    %3961 = vmatprep.subr.mxu0 0.0
    %3962 = vmatpush1.msra.mxu0 %v49
    %3963 = vmatprep.subr.mxu0 0.0
    %3964 = vmatpush1.msra.mxu0 %v50
    %3965 = vmatprep.subr.mxu0 0.0
    %3966 = vmatpush1.msra.mxu0 0.0
    %3967 = vmatprep.subr.mxu0 0.0
    %3968 = vmatpush1.msra.mxu0 0.0
    %3969 = vmatprep.subr.mxu0 0.0
    %3970 = vmatpush1.msra.mxu0 0.0
    %3971 = vmatprep.subr.mxu0 0.0
    %3972 = vmatpush1.msra.mxu0 0.0
    %3973 = vmatprep.subr.mxu0 0.0
    %3974 = vmatpush1.msra.mxu0 0.0
    %3975 = vmatprep.subr.mxu0 0.0
    %3976 = vmatpush1.msra.mxu0 0.0
    %3977 = vmatprep.subr.mxu0 0.0
    %3978 = vmatpush1.msra.mxu0 0.0
    %3979 = vmatprep.subr.mxu0 0.0
    %3980 = vmatpush1.msra.mxu0 0.0
    %3981 = vmatprep.subr.mxu0 0.0
    %3982 = vmatpush1.msra.mxu0 0.0
    %3983 = vmatprep.subr.mxu0 0.0
    %3984 = vmatpush1.msra.mxu0 0.0
    %3985 = vmatprep.subr.mxu0 0.0
    %3986 = vmatpush1.msra.mxu0 0.0
    %3987 = vmatprep.subr.mxu0 0.0
    %3988 = vmatpush1.msra.mxu0 0.0
    %3989 = vmatprep.subr.mxu0 0.0
    %3990 = vmatpush1.msra.mxu0 0.0
    %3991 = vmatprep.subr.mxu0 0.0
    %3992 = vmatpush1.msra.mxu0 0.0
    %3993 = vmatprep.subr.mxu0 0.0
    %3994 = vmatpush1.msra.mxu0 0.0
    %3995 = vmatprep.subr.mxu0 0.0
    %3996 = vmatpush1.msra.mxu0 0.0
    %3997 = vmatprep.mubr.f32.mxu0 0.0
    %3998 = vmatmul.mubr.f32.gmra.mrb[0].mxu0 %v3932
    %v3999 = vpop.f32.mrb[0].mxu0
    %v4000 = vadd.f32 %v58, %v3999
    %v4001 = vpop.f32.mrb[0].mxu0
    %4002 = vdwg.mxu0
    %v4003 = vmax.f32 %v4000, 0.0
    %s4004 = scalar_lea.vmem [#allocation2], 1600
    %v4005 = vld [vmem:[%s4004] sm:$0xff]
    %v4006 = vld [vmem:[%s4004 + $0x8] sm:$0xff]
    %v4007 = vld [vmem:[%s4004 + $0x10] sm:$0xff]
    %v4008 = vld [vmem:[%s4004 + $0x18] sm:$0xff]
    %v4009 = vld [vmem:[%s4004 + $0x20] sm:$0xff]
    %v4010 = vld [vmem:[%s4004 + $0x28] sm:$0xff]
    %v4011 = vld [vmem:[%s4004 + $0x30] sm:$0xff]
    %v4012 = vld [vmem:[%s4004 + $0x38] sm:$0xff]
    %v4014 = vsel %vm220, %v4003, 0
    %4016 = vmatprep.subr.mxu0 0.0
    %4017 = vmatpush1.msra.mxu0 %v4005
    %4018 = vmatprep.subr.mxu0 0.0
    %4019 = vmatpush1.msra.mxu0 %v4006
    %4020 = vmatprep.subr.mxu0 0.0
    %4021 = vmatpush1.msra.mxu0 %v4007
    %4022 = vmatprep.subr.mxu0 0.0
    %4023 = vmatpush1.msra.mxu0 %v4008
    %4024 = vmatprep.subr.mxu0 0.0
    %4025 = vmatpush1.msra.mxu0 %v4009
    %4026 = vmatprep.subr.mxu0 0.0
    %4027 = vmatpush1.msra.mxu0 %v4010
    %4028 = vmatprep.subr.mxu0 0.0
    %4029 = vmatpush1.msra.mxu0 %v4011
    %4030 = vmatprep.subr.mxu0 0.0
    %4031 = vmatpush1.msra.mxu0 %v4012
    %4032 = vmatprep.subr.mxu0 0.0
    %4033 = vmatpush1.msra.mxu0 0.0
    %4034 = vmatprep.subr.mxu0 0.0
    %4035 = vmatpush1.msra.mxu0 0.0
    %4036 = vmatprep.subr.mxu0 0.0
    %4037 = vmatpush1.msra.mxu0 0.0
    %4038 = vmatprep.subr.mxu0 0.0
    %4039 = vmatpush1.msra.mxu0 0.0
    %4040 = vmatprep.subr.mxu0 0.0
    %4041 = vmatpush1.msra.mxu0 0.0
    %4042 = vmatprep.subr.mxu0 0.0
    %4043 = vmatpush1.msra.mxu0 0.0
    %4044 = vmatprep.subr.mxu0 0.0
    %4045 = vmatpush1.msra.mxu0 0.0
    %4046 = vmatprep.subr.mxu0 0.0
    %4047 = vmatpush1.msra.mxu0 0.0
    %4048 = vmatprep.subr.mxu0 0.0
    %4049 = vmatpush1.msra.mxu0 0.0
    %4050 = vmatprep.subr.mxu0 0.0
    %4051 = vmatpush1.msra.mxu0 0.0
    %4052 = vmatprep.subr.mxu0 0.0
    %4053 = vmatpush1.msra.mxu0 0.0
    %4054 = vmatprep.subr.mxu0 0.0
    %4055 = vmatpush1.msra.mxu0 0.0
    %4056 = vmatprep.subr.mxu0 0.0
    %4057 = vmatpush1.msra.mxu0 0.0
    %4058 = vmatprep.subr.mxu0 0.0
    %4059 = vmatpush1.msra.mxu0 0.0
    %4060 = vmatprep.subr.mxu0 0.0
    %4061 = vmatpush1.msra.mxu0 0.0
    %4062 = vmatprep.subr.mxu0 0.0
    %4063 = vmatpush1.msra.mxu0 0.0
    %4064 = vmatprep.subr.mxu0 0.0
    %4065 = vmatpush1.msra.mxu0 0.0
    %4066 = vmatprep.subr.mxu0 0.0
    %4067 = vmatpush1.msra.mxu0 0.0
    %4068 = vmatprep.subr.mxu0 0.0
    %4069 = vmatpush1.msra.mxu0 0.0
    %4070 = vmatprep.subr.mxu0 0.0
    %4071 = vmatpush1.msra.mxu0 0.0
    %4072 = vmatprep.subr.mxu0 0.0
    %4073 = vmatpush1.msra.mxu0 0.0
    %4074 = vmatprep.subr.mxu0 0.0
    %4075 = vmatpush1.msra.mxu0 0.0
    %4076 = vmatprep.subr.mxu0 0.0
    %4077 = vmatpush1.msra.mxu0 0.0
    %4078 = vmatprep.subr.mxu0 0.0
    %4079 = vmatpush1.msra.mxu0 0.0
    %4080 = vmatprep.mubr.f32.mxu0 0.0
    %4081 = vmatmul.mubr.f32.gmra.mrb[0].mxu0 %v4014
    %v4082 = vpop.f32.mrb[0].mxu0
    %v4083 = vadd.f32 0.0, %v4082
    %v4084 = vpop.f32.mrb[0].mxu0
    %4085 = vdwg.mxu0
    %v4086 = vadd.f32 %v3931, %v4083
    %v4087 = vld [vmem:[%s0 + $0x34] sm:$0x3]
    %4088 = vmatprep.subr.mxu0 0.0
    %4089 = vmatpush1.msra.mxu0 %v35
    %4090 = vmatprep.subr.mxu0 0.0
    %4091 = vmatpush1.msra.mxu0 %v36
    %4092 = vmatprep.subr.mxu0 0.0
    %4093 = vmatpush1.msra.mxu0 %v37
    %4094 = vmatprep.subr.mxu0 0.0
    %4095 = vmatpush1.msra.mxu0 %v38
    %4096 = vmatprep.subr.mxu0 0.0
    %4097 = vmatpush1.msra.mxu0 %v39
    %4098 = vmatprep.subr.mxu0 0.0
    %4099 = vmatpush1.msra.mxu0 %v40
    %4100 = vmatprep.subr.mxu0 0.0
    %4101 = vmatpush1.msra.mxu0 %v41
    %4102 = vmatprep.subr.mxu0 0.0
    %4103 = vmatpush1.msra.mxu0 %v42
    %4104 = vmatprep.subr.mxu0 0.0
    %4105 = vmatpush1.msra.mxu0 %v43
    %4106 = vmatprep.subr.mxu0 0.0
    %4107 = vmatpush1.msra.mxu0 %v44
    %4108 = vmatprep.subr.mxu0 0.0
    %4109 = vmatpush1.msra.mxu0 %v45
    %4110 = vmatprep.subr.mxu0 0.0
    %4111 = vmatpush1.msra.mxu0 %v46
    %4112 = vmatprep.subr.mxu0 0.0
    %4113 = vmatpush1.msra.mxu0 %v47
    %4114 = vmatprep.subr.mxu0 0.0
    %4115 = vmatpush1.msra.mxu0 %v48
    %4116 = vmatprep.subr.mxu0 0.0
    %4117 = vmatpush1.msra.mxu0 %v49
    %4118 = vmatprep.subr.mxu0 0.0
    %4119 = vmatpush1.msra.mxu0 %v50
    %4120 = vmatprep.subr.mxu0 0.0
    %4121 = vmatpush1.msra.mxu0 0.0
    %4122 = vmatprep.subr.mxu0 0.0
    %4123 = vmatpush1.msra.mxu0 0.0
    %4124 = vmatprep.subr.mxu0 0.0
    %4125 = vmatpush1.msra.mxu0 0.0
    %4126 = vmatprep.subr.mxu0 0.0
    %4127 = vmatpush1.msra.mxu0 0.0
    %4128 = vmatprep.subr.mxu0 0.0
    %4129 = vmatpush1.msra.mxu0 0.0
    %4130 = vmatprep.subr.mxu0 0.0
    %4131 = vmatpush1.msra.mxu0 0.0
    %4132 = vmatprep.subr.mxu0 0.0
    %4133 = vmatpush1.msra.mxu0 0.0
    %4134 = vmatprep.subr.mxu0 0.0
    %4135 = vmatpush1.msra.mxu0 0.0
    %4136 = vmatprep.subr.mxu0 0.0
    %4137 = vmatpush1.msra.mxu0 0.0
    %4138 = vmatprep.subr.mxu0 0.0
    %4139 = vmatpush1.msra.mxu0 0.0
    %4140 = vmatprep.subr.mxu0 0.0
    %4141 = vmatpush1.msra.mxu0 0.0
    %4142 = vmatprep.subr.mxu0 0.0
    %4143 = vmatpush1.msra.mxu0 0.0
    %4144 = vmatprep.subr.mxu0 0.0
    %4145 = vmatpush1.msra.mxu0 0.0
    %4146 = vmatprep.subr.mxu0 0.0
    %4147 = vmatpush1.msra.mxu0 0.0
    %4148 = vmatprep.subr.mxu0 0.0
    %4149 = vmatpush1.msra.mxu0 0.0
    %4150 = vmatprep.subr.mxu0 0.0
    %4151 = vmatpush1.msra.mxu0 0.0
    %4152 = vmatprep.mubr.f32.mxu0 0.0
    %4153 = vmatmul.mubr.f32.gmra.mrb[0].mxu0 %v4087
    %v4154 = vpop.f32.mrb[0].mxu0
    %v4155 = vadd.f32 %v58, %v4154
    %v4156 = vpop.f32.mrb[0].mxu0
    %4157 = vdwg.mxu0
    %v4158 = vmax.f32 %v4155, 0.0
    %s4159 = scalar_lea.vmem [#allocation2], 1664
    %v4160 = vld [vmem:[%s4159] sm:$0xff]
    %v4161 = vld [vmem:[%s4159 + $0x8] sm:$0xff]
    %v4162 = vld [vmem:[%s4159 + $0x10] sm:$0xff]
    %v4163 = vld [vmem:[%s4159 + $0x18] sm:$0xff]
    %v4164 = vld [vmem:[%s4159 + $0x20] sm:$0xff]
    %v4165 = vld [vmem:[%s4159 + $0x28] sm:$0xff]
    %v4166 = vld [vmem:[%s4159 + $0x30] sm:$0xff]
    %v4167 = vld [vmem:[%s4159 + $0x38] sm:$0xff]
    %v4169 = vsel %vm220, %v4158, 0
    %4171 = vmatprep.subr.mxu0 0.0
    %4172 = vmatpush1.msra.mxu0 %v4160
    %4173 = vmatprep.subr.mxu0 0.0
    %4174 = vmatpush1.msra.mxu0 %v4161
    %4175 = vmatprep.subr.mxu0 0.0
    %4176 = vmatpush1.msra.mxu0 %v4162
    %4177 = vmatprep.subr.mxu0 0.0
    %4178 = vmatpush1.msra.mxu0 %v4163
    %4179 = vmatprep.subr.mxu0 0.0
    %4180 = vmatpush1.msra.mxu0 %v4164
    %4181 = vmatprep.subr.mxu0 0.0
    %4182 = vmatpush1.msra.mxu0 %v4165
    %4183 = vmatprep.subr.mxu0 0.0
    %4184 = vmatpush1.msra.mxu0 %v4166
    %4185 = vmatprep.subr.mxu0 0.0
    %4186 = vmatpush1.msra.mxu0 %v4167
    %4187 = vmatprep.subr.mxu0 0.0
    %4188 = vmatpush1.msra.mxu0 0.0
    %4189 = vmatprep.subr.mxu0 0.0
    %4190 = vmatpush1.msra.mxu0 0.0
    %4191 = vmatprep.subr.mxu0 0.0
    %4192 = vmatpush1.msra.mxu0 0.0
    %4193 = vmatprep.subr.mxu0 0.0
    %4194 = vmatpush1.msra.mxu0 0.0
    %4195 = vmatprep.subr.mxu0 0.0
    %4196 = vmatpush1.msra.mxu0 0.0
    %4197 = vmatprep.subr.mxu0 0.0
    %4198 = vmatpush1.msra.mxu0 0.0
    %4199 = vmatprep.subr.mxu0 0.0
    %4200 = vmatpush1.msra.mxu0 0.0
    %4201 = vmatprep.subr.mxu0 0.0
    %4202 = vmatpush1.msra.mxu0 0.0
    %4203 = vmatprep.subr.mxu0 0.0
    %4204 = vmatpush1.msra.mxu0 0.0
    %4205 = vmatprep.subr.mxu0 0.0
    %4206 = vmatpush1.msra.mxu0 0.0
    %4207 = vmatprep.subr.mxu0 0.0
    %4208 = vmatpush1.msra.mxu0 0.0
    %4209 = vmatprep.subr.mxu0 0.0
    %4210 = vmatpush1.msra.mxu0 0.0
    %4211 = vmatprep.subr.mxu0 0.0
    %4212 = vmatpush1.msra.mxu0 0.0
    %4213 = vmatprep.subr.mxu0 0.0
    %4214 = vmatpush1.msra.mxu0 0.0
    %4215 = vmatprep.subr.mxu0 0.0
    %4216 = vmatpush1.msra.mxu0 0.0
    %4217 = vmatprep.subr.mxu0 0.0
    %4218 = vmatpush1.msra.mxu0 0.0
    %4219 = vmatprep.subr.mxu0 0.0
    %4220 = vmatpush1.msra.mxu0 0.0
    %4221 = vmatprep.subr.mxu0 0.0
    %4222 = vmatpush1.msra.mxu0 0.0
    %4223 = vmatprep.subr.mxu0 0.0
    %4224 = vmatpush1.msra.mxu0 0.0
    %4225 = vmatprep.subr.mxu0 0.0
    %4226 = vmatpush1.msra.mxu0 0.0
    %4227 = vmatprep.subr.mxu0 0.0
    %4228 = vmatpush1.msra.mxu0 0.0
    %4229 = vmatprep.subr.mxu0 0.0
    %4230 = vmatpush1.msra.mxu0 0.0
    %4231 = vmatprep.subr.mxu0 0.0
    %4232 = vmatpush1.msra.mxu0 0.0
    %4233 = vmatprep.subr.mxu0 0.0
    %4234 = vmatpush1.msra.mxu0 0.0
    %4235 = vmatprep.mubr.f32.mxu0 0.0
    %4236 = vmatmul.mubr.f32.gmra.mrb[0].mxu0 %v4169
    %v4237 = vpop.f32.mrb[0].mxu0
    %v4238 = vadd.f32 0.0, %v4237
    %v4239 = vpop.f32.mrb[0].mxu0
    %4240 = vdwg.mxu0
    %v4241 = vadd.f32 %v4086, %v4238
    %v4242 = vld [vmem:[%s0 + $0x36] sm:$0x3]
    %4243 = vmatprep.subr.mxu0 0.0
    %4244 = vmatpush1.msra.mxu0 %v35
    %4245 = vmatprep.subr.mxu0 0.0
    %4246 = vmatpush1.msra.mxu0 %v36
    %4247 = vmatprep.subr.mxu0 0.0
    %4248 = vmatpush1.msra.mxu0 %v37
    %4249 = vmatprep.subr.mxu0 0.0
    %4250 = vmatpush1.msra.mxu0 %v38
    %4251 = vmatprep.subr.mxu0 0.0
    %4252 = vmatpush1.msra.mxu0 %v39
    %4253 = vmatprep.subr.mxu0 0.0
    %4254 = vmatpush1.msra.mxu0 %v40
    %4255 = vmatprep.subr.mxu0 0.0
    %4256 = vmatpush1.msra.mxu0 %v41
    %4257 = vmatprep.subr.mxu0 0.0
    %4258 = vmatpush1.msra.mxu0 %v42
    %4259 = vmatprep.subr.mxu0 0.0
    %4260 = vmatpush1.msra.mxu0 %v43
    %4261 = vmatprep.subr.mxu0 0.0
    %4262 = vmatpush1.msra.mxu0 %v44
    %4263 = vmatprep.subr.mxu0 0.0
    %4264 = vmatpush1.msra.mxu0 %v45
    %4265 = vmatprep.subr.mxu0 0.0
    %4266 = vmatpush1.msra.mxu0 %v46
    %4267 = vmatprep.subr.mxu0 0.0
    %4268 = vmatpush1.msra.mxu0 %v47
    %4269 = vmatprep.subr.mxu0 0.0
    %4270 = vmatpush1.msra.mxu0 %v48
    %4271 = vmatprep.subr.mxu0 0.0
    %4272 = vmatpush1.msra.mxu0 %v49
    %4273 = vmatprep.subr.mxu0 0.0
    %4274 = vmatpush1.msra.mxu0 %v50
    %4275 = vmatprep.subr.mxu0 0.0
    %4276 = vmatpush1.msra.mxu0 0.0
    %4277 = vmatprep.subr.mxu0 0.0
    %4278 = vmatpush1.msra.mxu0 0.0
    %4279 = vmatprep.subr.mxu0 0.0
    %4280 = vmatpush1.msra.mxu0 0.0
    %4281 = vmatprep.subr.mxu0 0.0
    %4282 = vmatpush1.msra.mxu0 0.0
    %4283 = vmatprep.subr.mxu0 0.0
    %4284 = vmatpush1.msra.mxu0 0.0
    %4285 = vmatprep.subr.mxu0 0.0
    %4286 = vmatpush1.msra.mxu0 0.0
    %4287 = vmatprep.subr.mxu0 0.0
    %4288 = vmatpush1.msra.mxu0 0.0
    %4289 = vmatprep.subr.mxu0 0.0
    %4290 = vmatpush1.msra.mxu0 0.0
    %4291 = vmatprep.subr.mxu0 0.0
    %4292 = vmatpush1.msra.mxu0 0.0
    %4293 = vmatprep.subr.mxu0 0.0
    %4294 = vmatpush1.msra.mxu0 0.0
    %4295 = vmatprep.subr.mxu0 0.0
    %4296 = vmatpush1.msra.mxu0 0.0
    %4297 = vmatprep.subr.mxu0 0.0
    %4298 = vmatpush1.msra.mxu0 0.0
    %4299 = vmatprep.subr.mxu0 0.0
    %4300 = vmatpush1.msra.mxu0 0.0
    %4301 = vmatprep.subr.mxu0 0.0
    %4302 = vmatpush1.msra.mxu0 0.0
    %4303 = vmatprep.subr.mxu0 0.0
    %4304 = vmatpush1.msra.mxu0 0.0
    %4305 = vmatprep.subr.mxu0 0.0
    %4306 = vmatpush1.msra.mxu0 0.0
    %4307 = vmatprep.mubr.f32.mxu0 0.0
    %4308 = vmatmul.mubr.f32.gmra.mrb[0].mxu0 %v4242
    %v4309 = vpop.f32.mrb[0].mxu0
    %v4310 = vadd.f32 %v58, %v4309
    %v4311 = vpop.f32.mrb[0].mxu0
    %4312 = vdwg.mxu0
    %v4313 = vmax.f32 %v4310, 0.0
    %s4314 = scalar_lea.vmem [#allocation2], 1728
    %v4315 = vld [vmem:[%s4314] sm:$0xff]
    %v4316 = vld [vmem:[%s4314 + $0x8] sm:$0xff]
    %v4317 = vld [vmem:[%s4314 + $0x10] sm:$0xff]
    %v4318 = vld [vmem:[%s4314 + $0x18] sm:$0xff]
    %v4319 = vld [vmem:[%s4314 + $0x20] sm:$0xff]
    %v4320 = vld [vmem:[%s4314 + $0x28] sm:$0xff]
    %v4321 = vld [vmem:[%s4314 + $0x30] sm:$0xff]
    %v4322 = vld [vmem:[%s4314 + $0x38] sm:$0xff]
    %v4324 = vsel %vm220, %v4313, 0
    %4326 = vmatprep.subr.mxu0 0.0
    %4327 = vmatpush1.msra.mxu0 %v4315
    %4328 = vmatprep.subr.mxu0 0.0
    %4329 = vmatpush1.msra.mxu0 %v4316
    %4330 = vmatprep.subr.mxu0 0.0
    %4331 = vmatpush1.msra.mxu0 %v4317
    %4332 = vmatprep.subr.mxu0 0.0
    %4333 = vmatpush1.msra.mxu0 %v4318
    %4334 = vmatprep.subr.mxu0 0.0
    %4335 = vmatpush1.msra.mxu0 %v4319
    %4336 = vmatprep.subr.mxu0 0.0
    %4337 = vmatpush1.msra.mxu0 %v4320
    %4338 = vmatprep.subr.mxu0 0.0
    %4339 = vmatpush1.msra.mxu0 %v4321
    %4340 = vmatprep.subr.mxu0 0.0
    %4341 = vmatpush1.msra.mxu0 %v4322
    %4342 = vmatprep.subr.mxu0 0.0
    %4343 = vmatpush1.msra.mxu0 0.0
    %4344 = vmatprep.subr.mxu0 0.0
    %4345 = vmatpush1.msra.mxu0 0.0
    %4346 = vmatprep.subr.mxu0 0.0
    %4347 = vmatpush1.msra.mxu0 0.0
    %4348 = vmatprep.subr.mxu0 0.0
    %4349 = vmatpush1.msra.mxu0 0.0
    %4350 = vmatprep.subr.mxu0 0.0
    %4351 = vmatpush1.msra.mxu0 0.0
    %4352 = vmatprep.subr.mxu0 0.0
    %4353 = vmatpush1.msra.mxu0 0.0
    %4354 = vmatprep.subr.mxu0 0.0
    %4355 = vmatpush1.msra.mxu0 0.0
    %4356 = vmatprep.subr.mxu0 0.0
    %4357 = vmatpush1.msra.mxu0 0.0
    %4358 = vmatprep.subr.mxu0 0.0
    %4359 = vmatpush1.msra.mxu0 0.0
    %4360 = vmatprep.subr.mxu0 0.0
    %4361 = vmatpush1.msra.mxu0 0.0
    %4362 = vmatprep.subr.mxu0 0.0
    %4363 = vmatpush1.msra.mxu0 0.0
    %4364 = vmatprep.subr.mxu0 0.0
    %4365 = vmatpush1.msra.mxu0 0.0
    %4366 = vmatprep.subr.mxu0 0.0
    %4367 = vmatpush1.msra.mxu0 0.0
    %4368 = vmatprep.subr.mxu0 0.0
    %4369 = vmatpush1.msra.mxu0 0.0
    %4370 = vmatprep.subr.mxu0 0.0
    %4371 = vmatpush1.msra.mxu0 0.0
    %4372 = vmatprep.subr.mxu0 0.0
    %4373 = vmatpush1.msra.mxu0 0.0
    %4374 = vmatprep.subr.mxu0 0.0
    %4375 = vmatpush1.msra.mxu0 0.0
    %4376 = vmatprep.subr.mxu0 0.0
    %4377 = vmatpush1.msra.mxu0 0.0
    %4378 = vmatprep.subr.mxu0 0.0
    %4379 = vmatpush1.msra.mxu0 0.0
    %4380 = vmatprep.subr.mxu0 0.0
    %4381 = vmatpush1.msra.mxu0 0.0
    %4382 = vmatprep.subr.mxu0 0.0
    %4383 = vmatpush1.msra.mxu0 0.0
    %4384 = vmatprep.subr.mxu0 0.0
    %4385 = vmatpush1.msra.mxu0 0.0
    %4386 = vmatprep.subr.mxu0 0.0
    %4387 = vmatpush1.msra.mxu0 0.0
    %4388 = vmatprep.subr.mxu0 0.0
    %4389 = vmatpush1.msra.mxu0 0.0
    %4390 = vmatprep.mubr.f32.mxu0 0.0
    %4391 = vmatmul.mubr.f32.gmra.mrb[0].mxu0 %v4324
    %v4392 = vpop.f32.mrb[0].mxu0
    %v4393 = vadd.f32 0.0, %v4392
    %v4394 = vpop.f32.mrb[0].mxu0
    %4395 = vdwg.mxu0
    %v4396 = vadd.f32 %v4241, %v4393
    %v4397 = vld [vmem:[%s0 + $0x38] sm:$0x3]
    %4398 = vmatprep.subr.mxu0 0.0
    %4399 = vmatpush1.msra.mxu0 %v35
    %4400 = vmatprep.subr.mxu0 0.0
    %4401 = vmatpush1.msra.mxu0 %v36
    %4402 = vmatprep.subr.mxu0 0.0
    %4403 = vmatpush1.msra.mxu0 %v37
    %4404 = vmatprep.subr.mxu0 0.0
    %4405 = vmatpush1.msra.mxu0 %v38
    %4406 = vmatprep.subr.mxu0 0.0
    %4407 = vmatpush1.msra.mxu0 %v39
    %4408 = vmatprep.subr.mxu0 0.0
    %4409 = vmatpush1.msra.mxu0 %v40
    %4410 = vmatprep.subr.mxu0 0.0
    %4411 = vmatpush1.msra.mxu0 %v41
    %4412 = vmatprep.subr.mxu0 0.0
    %4413 = vmatpush1.msra.mxu0 %v42
    %4414 = vmatprep.subr.mxu0 0.0
    %4415 = vmatpush1.msra.mxu0 %v43
    %4416 = vmatprep.subr.mxu0 0.0
    %4417 = vmatpush1.msra.mxu0 %v44
    %4418 = vmatprep.subr.mxu0 0.0
    %4419 = vmatpush1.msra.mxu0 %v45
    %4420 = vmatprep.subr.mxu0 0.0
    %4421 = vmatpush1.msra.mxu0 %v46
    %4422 = vmatprep.subr.mxu0 0.0
    %4423 = vmatpush1.msra.mxu0 %v47
    %4424 = vmatprep.subr.mxu0 0.0
    %4425 = vmatpush1.msra.mxu0 %v48
    %4426 = vmatprep.subr.mxu0 0.0
    %4427 = vmatpush1.msra.mxu0 %v49
    %4428 = vmatprep.subr.mxu0 0.0
    %4429 = vmatpush1.msra.mxu0 %v50
    %4430 = vmatprep.subr.mxu0 0.0
    %4431 = vmatpush1.msra.mxu0 0.0
    %4432 = vmatprep.subr.mxu0 0.0
    %4433 = vmatpush1.msra.mxu0 0.0
    %4434 = vmatprep.subr.mxu0 0.0
    %4435 = vmatpush1.msra.mxu0 0.0
    %4436 = vmatprep.subr.mxu0 0.0
    %4437 = vmatpush1.msra.mxu0 0.0
    %4438 = vmatprep.subr.mxu0 0.0
    %4439 = vmatpush1.msra.mxu0 0.0
    %4440 = vmatprep.subr.mxu0 0.0
    %4441 = vmatpush1.msra.mxu0 0.0
    %4442 = vmatprep.subr.mxu0 0.0
    %4443 = vmatpush1.msra.mxu0 0.0
    %4444 = vmatprep.subr.mxu0 0.0
    %4445 = vmatpush1.msra.mxu0 0.0
    %4446 = vmatprep.subr.mxu0 0.0
    %4447 = vmatpush1.msra.mxu0 0.0
    %4448 = vmatprep.subr.mxu0 0.0
    %4449 = vmatpush1.msra.mxu0 0.0
    %4450 = vmatprep.subr.mxu0 0.0
    %4451 = vmatpush1.msra.mxu0 0.0
    %4452 = vmatprep.subr.mxu0 0.0
    %4453 = vmatpush1.msra.mxu0 0.0
    %4454 = vmatprep.subr.mxu0 0.0
    %4455 = vmatpush1.msra.mxu0 0.0
    %4456 = vmatprep.subr.mxu0 0.0
    %4457 = vmatpush1.msra.mxu0 0.0
    %4458 = vmatprep.subr.mxu0 0.0
    %4459 = vmatpush1.msra.mxu0 0.0
    %4460 = vmatprep.subr.mxu0 0.0
    %4461 = vmatpush1.msra.mxu0 0.0
    %4462 = vmatprep.mubr.f32.mxu0 0.0
    %4463 = vmatmul.mubr.f32.gmra.mrb[0].mxu0 %v4397
    %v4464 = vpop.f32.mrb[0].mxu0
    %v4465 = vadd.f32 %v58, %v4464
    %v4466 = vpop.f32.mrb[0].mxu0
    %4467 = vdwg.mxu0
    %v4468 = vmax.f32 %v4465, 0.0
    %s4469 = scalar_lea.vmem [#allocation2], 1792
    %v4470 = vld [vmem:[%s4469] sm:$0xff]
    %v4471 = vld [vmem:[%s4469 + $0x8] sm:$0xff]
    %v4472 = vld [vmem:[%s4469 + $0x10] sm:$0xff]
    %v4473 = vld [vmem:[%s4469 + $0x18] sm:$0xff]
    %v4474 = vld [vmem:[%s4469 + $0x20] sm:$0xff]
    %v4475 = vld [vmem:[%s4469 + $0x28] sm:$0xff]
    %v4476 = vld [vmem:[%s4469 + $0x30] sm:$0xff]
    %v4477 = vld [vmem:[%s4469 + $0x38] sm:$0xff]
    %v4479 = vsel %vm220, %v4468, 0
    %4481 = vmatprep.subr.mxu0 0.0
    %4482 = vmatpush1.msra.mxu0 %v4470
    %4483 = vmatprep.subr.mxu0 0.0
    %4484 = vmatpush1.msra.mxu0 %v4471
    %4485 = vmatprep.subr.mxu0 0.0
    %4486 = vmatpush1.msra.mxu0 %v4472
    %4487 = vmatprep.subr.mxu0 0.0
    %4488 = vmatpush1.msra.mxu0 %v4473
    %4489 = vmatprep.subr.mxu0 0.0
    %4490 = vmatpush1.msra.mxu0 %v4474
    %4491 = vmatprep.subr.mxu0 0.0
    %4492 = vmatpush1.msra.mxu0 %v4475
    %4493 = vmatprep.subr.mxu0 0.0
    %4494 = vmatpush1.msra.mxu0 %v4476
    %4495 = vmatprep.subr.mxu0 0.0
    %4496 = vmatpush1.msra.mxu0 %v4477
    %4497 = vmatprep.subr.mxu0 0.0
    %4498 = vmatpush1.msra.mxu0 0.0
    %4499 = vmatprep.subr.mxu0 0.0
    %4500 = vmatpush1.msra.mxu0 0.0
    %4501 = vmatprep.subr.mxu0 0.0
    %4502 = vmatpush1.msra.mxu0 0.0
    %4503 = vmatprep.subr.mxu0 0.0
    %4504 = vmatpush1.msra.mxu0 0.0
    %4505 = vmatprep.subr.mxu0 0.0
    %4506 = vmatpush1.msra.mxu0 0.0
    %4507 = vmatprep.subr.mxu0 0.0
    %4508 = vmatpush1.msra.mxu0 0.0
    %4509 = vmatprep.subr.mxu0 0.0
    %4510 = vmatpush1.msra.mxu0 0.0
    %4511 = vmatprep.subr.mxu0 0.0
    %4512 = vmatpush1.msra.mxu0 0.0
    %4513 = vmatprep.subr.mxu0 0.0
    %4514 = vmatpush1.msra.mxu0 0.0
    %4515 = vmatprep.subr.mxu0 0.0
    %4516 = vmatpush1.msra.mxu0 0.0
    %4517 = vmatprep.subr.mxu0 0.0
    %4518 = vmatpush1.msra.mxu0 0.0
    %4519 = vmatprep.subr.mxu0 0.0
    %4520 = vmatpush1.msra.mxu0 0.0
    %4521 = vmatprep.subr.mxu0 0.0
    %4522 = vmatpush1.msra.mxu0 0.0
    %4523 = vmatprep.subr.mxu0 0.0
    %4524 = vmatpush1.msra.mxu0 0.0
    %4525 = vmatprep.subr.mxu0 0.0
    %4526 = vmatpush1.msra.mxu0 0.0
    %4527 = vmatprep.subr.mxu0 0.0
    %4528 = vmatpush1.msra.mxu0 0.0
    %4529 = vmatprep.subr.mxu0 0.0
    %4530 = vmatpush1.msra.mxu0 0.0
    %4531 = vmatprep.subr.mxu0 0.0
    %4532 = vmatpush1.msra.mxu0 0.0
    %4533 = vmatprep.subr.mxu0 0.0
    %4534 = vmatpush1.msra.mxu0 0.0
    %4535 = vmatprep.subr.mxu0 0.0
    %4536 = vmatpush1.msra.mxu0 0.0
    %4537 = vmatprep.subr.mxu0 0.0
    %4538 = vmatpush1.msra.mxu0 0.0
    %4539 = vmatprep.subr.mxu0 0.0
    %4540 = vmatpush1.msra.mxu0 0.0
    %4541 = vmatprep.subr.mxu0 0.0
    %4542 = vmatpush1.msra.mxu0 0.0
    %4543 = vmatprep.subr.mxu0 0.0
    %4544 = vmatpush1.msra.mxu0 0.0
    %4545 = vmatprep.mubr.f32.mxu0 0.0
    %4546 = vmatmul.mubr.f32.gmra.mrb[0].mxu0 %v4479
    %v4547 = vpop.f32.mrb[0].mxu0
    %v4548 = vadd.f32 0.0, %v4547
    %v4549 = vpop.f32.mrb[0].mxu0
    %4550 = vdwg.mxu0
    %v4551 = vadd.f32 %v4396, %v4548
    %v4552 = vld [vmem:[%s0 + $0x3a] sm:$0x3]
    %4553 = vmatprep.subr.mxu0 0.0
    %4554 = vmatpush1.msra.mxu0 %v35
    %4555 = vmatprep.subr.mxu0 0.0
    %4556 = vmatpush1.msra.mxu0 %v36
    %4557 = vmatprep.subr.mxu0 0.0
    %4558 = vmatpush1.msra.mxu0 %v37
    %4559 = vmatprep.subr.mxu0 0.0
    %4560 = vmatpush1.msra.mxu0 %v38
    %4561 = vmatprep.subr.mxu0 0.0
    %4562 = vmatpush1.msra.mxu0 %v39
    %4563 = vmatprep.subr.mxu0 0.0
    %4564 = vmatpush1.msra.mxu0 %v40
    %4565 = vmatprep.subr.mxu0 0.0
    %4566 = vmatpush1.msra.mxu0 %v41
    %4567 = vmatprep.subr.mxu0 0.0
    %4568 = vmatpush1.msra.mxu0 %v42
    %4569 = vmatprep.subr.mxu0 0.0
    %4570 = vmatpush1.msra.mxu0 %v43
    %4571 = vmatprep.subr.mxu0 0.0
    %4572 = vmatpush1.msra.mxu0 %v44
    %4573 = vmatprep.subr.mxu0 0.0
    %4574 = vmatpush1.msra.mxu0 %v45
    %4575 = vmatprep.subr.mxu0 0.0
    %4576 = vmatpush1.msra.mxu0 %v46
    %4577 = vmatprep.subr.mxu0 0.0
    %4578 = vmatpush1.msra.mxu0 %v47
    %4579 = vmatprep.subr.mxu0 0.0
    %4580 = vmatpush1.msra.mxu0 %v48
    %4581 = vmatprep.subr.mxu0 0.0
    %4582 = vmatpush1.msra.mxu0 %v49
    %4583 = vmatprep.subr.mxu0 0.0
    %4584 = vmatpush1.msra.mxu0 %v50
    %4585 = vmatprep.subr.mxu0 0.0
    %4586 = vmatpush1.msra.mxu0 0.0
    %4587 = vmatprep.subr.mxu0 0.0
    %4588 = vmatpush1.msra.mxu0 0.0
    %4589 = vmatprep.subr.mxu0 0.0
    %4590 = vmatpush1.msra.mxu0 0.0
    %4591 = vmatprep.subr.mxu0 0.0
    %4592 = vmatpush1.msra.mxu0 0.0
    %4593 = vmatprep.subr.mxu0 0.0
    %4594 = vmatpush1.msra.mxu0 0.0
    %4595 = vmatprep.subr.mxu0 0.0
    %4596 = vmatpush1.msra.mxu0 0.0
    %4597 = vmatprep.subr.mxu0 0.0
    %4598 = vmatpush1.msra.mxu0 0.0
    %4599 = vmatprep.subr.mxu0 0.0
    %4600 = vmatpush1.msra.mxu0 0.0
    %4601 = vmatprep.subr.mxu0 0.0
    %4602 = vmatpush1.msra.mxu0 0.0
    %4603 = vmatprep.subr.mxu0 0.0
    %4604 = vmatpush1.msra.mxu0 0.0
    %4605 = vmatprep.subr.mxu0 0.0
    %4606 = vmatpush1.msra.mxu0 0.0
    %4607 = vmatprep.subr.mxu0 0.0
    %4608 = vmatpush1.msra.mxu0 0.0
    %4609 = vmatprep.subr.mxu0 0.0
    %4610 = vmatpush1.msra.mxu0 0.0
    %4611 = vmatprep.subr.mxu0 0.0
    %4612 = vmatpush1.msra.mxu0 0.0
    %4613 = vmatprep.subr.mxu0 0.0
    %4614 = vmatpush1.msra.mxu0 0.0
    %4615 = vmatprep.subr.mxu0 0.0
    %4616 = vmatpush1.msra.mxu0 0.0
    %4617 = vmatprep.mubr.f32.mxu0 0.0
    %4618 = vmatmul.mubr.f32.gmra.mrb[0].mxu0 %v4552
    %v4619 = vpop.f32.mrb[0].mxu0
    %v4620 = vadd.f32 %v58, %v4619
    %v4621 = vpop.f32.mrb[0].mxu0
    %4622 = vdwg.mxu0
    %v4623 = vmax.f32 %v4620, 0.0
    %s4624 = scalar_lea.vmem [#allocation2], 1856
    %v4625 = vld [vmem:[%s4624] sm:$0xff]
    %v4626 = vld [vmem:[%s4624 + $0x8] sm:$0xff]
    %v4627 = vld [vmem:[%s4624 + $0x10] sm:$0xff]
    %v4628 = vld [vmem:[%s4624 + $0x18] sm:$0xff]
    %v4629 = vld [vmem:[%s4624 + $0x20] sm:$0xff]
    %v4630 = vld [vmem:[%s4624 + $0x28] sm:$0xff]
    %v4631 = vld [vmem:[%s4624 + $0x30] sm:$0xff]
    %v4632 = vld [vmem:[%s4624 + $0x38] sm:$0xff]
    %v4634 = vsel %vm220, %v4623, 0
    %4636 = vmatprep.subr.mxu0 0.0
    %4637 = vmatpush1.msra.mxu0 %v4625
    %4638 = vmatprep.subr.mxu0 0.0
    %4639 = vmatpush1.msra.mxu0 %v4626
    %4640 = vmatprep.subr.mxu0 0.0
    %4641 = vmatpush1.msra.mxu0 %v4627
    %4642 = vmatprep.subr.mxu0 0.0
    %4643 = vmatpush1.msra.mxu0 %v4628
    %4644 = vmatprep.subr.mxu0 0.0
    %4645 = vmatpush1.msra.mxu0 %v4629
    %4646 = vmatprep.subr.mxu0 0.0
    %4647 = vmatpush1.msra.mxu0 %v4630
    %4648 = vmatprep.subr.mxu0 0.0
    %4649 = vmatpush1.msra.mxu0 %v4631
    %4650 = vmatprep.subr.mxu0 0.0
    %4651 = vmatpush1.msra.mxu0 %v4632
    %4652 = vmatprep.subr.mxu0 0.0
    %4653 = vmatpush1.msra.mxu0 0.0
    %4654 = vmatprep.subr.mxu0 0.0
    %4655 = vmatpush1.msra.mxu0 0.0
    %4656 = vmatprep.subr.mxu0 0.0
    %4657 = vmatpush1.msra.mxu0 0.0
    %4658 = vmatprep.subr.mxu0 0.0
    %4659 = vmatpush1.msra.mxu0 0.0
    %4660 = vmatprep.subr.mxu0 0.0
    %4661 = vmatpush1.msra.mxu0 0.0
    %4662 = vmatprep.subr.mxu0 0.0
    %4663 = vmatpush1.msra.mxu0 0.0
    %4664 = vmatprep.subr.mxu0 0.0
    %4665 = vmatpush1.msra.mxu0 0.0
    %4666 = vmatprep.subr.mxu0 0.0
    %4667 = vmatpush1.msra.mxu0 0.0
    %4668 = vmatprep.subr.mxu0 0.0
    %4669 = vmatpush1.msra.mxu0 0.0
    %4670 = vmatprep.subr.mxu0 0.0
    %4671 = vmatpush1.msra.mxu0 0.0
    %4672 = vmatprep.subr.mxu0 0.0
    %4673 = vmatpush1.msra.mxu0 0.0
    %4674 = vmatprep.subr.mxu0 0.0
    %4675 = vmatpush1.msra.mxu0 0.0
    %4676 = vmatprep.subr.mxu0 0.0
    %4677 = vmatpush1.msra.mxu0 0.0
    %4678 = vmatprep.subr.mxu0 0.0
    %4679 = vmatpush1.msra.mxu0 0.0
    %4680 = vmatprep.subr.mxu0 0.0
    %4681 = vmatpush1.msra.mxu0 0.0
    %4682 = vmatprep.subr.mxu0 0.0
    %4683 = vmatpush1.msra.mxu0 0.0
    %4684 = vmatprep.subr.mxu0 0.0
    %4685 = vmatpush1.msra.mxu0 0.0
    %4686 = vmatprep.subr.mxu0 0.0
    %4687 = vmatpush1.msra.mxu0 0.0
    %4688 = vmatprep.subr.mxu0 0.0
    %4689 = vmatpush1.msra.mxu0 0.0
    %4690 = vmatprep.subr.mxu0 0.0
    %4691 = vmatpush1.msra.mxu0 0.0
    %4692 = vmatprep.subr.mxu0 0.0
    %4693 = vmatpush1.msra.mxu0 0.0
    %4694 = vmatprep.subr.mxu0 0.0
    %4695 = vmatpush1.msra.mxu0 0.0
    %4696 = vmatprep.subr.mxu0 0.0
    %4697 = vmatpush1.msra.mxu0 0.0
    %4698 = vmatprep.subr.mxu0 0.0
    %4699 = vmatpush1.msra.mxu0 0.0
    %4700 = vmatprep.mubr.f32.mxu0 0.0
    %4701 = vmatmul.mubr.f32.gmra.mrb[0].mxu0 %v4634
    %v4702 = vpop.f32.mrb[0].mxu0
    %v4703 = vadd.f32 0.0, %v4702
    %v4704 = vpop.f32.mrb[0].mxu0
    %4705 = vdwg.mxu0
    %v4706 = vadd.f32 %v4551, %v4703
    %v4707 = vld [vmem:[%s0 + $0x3c] sm:$0x3]
    %4708 = vmatprep.subr.mxu0 0.0
    %4709 = vmatpush1.msra.mxu0 %v35
    %4710 = vmatprep.subr.mxu0 0.0
    %4711 = vmatpush1.msra.mxu0 %v36
    %4712 = vmatprep.subr.mxu0 0.0
    %4713 = vmatpush1.msra.mxu0 %v37
    %4714 = vmatprep.subr.mxu0 0.0
    %4715 = vmatpush1.msra.mxu0 %v38
    %4716 = vmatprep.subr.mxu0 0.0
    %4717 = vmatpush1.msra.mxu0 %v39
    %4718 = vmatprep.subr.mxu0 0.0
    %4719 = vmatpush1.msra.mxu0 %v40
    %4720 = vmatprep.subr.mxu0 0.0
    %4721 = vmatpush1.msra.mxu0 %v41
    %4722 = vmatprep.subr.mxu0 0.0
    %4723 = vmatpush1.msra.mxu0 %v42
    %4724 = vmatprep.subr.mxu0 0.0
    %4725 = vmatpush1.msra.mxu0 %v43
    %4726 = vmatprep.subr.mxu0 0.0
    %4727 = vmatpush1.msra.mxu0 %v44
    %4728 = vmatprep.subr.mxu0 0.0
    %4729 = vmatpush1.msra.mxu0 %v45
    %4730 = vmatprep.subr.mxu0 0.0
    %4731 = vmatpush1.msra.mxu0 %v46
    %4732 = vmatprep.subr.mxu0 0.0
    %4733 = vmatpush1.msra.mxu0 %v47
    %4734 = vmatprep.subr.mxu0 0.0
    %4735 = vmatpush1.msra.mxu0 %v48
    %4736 = vmatprep.subr.mxu0 0.0
    %4737 = vmatpush1.msra.mxu0 %v49
    %4738 = vmatprep.subr.mxu0 0.0
    %4739 = vmatpush1.msra.mxu0 %v50
    %4740 = vmatprep.subr.mxu0 0.0
    %4741 = vmatpush1.msra.mxu0 0.0
    %4742 = vmatprep.subr.mxu0 0.0
    %4743 = vmatpush1.msra.mxu0 0.0
    %4744 = vmatprep.subr.mxu0 0.0
    %4745 = vmatpush1.msra.mxu0 0.0
    %4746 = vmatprep.subr.mxu0 0.0
    %4747 = vmatpush1.msra.mxu0 0.0
    %4748 = vmatprep.subr.mxu0 0.0
    %4749 = vmatpush1.msra.mxu0 0.0
    %4750 = vmatprep.subr.mxu0 0.0
    %4751 = vmatpush1.msra.mxu0 0.0
    %4752 = vmatprep.subr.mxu0 0.0
    %4753 = vmatpush1.msra.mxu0 0.0
    %4754 = vmatprep.subr.mxu0 0.0
    %4755 = vmatpush1.msra.mxu0 0.0
    %4756 = vmatprep.subr.mxu0 0.0
    %4757 = vmatpush1.msra.mxu0 0.0
    %4758 = vmatprep.subr.mxu0 0.0
    %4759 = vmatpush1.msra.mxu0 0.0
    %4760 = vmatprep.subr.mxu0 0.0
    %4761 = vmatpush1.msra.mxu0 0.0
    %4762 = vmatprep.subr.mxu0 0.0
    %4763 = vmatpush1.msra.mxu0 0.0
    %4764 = vmatprep.subr.mxu0 0.0
    %4765 = vmatpush1.msra.mxu0 0.0
    %4766 = vmatprep.subr.mxu0 0.0
    %4767 = vmatpush1.msra.mxu0 0.0
    %4768 = vmatprep.subr.mxu0 0.0
    %4769 = vmatpush1.msra.mxu0 0.0
    %4770 = vmatprep.subr.mxu0 0.0
    %4771 = vmatpush1.msra.mxu0 0.0
    %4772 = vmatprep.mubr.f32.mxu0 0.0
    %4773 = vmatmul.mubr.f32.gmra.mrb[0].mxu0 %v4707
    %v4774 = vpop.f32.mrb[0].mxu0
    %v4775 = vadd.f32 %v58, %v4774
    %v4776 = vpop.f32.mrb[0].mxu0
    %4777 = vdwg.mxu0
    %v4778 = vmax.f32 %v4775, 0.0
    %s4779 = scalar_lea.vmem [#allocation2], 1920
    %v4780 = vld [vmem:[%s4779] sm:$0xff]
    %v4781 = vld [vmem:[%s4779 + $0x8] sm:$0xff]
    %v4782 = vld [vmem:[%s4779 + $0x10] sm:$0xff]
    %v4783 = vld [vmem:[%s4779 + $0x18] sm:$0xff]
    %v4784 = vld [vmem:[%s4779 + $0x20] sm:$0xff]
    %v4785 = vld [vmem:[%s4779 + $0x28] sm:$0xff]
    %v4786 = vld [vmem:[%s4779 + $0x30] sm:$0xff]
    %v4787 = vld [vmem:[%s4779 + $0x38] sm:$0xff]
    %v4789 = vsel %vm220, %v4778, 0
    %4791 = vmatprep.subr.mxu0 0.0
    %4792 = vmatpush1.msra.mxu0 %v4780
    %4793 = vmatprep.subr.mxu0 0.0
    %4794 = vmatpush1.msra.mxu0 %v4781
    %4795 = vmatprep.subr.mxu0 0.0
    %4796 = vmatpush1.msra.mxu0 %v4782
    %4797 = vmatprep.subr.mxu0 0.0
    %4798 = vmatpush1.msra.mxu0 %v4783
    %4799 = vmatprep.subr.mxu0 0.0
    %4800 = vmatpush1.msra.mxu0 %v4784
    %4801 = vmatprep.subr.mxu0 0.0
    %4802 = vmatpush1.msra.mxu0 %v4785
    %4803 = vmatprep.subr.mxu0 0.0
    %4804 = vmatpush1.msra.mxu0 %v4786
    %4805 = vmatprep.subr.mxu0 0.0
    %4806 = vmatpush1.msra.mxu0 %v4787
    %4807 = vmatprep.subr.mxu0 0.0
    %4808 = vmatpush1.msra.mxu0 0.0
    %4809 = vmatprep.subr.mxu0 0.0
    %4810 = vmatpush1.msra.mxu0 0.0
    %4811 = vmatprep.subr.mxu0 0.0
    %4812 = vmatpush1.msra.mxu0 0.0
    %4813 = vmatprep.subr.mxu0 0.0
    %4814 = vmatpush1.msra.mxu0 0.0
    %4815 = vmatprep.subr.mxu0 0.0
    %4816 = vmatpush1.msra.mxu0 0.0
    %4817 = vmatprep.subr.mxu0 0.0
    %4818 = vmatpush1.msra.mxu0 0.0
    %4819 = vmatprep.subr.mxu0 0.0
    %4820 = vmatpush1.msra.mxu0 0.0
    %4821 = vmatprep.subr.mxu0 0.0
    %4822 = vmatpush1.msra.mxu0 0.0
    %4823 = vmatprep.subr.mxu0 0.0
    %4824 = vmatpush1.msra.mxu0 0.0
    %4825 = vmatprep.subr.mxu0 0.0
    %4826 = vmatpush1.msra.mxu0 0.0
    %4827 = vmatprep.subr.mxu0 0.0
    %4828 = vmatpush1.msra.mxu0 0.0
    %4829 = vmatprep.subr.mxu0 0.0
    %4830 = vmatpush1.msra.mxu0 0.0
    %4831 = vmatprep.subr.mxu0 0.0
    %4832 = vmatpush1.msra.mxu0 0.0
    %4833 = vmatprep.subr.mxu0 0.0
    %4834 = vmatpush1.msra.mxu0 0.0
    %4835 = vmatprep.subr.mxu0 0.0
    %4836 = vmatpush1.msra.mxu0 0.0
    %4837 = vmatprep.subr.mxu0 0.0
    %4838 = vmatpush1.msra.mxu0 0.0
    %4839 = vmatprep.subr.mxu0 0.0
    %4840 = vmatpush1.msra.mxu0 0.0
    %4841 = vmatprep.subr.mxu0 0.0
    %4842 = vmatpush1.msra.mxu0 0.0
    %4843 = vmatprep.subr.mxu0 0.0
    %4844 = vmatpush1.msra.mxu0 0.0
    %4845 = vmatprep.subr.mxu0 0.0
    %4846 = vmatpush1.msra.mxu0 0.0
    %4847 = vmatprep.subr.mxu0 0.0
    %4848 = vmatpush1.msra.mxu0 0.0
    %4849 = vmatprep.subr.mxu0 0.0
    %4850 = vmatpush1.msra.mxu0 0.0
    %4851 = vmatprep.subr.mxu0 0.0
    %4852 = vmatpush1.msra.mxu0 0.0
    %4853 = vmatprep.subr.mxu0 0.0
    %4854 = vmatpush1.msra.mxu0 0.0
    %4855 = vmatprep.mubr.f32.mxu0 0.0
    %4856 = vmatmul.mubr.f32.gmra.mrb[0].mxu0 %v4789
    %v4857 = vpop.f32.mrb[0].mxu0
    %v4858 = vadd.f32 0.0, %v4857
    %v4859 = vpop.f32.mrb[0].mxu0
    %4860 = vdwg.mxu0
    %v4861 = vadd.f32 %v4706, %v4858
    %v4862 = vld [vmem:[%s0 + $0x3e] sm:$0x3]
    %4863 = vmatprep.subr.mxu0 0.0
    %4864 = vmatpush1.msra.mxu0 %v35
    %4865 = vmatprep.subr.mxu0 0.0
    %4866 = vmatpush1.msra.mxu0 %v36
    %4867 = vmatprep.subr.mxu0 0.0
    %4868 = vmatpush1.msra.mxu0 %v37
    %4869 = vmatprep.subr.mxu0 0.0
    %4870 = vmatpush1.msra.mxu0 %v38
    %4871 = vmatprep.subr.mxu0 0.0
    %4872 = vmatpush1.msra.mxu0 %v39
    %4873 = vmatprep.subr.mxu0 0.0
    %4874 = vmatpush1.msra.mxu0 %v40
    %4875 = vmatprep.subr.mxu0 0.0
    %4876 = vmatpush1.msra.mxu0 %v41
    %4877 = vmatprep.subr.mxu0 0.0
    %4878 = vmatpush1.msra.mxu0 %v42
    %4879 = vmatprep.subr.mxu0 0.0
    %4880 = vmatpush1.msra.mxu0 %v43
    %4881 = vmatprep.subr.mxu0 0.0
    %4882 = vmatpush1.msra.mxu0 %v44
    %4883 = vmatprep.subr.mxu0 0.0
    %4884 = vmatpush1.msra.mxu0 %v45
    %4885 = vmatprep.subr.mxu0 0.0
    %4886 = vmatpush1.msra.mxu0 %v46
    %4887 = vmatprep.subr.mxu0 0.0
    %4888 = vmatpush1.msra.mxu0 %v47
    %4889 = vmatprep.subr.mxu0 0.0
    %4890 = vmatpush1.msra.mxu0 %v48
    %4891 = vmatprep.subr.mxu0 0.0
    %4892 = vmatpush1.msra.mxu0 %v49
    %4893 = vmatprep.subr.mxu0 0.0
    %4894 = vmatpush1.msra.mxu0 %v50
    %4895 = vmatprep.subr.mxu0 0.0
    %4896 = vmatpush1.msra.mxu0 0.0
    %4897 = vmatprep.subr.mxu0 0.0
    %4898 = vmatpush1.msra.mxu0 0.0
    %4899 = vmatprep.subr.mxu0 0.0
    %4900 = vmatpush1.msra.mxu0 0.0
    %4901 = vmatprep.subr.mxu0 0.0
    %4902 = vmatpush1.msra.mxu0 0.0
    %4903 = vmatprep.subr.mxu0 0.0
    %4904 = vmatpush1.msra.mxu0 0.0
    %4905 = vmatprep.subr.mxu0 0.0
    %4906 = vmatpush1.msra.mxu0 0.0
    %4907 = vmatprep.subr.mxu0 0.0
    %4908 = vmatpush1.msra.mxu0 0.0
    %4909 = vmatprep.subr.mxu0 0.0
    %4910 = vmatpush1.msra.mxu0 0.0
    %4911 = vmatprep.subr.mxu0 0.0
    %4912 = vmatpush1.msra.mxu0 0.0
    %4913 = vmatprep.subr.mxu0 0.0
    %4914 = vmatpush1.msra.mxu0 0.0
    %4915 = vmatprep.subr.mxu0 0.0
    %4916 = vmatpush1.msra.mxu0 0.0
    %4917 = vmatprep.subr.mxu0 0.0
    %4918 = vmatpush1.msra.mxu0 0.0
    %4919 = vmatprep.subr.mxu0 0.0
    %4920 = vmatpush1.msra.mxu0 0.0
    %4921 = vmatprep.subr.mxu0 0.0
    %4922 = vmatpush1.msra.mxu0 0.0
    %4923 = vmatprep.subr.mxu0 0.0
    %4924 = vmatpush1.msra.mxu0 0.0
    %4925 = vmatprep.subr.mxu0 0.0
    %4926 = vmatpush1.msra.mxu0 0.0
    %4927 = vmatprep.mubr.f32.mxu0 0.0
    %4928 = vmatmul.mubr.f32.gmra.mrb[0].mxu0 %v4862
    %v4929 = vpop.f32.mrb[0].mxu0
    %v4930 = vadd.f32 %v58, %v4929
    %v4931 = vpop.f32.mrb[0].mxu0
    %4932 = vdwg.mxu0
    %v4933 = vmax.f32 %v4930, 0.0
    %s4934 = scalar_lea.vmem [#allocation2], 1984
    %v4935 = vld [vmem:[%s4934] sm:$0xff]
    %v4936 = vld [vmem:[%s4934 + $0x8] sm:$0xff]
    %v4937 = vld [vmem:[%s4934 + $0x10] sm:$0xff]
    %v4938 = vld [vmem:[%s4934 + $0x18] sm:$0xff]
    %v4939 = vld [vmem:[%s4934 + $0x20] sm:$0xff]
    %v4940 = vld [vmem:[%s4934 + $0x28] sm:$0xff]
    %v4941 = vld [vmem:[%s4934 + $0x30] sm:$0xff]
    %v4942 = vld [vmem:[%s4934 + $0x38] sm:$0xff]
    %v4944 = vsel %vm220, %v4933, 0
    %4946 = vmatprep.subr.mxu0 0.0
    %4947 = vmatpush1.msra.mxu0 %v4935
    %4948 = vmatprep.subr.mxu0 0.0
    %4949 = vmatpush1.msra.mxu0 %v4936
    %4950 = vmatprep.subr.mxu0 0.0
    %4951 = vmatpush1.msra.mxu0 %v4937
    %4952 = vmatprep.subr.mxu0 0.0
    %4953 = vmatpush1.msra.mxu0 %v4938
    %4954 = vmatprep.subr.mxu0 0.0
    %4955 = vmatpush1.msra.mxu0 %v4939
    %4956 = vmatprep.subr.mxu0 0.0
    %4957 = vmatpush1.msra.mxu0 %v4940
    %4958 = vmatprep.subr.mxu0 0.0
    %4959 = vmatpush1.msra.mxu0 %v4941
    %4960 = vmatprep.subr.mxu0 0.0
    %4961 = vmatpush1.msra.mxu0 %v4942
    %4962 = vmatprep.subr.mxu0 0.0
    %4963 = vmatpush1.msra.mxu0 0.0
    %4964 = vmatprep.subr.mxu0 0.0
    %4965 = vmatpush1.msra.mxu0 0.0
    %4966 = vmatprep.subr.mxu0 0.0
    %4967 = vmatpush1.msra.mxu0 0.0
    %4968 = vmatprep.subr.mxu0 0.0
    %4969 = vmatpush1.msra.mxu0 0.0
    %4970 = vmatprep.subr.mxu0 0.0
    %4971 = vmatpush1.msra.mxu0 0.0
    %4972 = vmatprep.subr.mxu0 0.0
    %4973 = vmatpush1.msra.mxu0 0.0
    %4974 = vmatprep.subr.mxu0 0.0
    %4975 = vmatpush1.msra.mxu0 0.0
    %4976 = vmatprep.subr.mxu0 0.0
    %4977 = vmatpush1.msra.mxu0 0.0
    %4978 = vmatprep.subr.mxu0 0.0
    %4979 = vmatpush1.msra.mxu0 0.0
    %4980 = vmatprep.subr.mxu0 0.0
    %4981 = vmatpush1.msra.mxu0 0.0
    %4982 = vmatprep.subr.mxu0 0.0
    %4983 = vmatpush1.msra.mxu0 0.0
    %4984 = vmatprep.subr.mxu0 0.0
    %4985 = vmatpush1.msra.mxu0 0.0
    %4986 = vmatprep.subr.mxu0 0.0
    %4987 = vmatpush1.msra.mxu0 0.0
    %4988 = vmatprep.subr.mxu0 0.0
    %4989 = vmatpush1.msra.mxu0 0.0
    %4990 = vmatprep.subr.mxu0 0.0
    %4991 = vmatpush1.msra.mxu0 0.0
    %4992 = vmatprep.subr.mxu0 0.0
    %4993 = vmatpush1.msra.mxu0 0.0
    %4994 = vmatprep.subr.mxu0 0.0
    %4995 = vmatpush1.msra.mxu0 0.0
    %4996 = vmatprep.subr.mxu0 0.0
    %4997 = vmatpush1.msra.mxu0 0.0
    %4998 = vmatprep.subr.mxu0 0.0
    %4999 = vmatpush1.msra.mxu0 0.0
    %5000 = vmatprep.subr.mxu0 0.0
    %5001 = vmatpush1.msra.mxu0 0.0
    %5002 = vmatprep.subr.mxu0 0.0
    %5003 = vmatpush1.msra.mxu0 0.0
    %5004 = vmatprep.subr.mxu0 0.0
    %5005 = vmatpush1.msra.mxu0 0.0
    %5006 = vmatprep.subr.mxu0 0.0
    %5007 = vmatpush1.msra.mxu0 0.0
    %5008 = vmatprep.subr.mxu0 0.0
    %5009 = vmatpush1.msra.mxu0 0.0
    %5010 = vmatprep.mubr.f32.mxu0 0.0
    %5011 = vmatmul.mubr.f32.gmra.mrb[0].mxu0 %v4944
    %v5012 = vpop.f32.mrb[0].mxu0
    %v5013 = vadd.f32 0.0, %v5012
    %v5014 = vpop.f32.mrb[0].mxu0
    %5015 = vdwg.mxu0
    %v5016 = vadd.f32 %v4861, %v5013
    %v5018 = vlaneseq
    %v5019 = vshrl.u32 %v5018, 7
    %v5020 = vsub.s32 0, %v5019
    %v5021 = vrot.slane %v52, %v5020
    %v5023 = vadd.f32 %v5016, %v5021
    %vm5024 = vcmp.gt.f32.partialorder %v5023, 20.0
    %v5025 = vmin.f32 %v5023, 20.0
    %v5026 = vmul.f32 %v5025, 1.442695
    %v5027 = vpow.pop %v5026
    %v5028 = vadd.f32 %v5027, 1.0
    %v5029 = vlog2.pop %v5028
    %v5030 = vmul.f32 %v5029, 0.6931472
    %v5031 = vmul.f32 -0.5, %v5027
    %v5032 = vadd.f32 %v5031, 1.0
    %v5033 = vmul.f32 %v5032, %v5027
    %v5034 = vand.u32 2147483647, %v5027
    %vm5035 = vcmp.lt.f32.partialorder %v5034, 0.0004427343
    %v5036 = vsel %vm5035, %v5033, %v5030
    %v5037 = vsel %vm5024, %v5023, %v5036
    %5038 = vst [vmem:[#allocation5] sm:$0x3] %v5037
    // Predicated region
    $region26: #{apply.1} parent=1 // pred_check
      _
    $region27: #{apply.1} parent=1 // pred_check_branch
      %5040 = sbr.rel (0) target = $region29
    $region28: #{apply.1} parent=1 // pred_region
      %s5042 = ssub.s32 32, 32
      %5043 = vsyncadd [#allocation4], %s5042
      %s5045 = sshll.u32 [#allocation5], 4
      %s5046 = int_to_ptr.vmem [resolvable:$true] %s5045
      %5048 = dma.vmem_to_hbm [thread:$0]  %s5046, 32, %s5, [#allocation4]
    $region29: #{apply.1} parent=1 // pred_fallthru
      _
    // Predicated region
    $region30: #{apply.1} parent=1 // pred_check
      _
    $region31: #{apply.1} parent=1 // pred_check_branch
      %5050 = sbr.rel (0) target = $region33
    $region32: #{apply.1} parent=1 // pred_region
      %5051 = dma.done [#allocation4], 32
    $region33: #{apply.1} parent=1 // pred_fallthru
      _
    %5052 = vsyncpa [#allocation3], 1
    %5053 = vsyncpa [#allocation4], 1

</llo_original>
